<compile_context>
chip_gen: v6e
topology: v6e:2x2x1
jax: 0.10.0
libtpu: 0.0.40
codegen_flags: <defaults>
</compile_context>

<pallas_src>
import functools
import math

import jax
import jax.numpy as jnp
from jax.experimental import pallas as pl
from jax.experimental.pallas import tpu as pltpu


# ----------------------------------------------------------------------------
# Pallas kernel: one chunk of CHUNK_T GRU steps for one direction.
# grid = (2 directions [parallel], T_pad // CHUNK_T [arbitrary / sequential]);
# the hidden state lives in a VMEM scratch that persists across chunks and is
# reset at the first chunk of each direction.
#
# Kernel views:
#   gx_ref  : (3, CHUNK_T, Bp, Hp) bf16   precomputed input gates (+ folded bias)
#   whh_ref : (3, Hp, Hp)          bf16   per-gate recurrent weights (transposed)
#   bhn_ref : (1, Hp)              f32    hidden bias of the n gate
#   out_ref : (CHUNK_T, Bp, Hp)    f32    hidden states for this chunk
#   h_ref   : (Bp, Hp)             f32    carried hidden state (scratch)
# ----------------------------------------------------------------------------
def _gru_chunk_kernel(gx_ref, whh_ref, bhn_ref, out_ref, h_ref, *, chunk_t):
    c = pl.program_id(1)                    # chunk index within this direction

    @pl.when(c == 0)
    def _():
        h_ref[...] = jnp.zeros_like(h_ref)

    h = h_ref[...]                          # (Bp, Hp) f32
    b_hn = bhn_ref[...]                     # (1, Hp)  f32 (hoisted out of loop)

    # Static full unroll over the chunk (equivalent to fori_loop(unroll=True));
    # lets the scheduler overlap step t+1's MXU pushes with step t's gate math.
    for tt in range(chunk_t):
        h_lo = h.astype(whh_ref.dtype)      # bf16 operands, f32 accumulation
        gh_r = jnp.dot(h_lo, whh_ref[0], preferred_element_type=jnp.float32)
        gh_z = jnp.dot(h_lo, whh_ref[1], preferred_element_type=jnp.float32)
        gh_n = jnp.dot(h_lo, whh_ref[2], preferred_element_type=jnp.float32) + b_hn

        # PyTorch gate order (r, z, n); gates selected on the leading axis.
        r = jax.nn.sigmoid(gx_ref[0, tt].astype(jnp.float32) + gh_r)
        z = jax.nn.sigmoid(gx_ref[1, tt].astype(jnp.float32) + gh_z)
        n = jnp.tanh(gx_ref[2, tt].astype(jnp.float32) + r * gh_n)
        h = (1.0 - z) * n + z * h

        out_ref[tt] = h.astype(out_ref.dtype)

    h_ref[...] = h


# ----------------------------------------------------------------------------
# Per-direction host-side prep: one big bf16 matmul for the input projection,
# bias folding, gate-major layout, padding to (Bp, Hp) and T_pad.
# ----------------------------------------------------------------------------
def _prep_direction(x_dir, w_ih, w_hh, b_ih, b_hh, bp, hp, t_pad):
    b, t, f = x_dir.shape
    h = w_hh.shape[1]

    # Input projection as ONE large matmul (bf16 MXU path, f32 accumulation);
    # XLA fuses the (B,T,F) -> gate/time-major layout into the matmul output.
    w3 = w_ih.reshape(3, h, f).astype(jnp.bfloat16)            # [W_ir; W_iz; W_in]
    gx = jnp.einsum("btf,ghf->gtbh", x_dir.astype(jnp.bfloat16), w3,
                    preferred_element_type=jnp.float32)        # (3, T, B, H) f32

    # Fold b_ih fully and the r/z parts of b_hh into gx; b_hn must stay inside
    # the r * (...) term, so it is passed separately to the kernel.
    gate_mask = jnp.array([1.0, 1.0, 0.0], jnp.float32)[:, None]
    bias = b_ih.reshape(3, h) + b_hh.reshape(3, h) * gate_mask  # (3, H)
    gx = gx + bias[None if False else slice(None), None, None, :] if False else gx + bias[:, None, None, :]

    # Pad: time -> multiple of chunk, batch -> 8 sublanes, hidden -> 128 lanes.
    # Padded H lanes of gx are zero => padded lanes of h stay exactly zero.
    gx = jnp.pad(gx, ((0, 0), (0, t_pad - t), (0, bp - b), (0, hp - h)))
    gx = gx.astype(jnp.bfloat16)

    # Per-gate recurrent weights, transposed so gh_g = h @ W_hg^T, zero-padded.
    whh_t = jnp.transpose(w_hh.reshape(3, h, h), (0, 2, 1))
    whh_t = jnp.pad(whh_t, ((0, 0), (0, hp - h), (0, hp - h))).astype(jnp.bfloat16)

    b_hn = jnp.pad(b_hh[2 * h:], (0, hp - h)).reshape(1, hp).astype(jnp.float32)
    return gx, whh_t, b_hn


def _gru_bidir_pallas(gx_all, whh_all, bhn_all, chunk_t, t_pad, bp, hp):
    num_chunks = t_pad // chunk_t
    kernel = functools.partial(_gru_chunk_kernel, chunk_t=chunk_t)
    return pl.pallas_call(
        kernel,
        out_shape=jax.ShapeDtypeStruct((2, t_pad, bp, hp), jnp.float32),
        grid=(2, num_chunks),
        in_specs=[
            # gx: (6, T_pad, Bp, Hp) bf16 -> per-step block (3, CHUNK_T, Bp, Hp)
            pl.BlockSpec((3, chunk_t, bp, hp), lambda d, c: (d, c, 0, 0)),
            # whh: (6, Hp, Hp) bf16, resident per direction
            # (NOTE for v7x @ real DeepSpeech2 sizes: consider single-buffering
            #  these via pipeline_mode, or manual DMA; tiny here.)
            pl.BlockSpec((3, hp, hp), lambda d, c: (d, 0, 0)),
            # b_hn: (2, 1, Hp) f32
            pl.BlockSpec((None, 1, hp), lambda d, c: (d, 0, 0)),
        ],
        out_specs=pl.BlockSpec((None, chunk_t, bp, hp), lambda d, c: (d, c, 0, 0)),
        scratch_shapes=[pltpu.VMEM((bp, hp), jnp.float32)],
        compiler_params=pltpu.CompilerParams(
            # direction axis is independent -> megacore-shardable on v7x;
            # time-chunk axis carries the recurrence -> arbitrary.
            dimension_semantics=("parallel", "arbitrary"),
            vmem_limit_bytes=64 * 1024 * 1024,
        ),
    )(gx_all, whh_all, bhn_all)


# ----------------------------------------------------------------------------
# GRUBlock forward (bidirectional, packed-sequence semantics)
# ----------------------------------------------------------------------------
def init_gru_params(key, input_size, hidden_size):
    """Deterministic init matching nn.GRU: U(-1/sqrt(H), 1/sqrt(H))."""
    k = 1.0 / math.sqrt(hidden_size)
    names = ["w_ih_f", "w_hh_f", "b_ih_f", "b_hh_f",
             "w_ih_b", "w_hh_b", "b_ih_b", "b_hh_b"]
    shapes = [(3 * hidden_size, input_size), (3 * hidden_size, hidden_size),
              (3 * hidden_size,), (3 * hidden_size,)] * 2
    keys = jax.random.split(key, len(names))
    return {n: jax.random.uniform(kk, s, jnp.float32, -k, k)
            for n, kk, s in zip(names, keys, shapes)}


def gru_block_forward(x, x_length, params, chunk_t=8):
    """x: (B, T, F) float32, x_length: python list of ints (static lengths)."""
    x = jnp.asarray(x, jnp.float32)
    B, T, F = x.shape
    H = params["w_hh_f"].shape[1]
    lengths = jnp.asarray(x_length, jnp.int32)

    t_idx = jnp.arange(T, dtype=jnp.int32)
    valid = t_idx[None, :] < lengths[:, None]                        # (B, T)

    # Per-sequence reversal for the backward direction (pack_padded semantics).
    rev_idx = jnp.where(valid, lengths[:, None] - 1 - t_idx[None, :], t_idx[None, :])
    x_rev = jnp.take_along_axis(x, rev_idx[:, :, None], axis=1)

    t_pad = pl.cdiv(T, chunk_t) * chunk_t
    bp = pl.cdiv(B, 8) * 8          # fill vreg sublanes
    hp = pl.cdiv(H, 128) * 128      # lane-dense (unmasked) stores

    gx_f, whh_f, bhn_f = _prep_direction(
        x, params["w_ih_f"], params["w_hh_f"], params["b_ih_f"], params["b_hh_f"],
        bp, hp, t_pad)
    gx_b, whh_b, bhn_b = _prep_direction(
        x_rev, params["w_ih_b"], params["w_hh_b"], params["b_ih_b"], params["b_hh_b"],
        bp, hp, t_pad)

    gx_all = jnp.concatenate([gx_f, gx_b], axis=0)       # (6, T_pad, Bp, Hp) bf16
    whh_all = jnp.concatenate([whh_f, whh_b], axis=0)    # (6, Hp, Hp)        bf16
    bhn_all = jnp.stack([bhn_f, bhn_b])                  # (2, 1, Hp)         f32

    out_all = _gru_bidir_pallas(gx_all, whh_all, bhn_all, chunk_t, t_pad, bp, hp)

    out_f = jnp.transpose(out_all[0, :T, :B, :H], (1, 0, 2))          # (B, T, H)
    out_b_rev = jnp.transpose(out_all[1, :T, :B, :H], (1, 0, 2))
    out_b = jnp.take_along_axis(out_b_rev, rev_idx[:, :, None], axis=1)

    # pad_packed_sequence zeroes padded positions; module sums the directions.
    y = (out_f + out_b) * valid[:, :, None].astype(jnp.float32)

    # pad_packed_sequence pads only up to max(x_length).  Host-side max is fine
    # for static lengths; would need a static bound if lengths were traced.
    t_out = int(max(int(l) for l in list(x_length)))
    return y[:, :t_out], x_length


# ----------------------------------------------------------------------------
# Pure-JAX reference (lax.scan) mirroring the kernel's mixed-precision scheme
# (bf16 matmul operands, f32 accumulation, f32 gate math, bf16 gx stream) but
# using the raw PyTorch parameter layout — validates gate order, bias folding,
# reversal and masking independently.
# ----------------------------------------------------------------------------
def _gru_direction_ref(x_dir, w_ih, w_hh, b_ih, b_hh):
    B, T, F = x_dir.shape
    H = w_hh.shape[1]
    gx = jnp.einsum("btf,gf->tbg", x_dir.astype(jnp.bfloat16),
                    w_ih.astype(jnp.bfloat16),
                    preferred_element_type=jnp.float32)              # (T, B, 3H)
    fold = b_ih + jnp.concatenate([b_hh[:2 * H], jnp.zeros((H,), jnp.float32)])
    gx = (gx + fold).astype(jnp.bfloat16).astype(jnp.float32)
    whh_bf = w_hh.astype(jnp.bfloat16)
    b_hn = b_hh[2 * H:]

    def step(h, gx_t):
        gh = jnp.dot(h.astype(jnp.bfloat16), whh_bf.T,
                     preferred_element_type=jnp.float32)             # (B, 3H)
        r = jax.nn.sigmoid(gx_t[:, :H] + gh[:, :H])
        z = jax.nn.sigmoid(gx_t[:, H:2 * H] + gh[:, H:2 * H])
        n = jnp.tanh(gx_t[:, 2 * H:] + r * (gh[:, 2 * H:] + b_hn))
        h_new = (1.0 - z) * n + z * h
        return h_new, h_new

    _, ys = jax.lax.scan(step, jnp.zeros((B, H), jnp.float32), gx)
    return jnp.transpose(ys, (1, 0, 2))                              # (B, T, H)


def gru_block_forward_ref(x, x_length, params):
    B, T, F = x.shape
    lengths = jnp.asarray(x_length, jnp.int32)
    t_idx = jnp.arange(T, dtype=jnp.int32)
    valid = t_idx[None, :] < lengths[:, None]
    rev_idx = jnp.where(valid, lengths[:, None] - 1 - t_idx[None, :], t_idx[None, :])
    x_rev = jnp.take_along_axis(x, rev_idx[:, :, None], axis=1)

    out_f = _gru_direction_ref(x, params["w_ih_f"], params["w_hh_f"],
                               params["b_ih_f"], params["b_hh_f"])
    out_b_rev = _gru_direction_ref(x_rev, params["w_ih_b"], params["w_hh_b"],
                                   params["b_ih_b"], params["b_hh_b"])
    out_b = jnp.take_along_axis(out_b_rev, rev_idx[:, :, None], axis=1)

    y = (out_f + out_b) * valid[:, :, None].astype(jnp.float32)
    t_out = int(max(int(l) for l in list(x_length)))
    return y[:, :t_out]


if __name__ == "__main__":
    B, T, F, H = 2, 16, 16, 32

    key = jax.random.PRNGKey(0)
    k_x, k_p = jax.random.split(key)
    x = jax.random.normal(k_x, (B, T, F), jnp.float32)
    x_length = [16, 11]                   # variable sequence lengths (max == T)
    params = init_gru_params(k_p, F, H)

    y, y_len = gru_block_forward(x, x_length, params, chunk_t=8)
    y = jax.block_until_ready(y)

    y_ref = gru_block_forward_ref(x, x_length, params)
    assert y.shape == (B, max(x_length), H), y.shape
    max_err = float(jnp.max(jnp.abs(y - y_ref)))
    assert max_err < 2e-3, max_err
    assert list(y_len) == x_length

    print("KERNEL_OK")
</pallas_src>

<mosaic_0001>
module attributes {stable_mosaic.version = 11 : i64} {
  func.func @_gru_chunk_kernel(%arg0: i32, %arg1: i32, %arg2: memref<3x8x8x128xbf16, #tpu.memory_space<vmem>>, %arg3: memref<3x128x128xbf16, #tpu.memory_space<vmem>>, %arg4: memref<1x1x128xf32, #tpu.memory_space<vmem>>, %arg5: memref<1x8x8x128xf32, #tpu.memory_space<vmem>>, %arg6: memref<8x128xf32, #tpu.memory_space<vmem>>) attributes {dimension_semantics = [#tpu.dimension_semantics<parallel>, #tpu.dimension_semantics<arbitrary>], iteration_bounds = array<i64: 2, 2>, scalar_prefetch = 0 : i64, scratch_operands = 1 : i64, tpu.core_type = #tpu.core_type<tc>, window_params = [{transform_indices = @transform_0, window_bounds = array<i64: 3, 8, 8, 128>}, {transform_indices = @transform_1, window_bounds = array<i64: 3, 128, 128>}, {transform_indices = @transform_2, window_bounds = array<i64: 1, 1, 128>}, {transform_indices = @transform_3, window_bounds = array<i64: 1, 8, 8, 128>}]} {
    %c0_i32 = arith.constant 0 : i32
    %0 = arith.cmpi eq, %arg1, %c0_i32 : i32
    %1 = arith.extui %0 : i1 to i32
    %c0_i32_0 = arith.constant 0 : i32
    %2 = arith.cmpi ne, %1, %c0_i32_0 : i32
    scf.if %2 {
      %cst_247 = arith.constant 0.000000e+00 : f32
      %359 = vector.broadcast %cst_247 : f32 to vector<8x128xf32>
      %c0_248 = arith.constant 0 : index
      %c0_249 = arith.constant 0 : index
      %360 = vector.load %arg6[%c0_248, %c0_249] : memref<8x128xf32, #tpu.memory_space<vmem>>, vector<8x128xf32>
      tpu.vector_store %arg6[%c0_248, %c0_249], %359 {strides = array<i32>} : memref<8x128xf32, #tpu.memory_space<vmem>>, vector<8x128xf32>,
    } else {
    }
    %c0 = arith.constant 0 : index
    %c0_1 = arith.constant 0 : index
    %3 = vector.load %arg6[%c0, %c0_1] : memref<8x128xf32, #tpu.memory_space<vmem>>, vector<8x128xf32>
    %c0_2 = arith.constant 0 : index
    %c0_3 = arith.constant 0 : index
    %c0_4 = arith.constant 0 : index
    %4 = vector.load %arg4[%c0_2, %c0_3, %c0_4] : memref<1x1x128xf32, #tpu.memory_space<vmem>>, vector<1x1x128xf32>
    %5 = vector.shape_cast %4 : vector<1x1x128xf32> to vector<1x128xf32>
    %6 = arith.truncf %3 : vector<8x128xf32> to vector<8x128xbf16>
    %c0_5 = arith.constant 0 : index
    %c0_6 = arith.constant 0 : index
    %c0_7 = arith.constant 0 : index
    %7 = vector.load %arg3[%c0_5, %c0_6, %c0_7] : memref<3x128x128xbf16, #tpu.memory_space<vmem>>, vector<1x128x128xbf16>
    %8 = vector.shape_cast %7 : vector<1x128x128xbf16> to vector<128x128xbf16>
    %cst = arith.constant dense<0.000000e+00> : vector<8x128xf32>
    %9 = tpu.matmul %6, %8, %cst {dimension_numbers = #tpu.dot_dimension_numbers<[1], [0], [0], [1], [0, 0, 1, 1], [], []>} : vector<8x128xbf16>, vector<128x128xbf16>, vector<8x128xf32> -> vector<8x128xf32>
    %c1 = arith.constant 1 : index
    %c0_8 = arith.constant 0 : index
    %c0_9 = arith.constant 0 : index
    %10 = vector.load %arg3[%c1, %c0_8, %c0_9] : memref<3x128x128xbf16, #tpu.memory_space<vmem>>, vector<1x128x128xbf16>
    %11 = vector.shape_cast %10 : vector<1x128x128xbf16> to vector<128x128xbf16>
    %cst_10 = arith.constant dense<0.000000e+00> : vector<8x128xf32>
    %12 = tpu.matmul %6, %11, %cst_10 {dimension_numbers = #tpu.dot_dimension_numbers<[1], [0], [0], [1], [0, 0, 1, 1], [], []>} : vector<8x128xbf16>, vector<128x128xbf16>, vector<8x128xf32> -> vector<8x128xf32>
    %c2 = arith.constant 2 : index
    %c0_11 = arith.constant 0 : index
    %c0_12 = arith.constant 0 : index
    %13 = vector.load %arg3[%c2, %c0_11, %c0_12] : memref<3x128x128xbf16, #tpu.memory_space<vmem>>, vector<1x128x128xbf16>
    %14 = vector.shape_cast %13 : vector<1x128x128xbf16> to vector<128x128xbf16>
    %cst_13 = arith.constant dense<0.000000e+00> : vector<8x128xf32>
    %15 = tpu.matmul %6, %14, %cst_13 {dimension_numbers = #tpu.dot_dimension_numbers<[1], [0], [0], [1], [0, 0, 1, 1], [], []>} : vector<8x128xbf16>, vector<128x128xbf16>, vector<8x128xf32> -> vector<8x128xf32>
    %16 = vector.broadcast %5 : vector<1x128xf32> to vector<8x128xf32>
    %17 = arith.addf %15, %16 : vector<8x128xf32>
    %c0_14 = arith.constant 0 : index
    %c0_15 = arith.constant 0 : index
    %c0_16 = arith.constant 0 : index
    %c0_17 = arith.constant 0 : index
    %18 = vector.load %arg2[%c0_14, %c0_15, %c0_16, %c0_17] : memref<3x8x8x128xbf16, #tpu.memory_space<vmem>>, vector<1x1x8x128xbf16>
    %19 = vector.shape_cast %18 : vector<1x1x8x128xbf16> to vector<8x128xbf16>
    %20 = arith.extf %19 : vector<8x128xbf16> to vector<8x128xf32>
    %21 = arith.addf %20, %9 : vector<8x128xf32>
    %22 = arith.negf %21 : vector<8x128xf32>
    %23 = math.exp %22 : vector<8x128xf32>
    %cst_18 = arith.constant 1.000000e+00 : f32
    %24 = vector.broadcast %cst_18 : f32 to vector<8x128xf32>
    %25 = arith.addf %24, %23 : vector<8x128xf32>
    %26 = arith.divf %24, %25 : vector<8x128xf32>
    %c1_19 = arith.constant 1 : index
    %c0_20 = arith.constant 0 : index
    %c0_21 = arith.constant 0 : index
    %c0_22 = arith.constant 0 : index
    %27 = vector.load %arg2[%c1_19, %c0_20, %c0_21, %c0_22] : memref<3x8x8x128xbf16, #tpu.memory_space<vmem>>, vector<1x1x8x128xbf16>
    %28 = vector.shape_cast %27 : vector<1x1x8x128xbf16> to vector<8x128xbf16>
    %29 = arith.extf %28 : vector<8x128xbf16> to vector<8x128xf32>
    %30 = arith.addf %29, %12 : vector<8x128xf32>
    %31 = arith.negf %30 : vector<8x128xf32>
    %32 = math.exp %31 : vector<8x128xf32>
    %cst_23 = arith.constant 1.000000e+00 : f32
    %33 = vector.broadcast %cst_23 : f32 to vector<8x128xf32>
    %34 = arith.addf %33, %32 : vector<8x128xf32>
    %35 = arith.divf %33, %34 : vector<8x128xf32>
    %c2_24 = arith.constant 2 : index
    %c0_25 = arith.constant 0 : index
    %c0_26 = arith.constant 0 : index
    %c0_27 = arith.constant 0 : index
    %36 = vector.load %arg2[%c2_24, %c0_25, %c0_26, %c0_27] : memref<3x8x8x128xbf16, #tpu.memory_space<vmem>>, vector<1x1x8x128xbf16>
    %37 = vector.shape_cast %36 : vector<1x1x8x128xbf16> to vector<8x128xbf16>
    %38 = arith.extf %37 : vector<8x128xbf16> to vector<8x128xf32>
    %39 = arith.mulf %26, %17 : vector<8x128xf32>
    %40 = arith.addf %38, %39 : vector<8x128xf32>
    %41 = math.tanh %40 : vector<8x128xf32>
    %cst_28 = arith.constant 1.000000e+00 : f32
    %42 = vector.broadcast %cst_28 : f32 to vector<8x128xf32>
    %43 = arith.subf %42, %35 : vector<8x128xf32>
    %44 = arith.mulf %43, %41 : vector<8x128xf32>
    %45 = arith.mulf %35, %3 : vector<8x128xf32>
    %46 = arith.addf %44, %45 : vector<8x128xf32>
    %c0_29 = arith.constant 0 : index
    %c0_30 = arith.constant 0 : index
    %c0_31 = arith.constant 0 : index
    %c0_32 = arith.constant 0 : index
    %47 = vector.load %arg5[%c0_29, %c0_30, %c0_31, %c0_32] : memref<1x8x8x128xf32, #tpu.memory_space<vmem>>, vector<1x1x8x128xf32>
    %48 = vector.shape_cast %47 : vector<1x1x8x128xf32> to vector<8x128xf32>
    %49 = vector.shape_cast %46 : vector<8x128xf32> to vector<1x1x8x128xf32>
    tpu.vector_store %arg5[%c0_29, %c0_30, %c0_31, %c0_32], %49 {strides = array<i32>} : memref<1x8x8x128xf32, #tpu.memory_space<vmem>>, vector<1x1x8x128xf32>,
    %50 = arith.truncf %46 : vector<8x128xf32> to vector<8x128xbf16>
    %c0_33 = arith.constant 0 : index
    %c0_34 = arith.constant 0 : index
    %c0_35 = arith.constant 0 : index
    %51 = vector.load %arg3[%c0_33, %c0_34, %c0_35] : memref<3x128x128xbf16, #tpu.memory_space<vmem>>, vector<1x128x128xbf16>
    %52 = vector.shape_cast %51 : vector<1x128x128xbf16> to vector<128x128xbf16>
    %cst_36 = arith.constant dense<0.000000e+00> : vector<8x128xf32>
    %53 = tpu.matmul %50, %52, %cst_36 {dimension_numbers = #tpu.dot_dimension_numbers<[1], [0], [0], [1], [0, 0, 1, 1], [], []>} : vector<8x128xbf16>, vector<128x128xbf16>, vector<8x128xf32> -> vector<8x128xf32>
    %c1_37 = arith.constant 1 : index
    %c0_38 = arith.constant 0 : index
    %c0_39 = arith.constant 0 : index
    %54 = vector.load %arg3[%c1_37, %c0_38, %c0_39] : memref<3x128x128xbf16, #tpu.memory_space<vmem>>, vector<1x128x128xbf16>
    %55 = vector.shape_cast %54 : vector<1x128x128xbf16> to vector<128x128xbf16>
    %cst_40 = arith.constant dense<0.000000e+00> : vector<8x128xf32>
    %56 = tpu.matmul %50, %55, %cst_40 {dimension_numbers = #tpu.dot_dimension_numbers<[1], [0], [0], [1], [0, 0, 1, 1], [], []>} : vector<8x128xbf16>, vector<128x128xbf16>, vector<8x128xf32> -> vector<8x128xf32>
    %c2_41 = arith.constant 2 : index
    %c0_42 = arith.constant 0 : index
    %c0_43 = arith.constant 0 : index
    %57 = vector.load %arg3[%c2_41, %c0_42, %c0_43] : memref<3x128x128xbf16, #tpu.memory_space<vmem>>, vector<1x128x128xbf16>
    %58 = vector.shape_cast %57 : vector<1x128x128xbf16> to vector<128x128xbf16>
    %cst_44 = arith.constant dense<0.000000e+00> : vector<8x128xf32>
    %59 = tpu.matmul %50, %58, %cst_44 {dimension_numbers = #tpu.dot_dimension_numbers<[1], [0], [0], [1], [0, 0, 1, 1], [], []>} : vector<8x128xbf16>, vector<128x128xbf16>, vector<8x128xf32> -> vector<8x128xf32>
    %60 = vector.broadcast %5 : vector<1x128xf32> to vector<8x128xf32>
    %61 = arith.addf %59, %60 : vector<8x128xf32>
    %c0_45 = arith.constant 0 : index
    %c1_46 = arith.constant 1 : index
    %c0_47 = arith.constant 0 : index
    %c0_48 = arith.constant 0 : index
    %62 = vector.load %arg2[%c0_45, %c1_46, %c0_47, %c0_48] : memref<3x8x8x128xbf16, #tpu.memory_space<vmem>>, vector<1x1x8x128xbf16>
    %63 = vector.shape_cast %62 : vector<1x1x8x128xbf16> to vector<8x128xbf16>
    %64 = arith.extf %63 : vector<8x128xbf16> to vector<8x128xf32>
    %65 = arith.addf %64, %53 : vector<8x128xf32>
    %66 = arith.negf %65 : vector<8x128xf32>
    %67 = math.exp %66 : vector<8x128xf32>
    %cst_49 = arith.constant 1.000000e+00 : f32
    %68 = vector.broadcast %cst_49 : f32 to vector<8x128xf32>
    %69 = arith.addf %68, %67 : vector<8x128xf32>
    %70 = arith.divf %68, %69 : vector<8x128xf32>
    %c1_50 = arith.constant 1 : index
    %c1_51 = arith.constant 1 : index
    %c0_52 = arith.constant 0 : index
    %c0_53 = arith.constant 0 : index
    %71 = vector.load %arg2[%c1_50, %c1_51, %c0_52, %c0_53] : memref<3x8x8x128xbf16, #tpu.memory_space<vmem>>, vector<1x1x8x128xbf16>
    %72 = vector.shape_cast %71 : vector<1x1x8x128xbf16> to vector<8x128xbf16>
    %73 = arith.extf %72 : vector<8x128xbf16> to vector<8x128xf32>
    %74 = arith.addf %73, %56 : vector<8x128xf32>
    %75 = arith.negf %74 : vector<8x128xf32>
    %76 = math.exp %75 : vector<8x128xf32>
    %cst_54 = arith.constant 1.000000e+00 : f32
    %77 = vector.broadcast %cst_54 : f32 to vector<8x128xf32>
    %78 = arith.addf %77, %76 : vector<8x128xf32>
    %79 = arith.divf %77, %78 : vector<8x128xf32>
    %c2_55 = arith.constant 2 : index
    %c1_56 = arith.constant 1 : index
    %c0_57 = arith.constant 0 : index
    %c0_58 = arith.constant 0 : index
    %80 = vector.load %arg2[%c2_55, %c1_56, %c0_57, %c0_58] : memref<3x8x8x128xbf16, #tpu.memory_space<vmem>>, vector<1x1x8x128xbf16>
    %81 = vector.shape_cast %80 : vector<1x1x8x128xbf16> to vector<8x128xbf16>
    %82 = arith.extf %81 : vector<8x128xbf16> to vector<8x128xf32>
    %83 = arith.mulf %70, %61 : vector<8x128xf32>
    %84 = arith.addf %82, %83 : vector<8x128xf32>
    %85 = math.tanh %84 : vector<8x128xf32>
    %cst_59 = arith.constant 1.000000e+00 : f32
    %86 = vector.broadcast %cst_59 : f32 to vector<8x128xf32>
    %87 = arith.subf %86, %79 : vector<8x128xf32>
    %88 = arith.mulf %87, %85 : vector<8x128xf32>
    %89 = arith.mulf %79, %46 : vector<8x128xf32>
    %90 = arith.addf %88, %89 : vector<8x128xf32>
    %c0_60 = arith.constant 0 : index
    %c1_61 = arith.constant 1 : index
    %c0_62 = arith.constant 0 : index
    %c0_63 = arith.constant 0 : index
    %91 = vector.load %arg5[%c0_60, %c1_61, %c0_62, %c0_63] : memref<1x8x8x128xf32, #tpu.memory_space<vmem>>, vector<1x1x8x128xf32>
    %92 = vector.shape_cast %91 : vector<1x1x8x128xf32> to vector<8x128xf32>
    %93 = vector.shape_cast %90 : vector<8x128xf32> to vector<1x1x8x128xf32>
    tpu.vector_store %arg5[%c0_60, %c1_61, %c0_62, %c0_63], %93 {strides = array<i32>} : memref<1x8x8x128xf32, #tpu.memory_space<vmem>>, vector<1x1x8x128xf32>,
    %94 = arith.truncf %90 : vector<8x128xf32> to vector<8x128xbf16>
    %c0_64 = arith.constant 0 : index
    %c0_65 = arith.constant 0 : index
    %c0_66 = arith.constant 0 : index
    %95 = vector.load %arg3[%c0_64, %c0_65, %c0_66] : memref<3x128x128xbf16, #tpu.memory_space<vmem>>, vector<1x128x128xbf16>
    %96 = vector.shape_cast %95 : vector<1x128x128xbf16> to vector<128x128xbf16>
    %cst_67 = arith.constant dense<0.000000e+00> : vector<8x128xf32>
    %97 = tpu.matmul %94, %96, %cst_67 {dimension_numbers = #tpu.dot_dimension_numbers<[1], [0], [0], [1], [0, 0, 1, 1], [], []>} : vector<8x128xbf16>, vector<128x128xbf16>, vector<8x128xf32> -> vector<8x128xf32>
    %c1_68 = arith.constant 1 : index
    %c0_69 = arith.constant 0 : index
    %c0_70 = arith.constant 0 : index
    %98 = vector.load %arg3[%c1_68, %c0_69, %c0_70] : memref<3x128x128xbf16, #tpu.memory_space<vmem>>, vector<1x128x128xbf16>
    %99 = vector.shape_cast %98 : vector<1x128x128xbf16> to vector<128x128xbf16>
    %cst_71 = arith.constant dense<0.000000e+00> : vector<8x128xf32>
    %100 = tpu.matmul %94, %99, %cst_71 {dimension_numbers = #tpu.dot_dimension_numbers<[1], [0], [0], [1], [0, 0, 1, 1], [], []>} : vector<8x128xbf16>, vector<128x128xbf16>, vector<8x128xf32> -> vector<8x128xf32>
    %c2_72 = arith.constant 2 : index
    %c0_73 = arith.constant 0 : index
    %c0_74 = arith.constant 0 : index
    %101 = vector.load %arg3[%c2_72, %c0_73, %c0_74] : memref<3x128x128xbf16, #tpu.memory_space<vmem>>, vector<1x128x128xbf16>
    %102 = vector.shape_cast %101 : vector<1x128x128xbf16> to vector<128x128xbf16>
    %cst_75 = arith.constant dense<0.000000e+00> : vector<8x128xf32>
    %103 = tpu.matmul %94, %102, %cst_75 {dimension_numbers = #tpu.dot_dimension_numbers<[1], [0], [0], [1], [0, 0, 1, 1], [], []>} : vector<8x128xbf16>, vector<128x128xbf16>, vector<8x128xf32> -> vector<8x128xf32>
    %104 = vector.broadcast %5 : vector<1x128xf32> to vector<8x128xf32>
    %105 = arith.addf %103, %104 : vector<8x128xf32>
    %c0_76 = arith.constant 0 : index
    %c2_77 = arith.constant 2 : index
    %c0_78 = arith.constant 0 : index
    %c0_79 = arith.constant 0 : index
    %106 = vector.load %arg2[%c0_76, %c2_77, %c0_78, %c0_79] : memref<3x8x8x128xbf16, #tpu.memory_space<vmem>>, vector<1x1x8x128xbf16>
    %107 = vector.shape_cast %106 : vector<1x1x8x128xbf16> to vector<8x128xbf16>
    %108 = arith.extf %107 : vector<8x128xbf16> to vector<8x128xf32>
    %109 = arith.addf %108, %97 : vector<8x128xf32>
    %110 = arith.negf %109 : vector<8x128xf32>
    %111 = math.exp %110 : vector<8x128xf32>
    %cst_80 = arith.constant 1.000000e+00 : f32
    %112 = vector.broadcast %cst_80 : f32 to vector<8x128xf32>
    %113 = arith.addf %112, %111 : vector<8x128xf32>
    %114 = arith.divf %112, %113 : vector<8x128xf32>
    %c1_81 = arith.constant 1 : index
    %c2_82 = arith.constant 2 : index
    %c0_83 = arith.constant 0 : index
    %c0_84 = arith.constant 0 : index
    %115 = vector.load %arg2[%c1_81, %c2_82, %c0_83, %c0_84] : memref<3x8x8x128xbf16, #tpu.memory_space<vmem>>, vector<1x1x8x128xbf16>
    %116 = vector.shape_cast %115 : vector<1x1x8x128xbf16> to vector<8x128xbf16>
    %117 = arith.extf %116 : vector<8x128xbf16> to vector<8x128xf32>
    %118 = arith.addf %117, %100 : vector<8x128xf32>
    %119 = arith.negf %118 : vector<8x128xf32>
    %120 = math.exp %119 : vector<8x128xf32>
    %cst_85 = arith.constant 1.000000e+00 : f32
    %121 = vector.broadcast %cst_85 : f32 to vector<8x128xf32>
    %122 = arith.addf %121, %120 : vector<8x128xf32>
    %123 = arith.divf %121, %122 : vector<8x128xf32>
    %c2_86 = arith.constant 2 : index
    %c2_87 = arith.constant 2 : index
    %c0_88 = arith.constant 0 : index
    %c0_89 = arith.constant 0 : index
    %124 = vector.load %arg2[%c2_86, %c2_87, %c0_88, %c0_89] : memref<3x8x8x128xbf16, #tpu.memory_space<vmem>>, vector<1x1x8x128xbf16>
    %125 = vector.shape_cast %124 : vector<1x1x8x128xbf16> to vector<8x128xbf16>
    %126 = arith.extf %125 : vector<8x128xbf16> to vector<8x128xf32>
    %127 = arith.mulf %114, %105 : vector<8x128xf32>
    %128 = arith.addf %126, %127 : vector<8x128xf32>
    %129 = math.tanh %128 : vector<8x128xf32>
    %cst_90 = arith.constant 1.000000e+00 : f32
    %130 = vector.broadcast %cst_90 : f32 to vector<8x128xf32>
    %131 = arith.subf %130, %123 : vector<8x128xf32>
    %132 = arith.mulf %131, %129 : vector<8x128xf32>
    %133 = arith.mulf %123, %90 : vector<8x128xf32>
    %134 = arith.addf %132, %133 : vector<8x128xf32>
    %c0_91 = arith.constant 0 : index
    %c2_92 = arith.constant 2 : index
    %c0_93 = arith.constant 0 : index
    %c0_94 = arith.constant 0 : index
    %135 = vector.load %arg5[%c0_91, %c2_92, %c0_93, %c0_94] : memref<1x8x8x128xf32, #tpu.memory_space<vmem>>, vector<1x1x8x128xf32>
    %136 = vector.shape_cast %135 : vector<1x1x8x128xf32> to vector<8x128xf32>
    %137 = vector.shape_cast %134 : vector<8x128xf32> to vector<1x1x8x128xf32>
    tpu.vector_store %arg5[%c0_91, %c2_92, %c0_93, %c0_94], %137 {strides = array<i32>} : memref<1x8x8x128xf32, #tpu.memory_space<vmem>>, vector<1x1x8x128xf32>,
    %138 = arith.truncf %134 : vector<8x128xf32> to vector<8x128xbf16>
    %c0_95 = arith.constant 0 : index
    %c0_96 = arith.constant 0 : index
    %c0_97 = arith.constant 0 : index
    %139 = vector.load %arg3[%c0_95, %c0_96, %c0_97] : memref<3x128x128xbf16, #tpu.memory_space<vmem>>, vector<1x128x128xbf16>
    %140 = vector.shape_cast %139 : vector<1x128x128xbf16> to vector<128x128xbf16>
    %cst_98 = arith.constant dense<0.000000e+00> : vector<8x128xf32>
    %141 = tpu.matmul %138, %140, %cst_98 {dimension_numbers = #tpu.dot_dimension_numbers<[1], [0], [0], [1], [0, 0, 1, 1], [], []>} : vector<8x128xbf16>, vector<128x128xbf16>, vector<8x128xf32> -> vector<8x128xf32>
    %c1_99 = arith.constant 1 : index
    %c0_100 = arith.constant 0 : index
    %c0_101 = arith.constant 0 : index
    %142 = vector.load %arg3[%c1_99, %c0_100, %c0_101] : memref<3x128x128xbf16, #tpu.memory_space<vmem>>, vector<1x128x128xbf16>
    %143 = vector.shape_cast %142 : vector<1x128x128xbf16> to vector<128x128xbf16>
    %cst_102 = arith.constant dense<0.000000e+00> : vector<8x128xf32>
    %144 = tpu.matmul %138, %143, %cst_102 {dimension_numbers = #tpu.dot_dimension_numbers<[1], [0], [0], [1], [0, 0, 1, 1], [], []>} : vector<8x128xbf16>, vector<128x128xbf16>, vector<8x128xf32> -> vector<8x128xf32>
    %c2_103 = arith.constant 2 : index
    %c0_104 = arith.constant 0 : index
    %c0_105 = arith.constant 0 : index
    %145 = vector.load %arg3[%c2_103, %c0_104, %c0_105] : memref<3x128x128xbf16, #tpu.memory_space<vmem>>, vector<1x128x128xbf16>
    %146 = vector.shape_cast %145 : vector<1x128x128xbf16> to vector<128x128xbf16>
    %cst_106 = arith.constant dense<0.000000e+00> : vector<8x128xf32>
    %147 = tpu.matmul %138, %146, %cst_106 {dimension_numbers = #tpu.dot_dimension_numbers<[1], [0], [0], [1], [0, 0, 1, 1], [], []>} : vector<8x128xbf16>, vector<128x128xbf16>, vector<8x128xf32> -> vector<8x128xf32>
    %148 = vector.broadcast %5 : vector<1x128xf32> to vector<8x128xf32>
    %149 = arith.addf %147, %148 : vector<8x128xf32>
    %c0_107 = arith.constant 0 : index
    %c3 = arith.constant 3 : index
    %c0_108 = arith.constant 0 : index
    %c0_109 = arith.constant 0 : index
    %150 = vector.load %arg2[%c0_107, %c3, %c0_108, %c0_109] : memref<3x8x8x128xbf16, #tpu.memory_space<vmem>>, vector<1x1x8x128xbf16>
    %151 = vector.shape_cast %150 : vector<1x1x8x128xbf16> to vector<8x128xbf16>
    %152 = arith.extf %151 : vector<8x128xbf16> to vector<8x128xf32>
    %153 = arith.addf %152, %141 : vector<8x128xf32>
    %154 = arith.negf %153 : vector<8x128xf32>
    %155 = math.exp %154 : vector<8x128xf32>
    %cst_110 = arith.constant 1.000000e+00 : f32
    %156 = vector.broadcast %cst_110 : f32 to vector<8x128xf32>
    %157 = arith.addf %156, %155 : vector<8x128xf32>
    %158 = arith.divf %156, %157 : vector<8x128xf32>
    %c1_111 = arith.constant 1 : index
    %c3_112 = arith.constant 3 : index
    %c0_113 = arith.constant 0 : index
    %c0_114 = arith.constant 0 : index
    %159 = vector.load %arg2[%c1_111, %c3_112, %c0_113, %c0_114] : memref<3x8x8x128xbf16, #tpu.memory_space<vmem>>, vector<1x1x8x128xbf16>
    %160 = vector.shape_cast %159 : vector<1x1x8x128xbf16> to vector<8x128xbf16>
    %161 = arith.extf %160 : vector<8x128xbf16> to vector<8x128xf32>
    %162 = arith.addf %161, %144 : vector<8x128xf32>
    %163 = arith.negf %162 : vector<8x128xf32>
    %164 = math.exp %163 : vector<8x128xf32>
    %cst_115 = arith.constant 1.000000e+00 : f32
    %165 = vector.broadcast %cst_115 : f32 to vector<8x128xf32>
    %166 = arith.addf %165, %164 : vector<8x128xf32>
    %167 = arith.divf %165, %166 : vector<8x128xf32>
    %c2_116 = arith.constant 2 : index
    %c3_117 = arith.constant 3 : index
    %c0_118 = arith.constant 0 : index
    %c0_119 = arith.constant 0 : index
    %168 = vector.load %arg2[%c2_116, %c3_117, %c0_118, %c0_119] : memref<3x8x8x128xbf16, #tpu.memory_space<vmem>>, vector<1x1x8x128xbf16>
    %169 = vector.shape_cast %168 : vector<1x1x8x128xbf16> to vector<8x128xbf16>
    %170 = arith.extf %169 : vector<8x128xbf16> to vector<8x128xf32>
    %171 = arith.mulf %158, %149 : vector<8x128xf32>
    %172 = arith.addf %170, %171 : vector<8x128xf32>
    %173 = math.tanh %172 : vector<8x128xf32>
    %cst_120 = arith.constant 1.000000e+00 : f32
    %174 = vector.broadcast %cst_120 : f32 to vector<8x128xf32>
    %175 = arith.subf %174, %167 : vector<8x128xf32>
    %176 = arith.mulf %175, %173 : vector<8x128xf32>
    %177 = arith.mulf %167, %134 : vector<8x128xf32>
    %178 = arith.addf %176, %177 : vector<8x128xf32>
    %c0_121 = arith.constant 0 : index
    %c3_122 = arith.constant 3 : index
    %c0_123 = arith.constant 0 : index
    %c0_124 = arith.constant 0 : index
    %179 = vector.load %arg5[%c0_121, %c3_122, %c0_123, %c0_124] : memref<1x8x8x128xf32, #tpu.memory_space<vmem>>, vector<1x1x8x128xf32>
    %180 = vector.shape_cast %179 : vector<1x1x8x128xf32> to vector<8x128xf32>
    %181 = vector.shape_cast %178 : vector<8x128xf32> to vector<1x1x8x128xf32>
    tpu.vector_store %arg5[%c0_121, %c3_122, %c0_123, %c0_124], %181 {strides = array<i32>} : memref<1x8x8x128xf32, #tpu.memory_space<vmem>>, vector<1x1x8x128xf32>,
    %182 = arith.truncf %178 : vector<8x128xf32> to vector<8x128xbf16>
    %c0_125 = arith.constant 0 : index
    %c0_126 = arith.constant 0 : index
    %c0_127 = arith.constant 0 : index
    %183 = vector.load %arg3[%c0_125, %c0_126, %c0_127] : memref<3x128x128xbf16, #tpu.memory_space<vmem>>, vector<1x128x128xbf16>
    %184 = vector.shape_cast %183 : vector<1x128x128xbf16> to vector<128x128xbf16>
    %cst_128 = arith.constant dense<0.000000e+00> : vector<8x128xf32>
    %185 = tpu.matmul %182, %184, %cst_128 {dimension_numbers = #tpu.dot_dimension_numbers<[1], [0], [0], [1], [0, 0, 1, 1], [], []>} : vector<8x128xbf16>, vector<128x128xbf16>, vector<8x128xf32> -> vector<8x128xf32>
    %c1_129 = arith.constant 1 : index
    %c0_130 = arith.constant 0 : index
    %c0_131 = arith.constant 0 : index
    %186 = vector.load %arg3[%c1_129, %c0_130, %c0_131] : memref<3x128x128xbf16, #tpu.memory_space<vmem>>, vector<1x128x128xbf16>
    %187 = vector.shape_cast %186 : vector<1x128x128xbf16> to vector<128x128xbf16>
    %cst_132 = arith.constant dense<0.000000e+00> : vector<8x128xf32>
    %188 = tpu.matmul %182, %187, %cst_132 {dimension_numbers = #tpu.dot_dimension_numbers<[1], [0], [0], [1], [0, 0, 1, 1], [], []>} : vector<8x128xbf16>, vector<128x128xbf16>, vector<8x128xf32> -> vector<8x128xf32>
    %c2_133 = arith.constant 2 : index
    %c0_134 = arith.constant 0 : index
    %c0_135 = arith.constant 0 : index
    %189 = vector.load %arg3[%c2_133, %c0_134, %c0_135] : memref<3x128x128xbf16, #tpu.memory_space<vmem>>, vector<1x128x128xbf16>
    %190 = vector.shape_cast %189 : vector<1x128x128xbf16> to vector<128x128xbf16>
    %cst_136 = arith.constant dense<0.000000e+00> : vector<8x128xf32>
    %191 = tpu.matmul %182, %190, %cst_136 {dimension_numbers = #tpu.dot_dimension_numbers<[1], [0], [0], [1], [0, 0, 1, 1], [], []>} : vector<8x128xbf16>, vector<128x128xbf16>, vector<8x128xf32> -> vector<8x128xf32>
    %192 = vector.broadcast %5 : vector<1x128xf32> to vector<8x128xf32>
    %193 = arith.addf %191, %192 : vector<8x128xf32>
    %c0_137 = arith.constant 0 : index
    %c4 = arith.constant 4 : index
    %c0_138 = arith.constant 0 : index
    %c0_139 = arith.constant 0 : index
    %194 = vector.load %arg2[%c0_137, %c4, %c0_138, %c0_139] : memref<3x8x8x128xbf16, #tpu.memory_space<vmem>>, vector<1x1x8x128xbf16>
    %195 = vector.shape_cast %194 : vector<1x1x8x128xbf16> to vector<8x128xbf16>
    %196 = arith.extf %195 : vector<8x128xbf16> to vector<8x128xf32>
    %197 = arith.addf %196, %185 : vector<8x128xf32>
    %198 = arith.negf %197 : vector<8x128xf32>
    %199 = math.exp %198 : vector<8x128xf32>
    %cst_140 = arith.constant 1.000000e+00 : f32
    %200 = vector.broadcast %cst_140 : f32 to vector<8x128xf32>
    %201 = arith.addf %200, %199 : vector<8x128xf32>
    %202 = arith.divf %200, %201 : vector<8x128xf32>
    %c1_141 = arith.constant 1 : index
    %c4_142 = arith.constant 4 : index
    %c0_143 = arith.constant 0 : index
    %c0_144 = arith.constant 0 : index
    %203 = vector.load %arg2[%c1_141, %c4_142, %c0_143, %c0_144] : memref<3x8x8x128xbf16, #tpu.memory_space<vmem>>, vector<1x1x8x128xbf16>
    %204 = vector.shape_cast %203 : vector<1x1x8x128xbf16> to vector<8x128xbf16>
    %205 = arith.extf %204 : vector<8x128xbf16> to vector<8x128xf32>
    %206 = arith.addf %205, %188 : vector<8x128xf32>
    %207 = arith.negf %206 : vector<8x128xf32>
    %208 = math.exp %207 : vector<8x128xf32>
    %cst_145 = arith.constant 1.000000e+00 : f32
    %209 = vector.broadcast %cst_145 : f32 to vector<8x128xf32>
    %210 = arith.addf %209, %208 : vector<8x128xf32>
    %211 = arith.divf %209, %210 : vector<8x128xf32>
    %c2_146 = arith.constant 2 : index
    %c4_147 = arith.constant 4 : index
    %c0_148 = arith.constant 0 : index
    %c0_149 = arith.constant 0 : index
    %212 = vector.load %arg2[%c2_146, %c4_147, %c0_148, %c0_149] : memref<3x8x8x128xbf16, #tpu.memory_space<vmem>>, vector<1x1x8x128xbf16>
    %213 = vector.shape_cast %212 : vector<1x1x8x128xbf16> to vector<8x128xbf16>
    %214 = arith.extf %213 : vector<8x128xbf16> to vector<8x128xf32>
    %215 = arith.mulf %202, %193 : vector<8x128xf32>
    %216 = arith.addf %214, %215 : vector<8x128xf32>
    %217 = math.tanh %216 : vector<8x128xf32>
    %cst_150 = arith.constant 1.000000e+00 : f32
    %218 = vector.broadcast %cst_150 : f32 to vector<8x128xf32>
    %219 = arith.subf %218, %211 : vector<8x128xf32>
    %220 = arith.mulf %219, %217 : vector<8x128xf32>
    %221 = arith.mulf %211, %178 : vector<8x128xf32>
    %222 = arith.addf %220, %221 : vector<8x128xf32>
    %c0_151 = arith.constant 0 : index
    %c4_152 = arith.constant 4 : index
    %c0_153 = arith.constant 0 : index
    %c0_154 = arith.constant 0 : index
    %223 = vector.load %arg5[%c0_151, %c4_152, %c0_153, %c0_154] : memref<1x8x8x128xf32, #tpu.memory_space<vmem>>, vector<1x1x8x128xf32>
    %224 = vector.shape_cast %223 : vector<1x1x8x128xf32> to vector<8x128xf32>
    %225 = vector.shape_cast %222 : vector<8x128xf32> to vector<1x1x8x128xf32>
    tpu.vector_store %arg5[%c0_151, %c4_152, %c0_153, %c0_154], %225 {strides = array<i32>} : memref<1x8x8x128xf32, #tpu.memory_space<vmem>>, vector<1x1x8x128xf32>,
    %226 = arith.truncf %222 : vector<8x128xf32> to vector<8x128xbf16>
    %c0_155 = arith.constant 0 : index
    %c0_156 = arith.constant 0 : index
    %c0_157 = arith.constant 0 : index
    %227 = vector.load %arg3[%c0_155, %c0_156, %c0_157] : memref<3x128x128xbf16, #tpu.memory_space<vmem>>, vector<1x128x128xbf16>
    %228 = vector.shape_cast %227 : vector<1x128x128xbf16> to vector<128x128xbf16>
    %cst_158 = arith.constant dense<0.000000e+00> : vector<8x128xf32>
    %229 = tpu.matmul %226, %228, %cst_158 {dimension_numbers = #tpu.dot_dimension_numbers<[1], [0], [0], [1], [0, 0, 1, 1], [], []>} : vector<8x128xbf16>, vector<128x128xbf16>, vector<8x128xf32> -> vector<8x128xf32>
    %c1_159 = arith.constant 1 : index
    %c0_160 = arith.constant 0 : index
    %c0_161 = arith.constant 0 : index
    %230 = vector.load %arg3[%c1_159, %c0_160, %c0_161] : memref<3x128x128xbf16, #tpu.memory_space<vmem>>, vector<1x128x128xbf16>
    %231 = vector.shape_cast %230 : vector<1x128x128xbf16> to vector<128x128xbf16>
    %cst_162 = arith.constant dense<0.000000e+00> : vector<8x128xf32>
    %232 = tpu.matmul %226, %231, %cst_162 {dimension_numbers = #tpu.dot_dimension_numbers<[1], [0], [0], [1], [0, 0, 1, 1], [], []>} : vector<8x128xbf16>, vector<128x128xbf16>, vector<8x128xf32> -> vector<8x128xf32>
    %c2_163 = arith.constant 2 : index
    %c0_164 = arith.constant 0 : index
    %c0_165 = arith.constant 0 : index
    %233 = vector.load %arg3[%c2_163, %c0_164, %c0_165] : memref<3x128x128xbf16, #tpu.memory_space<vmem>>, vector<1x128x128xbf16>
    %234 = vector.shape_cast %233 : vector<1x128x128xbf16> to vector<128x128xbf16>
    %cst_166 = arith.constant dense<0.000000e+00> : vector<8x128xf32>
    %235 = tpu.matmul %226, %234, %cst_166 {dimension_numbers = #tpu.dot_dimension_numbers<[1], [0], [0], [1], [0, 0, 1, 1], [], []>} : vector<8x128xbf16>, vector<128x128xbf16>, vector<8x128xf32> -> vector<8x128xf32>
    %236 = vector.broadcast %5 : vector<1x128xf32> to vector<8x128xf32>
    %237 = arith.addf %235, %236 : vector<8x128xf32>
    %c0_167 = arith.constant 0 : index
    %c5 = arith.constant 5 : index
    %c0_168 = arith.constant 0 : index
    %c0_169 = arith.constant 0 : index
    %238 = vector.load %arg2[%c0_167, %c5, %c0_168, %c0_169] : memref<3x8x8x128xbf16, #tpu.memory_space<vmem>>, vector<1x1x8x128xbf16>
    %239 = vector.shape_cast %238 : vector<1x1x8x128xbf16> to vector<8x128xbf16>
    %240 = arith.extf %239 : vector<8x128xbf16> to vector<8x128xf32>
    %241 = arith.addf %240, %229 : vector<8x128xf32>
    %242 = arith.negf %241 : vector<8x128xf32>
    %243 = math.exp %242 : vector<8x128xf32>
    %cst_170 = arith.constant 1.000000e+00 : f32
    %244 = vector.broadcast %cst_170 : f32 to vector<8x128xf32>
    %245 = arith.addf %244, %243 : vector<8x128xf32>
    %246 = arith.divf %244, %245 : vector<8x128xf32>
    %c1_171 = arith.constant 1 : index
    %c5_172 = arith.constant 5 : index
    %c0_173 = arith.constant 0 : index
    %c0_174 = arith.constant 0 : index
    %247 = vector.load %arg2[%c1_171, %c5_172, %c0_173, %c0_174] : memref<3x8x8x128xbf16, #tpu.memory_space<vmem>>, vector<1x1x8x128xbf16>
    %248 = vector.shape_cast %247 : vector<1x1x8x128xbf16> to vector<8x128xbf16>
    %249 = arith.extf %248 : vector<8x128xbf16> to vector<8x128xf32>
    %250 = arith.addf %249, %232 : vector<8x128xf32>
    %251 = arith.negf %250 : vector<8x128xf32>
    %252 = math.exp %251 : vector<8x128xf32>
    %cst_175 = arith.constant 1.000000e+00 : f32
    %253 = vector.broadcast %cst_175 : f32 to vector<8x128xf32>
    %254 = arith.addf %253, %252 : vector<8x128xf32>
    %255 = arith.divf %253, %254 : vector<8x128xf32>
    %c2_176 = arith.constant 2 : index
    %c5_177 = arith.constant 5 : index
    %c0_178 = arith.constant 0 : index
    %c0_179 = arith.constant 0 : index
    %256 = vector.load %arg2[%c2_176, %c5_177, %c0_178, %c0_179] : memref<3x8x8x128xbf16, #tpu.memory_space<vmem>>, vector<1x1x8x128xbf16>
    %257 = vector.shape_cast %256 : vector<1x1x8x128xbf16> to vector<8x128xbf16>
    %258 = arith.extf %257 : vector<8x128xbf16> to vector<8x128xf32>
    %259 = arith.mulf %246, %237 : vector<8x128xf32>
    %260 = arith.addf %258, %259 : vector<8x128xf32>
    %261 = math.tanh %260 : vector<8x128xf32>
    %cst_180 = arith.constant 1.000000e+00 : f32
    %262 = vector.broadcast %cst_180 : f32 to vector<8x128xf32>
    %263 = arith.subf %262, %255 : vector<8x128xf32>
    %264 = arith.mulf %263, %261 : vector<8x128xf32>
    %265 = arith.mulf %255, %222 : vector<8x128xf32>
    %266 = arith.addf %264, %265 : vector<8x128xf32>
    %c0_181 = arith.constant 0 : index
    %c5_182 = arith.constant 5 : index
    %c0_183 = arith.constant 0 : index
    %c0_184 = arith.constant 0 : index
    %267 = vector.load %arg5[%c0_181, %c5_182, %c0_183, %c0_184] : memref<1x8x8x128xf32, #tpu.memory_space<vmem>>, vector<1x1x8x128xf32>
    %268 = vector.shape_cast %267 : vector<1x1x8x128xf32> to vector<8x128xf32>
    %269 = vector.shape_cast %266 : vector<8x128xf32> to vector<1x1x8x128xf32>
    tpu.vector_store %arg5[%c0_181, %c5_182, %c0_183, %c0_184], %269 {strides = array<i32>} : memref<1x8x8x128xf32, #tpu.memory_space<vmem>>, vector<1x1x8x128xf32>,
    %270 = arith.truncf %266 : vector<8x128xf32> to vector<8x128xbf16>
    %c0_185 = arith.constant 0 : index
    %c0_186 = arith.constant 0 : index
    %c0_187 = arith.constant 0 : index
    %271 = vector.load %arg3[%c0_185, %c0_186, %c0_187] : memref<3x128x128xbf16, #tpu.memory_space<vmem>>, vector<1x128x128xbf16>
    %272 = vector.shape_cast %271 : vector<1x128x128xbf16> to vector<128x128xbf16>
    %cst_188 = arith.constant dense<0.000000e+00> : vector<8x128xf32>
    %273 = tpu.matmul %270, %272, %cst_188 {dimension_numbers = #tpu.dot_dimension_numbers<[1], [0], [0], [1], [0, 0, 1, 1], [], []>} : vector<8x128xbf16>, vector<128x128xbf16>, vector<8x128xf32> -> vector<8x128xf32>
    %c1_189 = arith.constant 1 : index
    %c0_190 = arith.constant 0 : index
    %c0_191 = arith.constant 0 : index
    %274 = vector.load %arg3[%c1_189, %c0_190, %c0_191] : memref<3x128x128xbf16, #tpu.memory_space<vmem>>, vector<1x128x128xbf16>
    %275 = vector.shape_cast %274 : vector<1x128x128xbf16> to vector<128x128xbf16>
    %cst_192 = arith.constant dense<0.000000e+00> : vector<8x128xf32>
    %276 = tpu.matmul %270, %275, %cst_192 {dimension_numbers = #tpu.dot_dimension_numbers<[1], [0], [0], [1], [0, 0, 1, 1], [], []>} : vector<8x128xbf16>, vector<128x128xbf16>, vector<8x128xf32> -> vector<8x128xf32>
    %c2_193 = arith.constant 2 : index
    %c0_194 = arith.constant 0 : index
    %c0_195 = arith.constant 0 : index
    %277 = vector.load %arg3[%c2_193, %c0_194, %c0_195] : memref<3x128x128xbf16, #tpu.memory_space<vmem>>, vector<1x128x128xbf16>
    %278 = vector.shape_cast %277 : vector<1x128x128xbf16> to vector<128x128xbf16>
    %cst_196 = arith.constant dense<0.000000e+00> : vector<8x128xf32>
    %279 = tpu.matmul %270, %278, %cst_196 {dimension_numbers = #tpu.dot_dimension_numbers<[1], [0], [0], [1], [0, 0, 1, 1], [], []>} : vector<8x128xbf16>, vector<128x128xbf16>, vector<8x128xf32> -> vector<8x128xf32>
    %280 = vector.broadcast %5 : vector<1x128xf32> to vector<8x128xf32>
    %281 = arith.addf %279, %280 : vector<8x128xf32>
    %c0_197 = arith.constant 0 : index
    %c6 = arith.constant 6 : index
    %c0_198 = arith.constant 0 : index
    %c0_199 = arith.constant 0 : index
    %282 = vector.load %arg2[%c0_197, %c6, %c0_198, %c0_199] : memref<3x8x8x128xbf16, #tpu.memory_space<vmem>>, vector<1x1x8x128xbf16>
    %283 = vector.shape_cast %282 : vector<1x1x8x128xbf16> to vector<8x128xbf16>
    %284 = arith.extf %283 : vector<8x128xbf16> to vector<8x128xf32>
    %285 = arith.addf %284, %273 : vector<8x128xf32>
    %286 = arith.negf %285 : vector<8x128xf32>
    %287 = math.exp %286 : vector<8x128xf32>
    %cst_200 = arith.constant 1.000000e+00 : f32
    %288 = vector.broadcast %cst_200 : f32 to vector<8x128xf32>
    %289 = arith.addf %288, %287 : vector<8x128xf32>
    %290 = arith.divf %288, %289 : vector<8x128xf32>
    %c1_201 = arith.constant 1 : index
    %c6_202 = arith.constant 6 : index
    %c0_203 = arith.constant 0 : index
    %c0_204 = arith.constant 0 : index
    %291 = vector.load %arg2[%c1_201, %c6_202, %c0_203, %c0_204] : memref<3x8x8x128xbf16, #tpu.memory_space<vmem>>, vector<1x1x8x128xbf16>
    %292 = vector.shape_cast %291 : vector<1x1x8x128xbf16> to vector<8x128xbf16>
    %293 = arith.extf %292 : vector<8x128xbf16> to vector<8x128xf32>
    %294 = arith.addf %293, %276 : vector<8x128xf32>
    %295 = arith.negf %294 : vector<8x128xf32>
    %296 = math.exp %295 : vector<8x128xf32>
    %cst_205 = arith.constant 1.000000e+00 : f32
    %297 = vector.broadcast %cst_205 : f32 to vector<8x128xf32>
    %298 = arith.addf %297, %296 : vector<8x128xf32>
    %299 = arith.divf %297, %298 : vector<8x128xf32>
    %c2_206 = arith.constant 2 : index
    %c6_207 = arith.constant 6 : index
    %c0_208 = arith.constant 0 : index
    %c0_209 = arith.constant 0 : index
    %300 = vector.load %arg2[%c2_206, %c6_207, %c0_208, %c0_209] : memref<3x8x8x128xbf16, #tpu.memory_space<vmem>>, vector<1x1x8x128xbf16>
    %301 = vector.shape_cast %300 : vector<1x1x8x128xbf16> to vector<8x128xbf16>
    %302 = arith.extf %301 : vector<8x128xbf16> to vector<8x128xf32>
    %303 = arith.mulf %290, %281 : vector<8x128xf32>
    %304 = arith.addf %302, %303 : vector<8x128xf32>
    %305 = math.tanh %304 : vector<8x128xf32>
    %cst_210 = arith.constant 1.000000e+00 : f32
    %306 = vector.broadcast %cst_210 : f32 to vector<8x128xf32>
    %307 = arith.subf %306, %299 : vector<8x128xf32>
    %308 = arith.mulf %307, %305 : vector<8x128xf32>
    %309 = arith.mulf %299, %266 : vector<8x128xf32>
    %310 = arith.addf %308, %309 : vector<8x128xf32>
    %c0_211 = arith.constant 0 : index
    %c6_212 = arith.constant 6 : index
    %c0_213 = arith.constant 0 : index
    %c0_214 = arith.constant 0 : index
    %311 = vector.load %arg5[%c0_211, %c6_212, %c0_213, %c0_214] : memref<1x8x8x128xf32, #tpu.memory_space<vmem>>, vector<1x1x8x128xf32>
    %312 = vector.shape_cast %311 : vector<1x1x8x128xf32> to vector<8x128xf32>
    %313 = vector.shape_cast %310 : vector<8x128xf32> to vector<1x1x8x128xf32>
    tpu.vector_store %arg5[%c0_211, %c6_212, %c0_213, %c0_214], %313 {strides = array<i32>} : memref<1x8x8x128xf32, #tpu.memory_space<vmem>>, vector<1x1x8x128xf32>,
    %314 = arith.truncf %310 : vector<8x128xf32> to vector<8x128xbf16>
    %c0_215 = arith.constant 0 : index
    %c0_216 = arith.constant 0 : index
    %c0_217 = arith.constant 0 : index
    %315 = vector.load %arg3[%c0_215, %c0_216, %c0_217] : memref<3x128x128xbf16, #tpu.memory_space<vmem>>, vector<1x128x128xbf16>
    %316 = vector.shape_cast %315 : vector<1x128x128xbf16> to vector<128x128xbf16>
    %cst_218 = arith.constant dense<0.000000e+00> : vector<8x128xf32>
    %317 = tpu.matmul %314, %316, %cst_218 {dimension_numbers = #tpu.dot_dimension_numbers<[1], [0], [0], [1], [0, 0, 1, 1], [], []>} : vector<8x128xbf16>, vector<128x128xbf16>, vector<8x128xf32> -> vector<8x128xf32>
    %c1_219 = arith.constant 1 : index
    %c0_220 = arith.constant 0 : index
    %c0_221 = arith.constant 0 : index
    %318 = vector.load %arg3[%c1_219, %c0_220, %c0_221] : memref<3x128x128xbf16, #tpu.memory_space<vmem>>, vector<1x128x128xbf16>
    %319 = vector.shape_cast %318 : vector<1x128x128xbf16> to vector<128x128xbf16>
    %cst_222 = arith.constant dense<0.000000e+00> : vector<8x128xf32>
    %320 = tpu.matmul %314, %319, %cst_222 {dimension_numbers = #tpu.dot_dimension_numbers<[1], [0], [0], [1], [0, 0, 1, 1], [], []>} : vector<8x128xbf16>, vector<128x128xbf16>, vector<8x128xf32> -> vector<8x128xf32>
    %c2_223 = arith.constant 2 : index
    %c0_224 = arith.constant 0 : index
    %c0_225 = arith.constant 0 : index
    %321 = vector.load %arg3[%c2_223, %c0_224, %c0_225] : memref<3x128x128xbf16, #tpu.memory_space<vmem>>, vector<1x128x128xbf16>
    %322 = vector.shape_cast %321 : vector<1x128x128xbf16> to vector<128x128xbf16>
    %cst_226 = arith.constant dense<0.000000e+00> : vector<8x128xf32>
    %323 = tpu.matmul %314, %322, %cst_226 {dimension_numbers = #tpu.dot_dimension_numbers<[1], [0], [0], [1], [0, 0, 1, 1], [], []>} : vector<8x128xbf16>, vector<128x128xbf16>, vector<8x128xf32> -> vector<8x128xf32>
    %324 = vector.broadcast %5 : vector<1x128xf32> to vector<8x128xf32>
    %325 = arith.addf %323, %324 : vector<8x128xf32>
    %c0_227 = arith.constant 0 : index
    %c7 = arith.constant 7 : index
    %c0_228 = arith.constant 0 : index
    %c0_229 = arith.constant 0 : index
    %326 = vector.load %arg2[%c0_227, %c7, %c0_228, %c0_229] : memref<3x8x8x128xbf16, #tpu.memory_space<vmem>>, vector<1x1x8x128xbf16>
    %327 = vector.shape_cast %326 : vector<1x1x8x128xbf16> to vector<8x128xbf16>
    %328 = arith.extf %327 : vector<8x128xbf16> to vector<8x128xf32>
    %329 = arith.addf %328, %317 : vector<8x128xf32>
    %330 = arith.negf %329 : vector<8x128xf32>
    %331 = math.exp %330 : vector<8x128xf32>
    %cst_230 = arith.constant 1.000000e+00 : f32
    %332 = vector.broadcast %cst_230 : f32 to vector<8x128xf32>
    %333 = arith.addf %332, %331 : vector<8x128xf32>
    %334 = arith.divf %332, %333 : vector<8x128xf32>
    %c1_231 = arith.constant 1 : index
    %c7_232 = arith.constant 7 : index
    %c0_233 = arith.constant 0 : index
    %c0_234 = arith.constant 0 : index
    %335 = vector.load %arg2[%c1_231, %c7_232, %c0_233, %c0_234] : memref<3x8x8x128xbf16, #tpu.memory_space<vmem>>, vector<1x1x8x128xbf16>
    %336 = vector.shape_cast %335 : vector<1x1x8x128xbf16> to vector<8x128xbf16>
    %337 = arith.extf %336 : vector<8x128xbf16> to vector<8x128xf32>
    %338 = arith.addf %337, %320 : vector<8x128xf32>
    %339 = arith.negf %338 : vector<8x128xf32>
    %340 = math.exp %339 : vector<8x128xf32>
    %cst_235 = arith.constant 1.000000e+00 : f32
    %341 = vector.broadcast %cst_235 : f32 to vector<8x128xf32>
    %342 = arith.addf %341, %340 : vector<8x128xf32>
    %343 = arith.divf %341, %342 : vector<8x128xf32>
    %c2_236 = arith.constant 2 : index
    %c7_237 = arith.constant 7 : index
    %c0_238 = arith.constant 0 : index
    %c0_239 = arith.constant 0 : index
    %344 = vector.load %arg2[%c2_236, %c7_237, %c0_238, %c0_239] : memref<3x8x8x128xbf16, #tpu.memory_space<vmem>>, vector<1x1x8x128xbf16>
    %345 = vector.shape_cast %344 : vector<1x1x8x128xbf16> to vector<8x128xbf16>
    %346 = arith.extf %345 : vector<8x128xbf16> to vector<8x128xf32>
    %347 = arith.mulf %334, %325 : vector<8x128xf32>
    %348 = arith.addf %346, %347 : vector<8x128xf32>
    %349 = math.tanh %348 : vector<8x128xf32>
    %cst_240 = arith.constant 1.000000e+00 : f32
    %350 = vector.broadcast %cst_240 : f32 to vector<8x128xf32>
    %351 = arith.subf %350, %343 : vector<8x128xf32>
    %352 = arith.mulf %351, %349 : vector<8x128xf32>
    %353 = arith.mulf %343, %310 : vector<8x128xf32>
    %354 = arith.addf %352, %353 : vector<8x128xf32>
    %c0_241 = arith.constant 0 : index
    %c7_242 = arith.constant 7 : index
    %c0_243 = arith.constant 0 : index
    %c0_244 = arith.constant 0 : index
    %355 = vector.load %arg5[%c0_241, %c7_242, %c0_243, %c0_244] : memref<1x8x8x128xf32, #tpu.memory_space<vmem>>, vector<1x1x8x128xf32>
    %356 = vector.shape_cast %355 : vector<1x1x8x128xf32> to vector<8x128xf32>
    %357 = vector.shape_cast %354 : vector<8x128xf32> to vector<1x1x8x128xf32>
    tpu.vector_store %arg5[%c0_241, %c7_242, %c0_243, %c0_244], %357 {strides = array<i32>} : memref<1x8x8x128xf32, #tpu.memory_space<vmem>>, vector<1x1x8x128xf32>,
    %c0_245 = arith.constant 0 : index
    %c0_246 = arith.constant 0 : index
    %358 = vector.load %arg6[%c0_245, %c0_246] : memref<8x128xf32, #tpu.memory_space<vmem>>, vector<8x128xf32>
    tpu.vector_store %arg6[%c0_245, %c0_246], %354 {strides = array<i32>} : memref<8x128xf32, #tpu.memory_space<vmem>>, vector<8x128xf32>,
    return
  }
  func.func @transform_0(%arg0: i32, %arg1: i32) -> (i32, i32, i32, i32) {
    %c0_i32 = arith.constant 0 : i32
    %c0_i32_0 = arith.constant 0 : i32
    %c0_i32_1 = arith.constant 0 : i32
    return %arg0, %arg1, %c0_i32, %c0_i32_0 : i32, i32, i32, i32
  }
  func.func @transform_1(%arg0: i32, %arg1: i32) -> (i32, i32, i32) {
    %c0_i32 = arith.constant 0 : i32
    %c0_i32_0 = arith.constant 0 : i32
    %c0_i32_1 = arith.constant 0 : i32
    return %arg0, %c0_i32, %c0_i32_0 : i32, i32, i32
  }
  func.func @transform_2(%arg0: i32, %arg1: i32) -> (i32, i32, i32) {
    %c0_i32 = arith.constant 0 : i32
    %c0_i32_0 = arith.constant 0 : i32
    %c0_i32_1 = arith.constant 0 : i32
    return %arg0, %c0_i32, %c0_i32_0 : i32, i32, i32
  }
  func.func @transform_3(%arg0: i32, %arg1: i32) -> (i32, i32, i32, i32) {
    %c0_i32 = arith.constant 0 : i32
    %c0_i32_0 = arith.constant 0 : i32
    %c0_i32_1 = arith.constant 0 : i32
    return %arg0, %arg1, %c0_i32, %c0_i32_0 : i32, i32, i32, i32
  }
}

</mosaic_0001>

<llo_original>
// kernel: tpu_custom_call.1
$region0: #{tpu_custom_call.1}
  #allocation0 [shape = 'u32[]', space=smem, size = 0x4, offset = 0x4, fixed_abs, tag = 'smem constant byte address 0x4 - core index']
  #allocation1 [shape = 'u32[144,128]{1,0:T(1,128)}', space=vmem, size = 0x12000, scoped, tag = 'internal scratch']
  #allocation2 [shape = 'f32[8,128]{1,0:T(8,128)}', space=vmem, size = 0x1000, scoped, tag = 'scratch operand']
  #allocation9 [shape = 's32[]', space=sflag, size = 0x4, offset = 0, fixed_abs, tag = 'sflag constant byte address 0x0 - dummy sync flag']
  %s0 = inlined_call_operand.hbm [shape: bf16[6,16,8,128], index: 0, kind: input, shape index: {}]
  %s1 = inlined_call_operand.hbm [shape: bf16[6,128,128], index: 1, kind: input, shape index: {}]
  %s2 = inlined_call_operand.vmem [shape: f32[2,1,128], index: 2, kind: input, shape index: {}]
  %s3 = inlined_call_operand.hbm [shape: f32[2,16,8,128], index: 3, kind: output, shape index: {}]
  %s4 = sld [smem:[#allocation0]]
  $region57: #{tpu_custom_call.1} parent=0
    _
  %s6 = ssub.s32 1, %s4
  %s7 = scalar_select 0, %s6, %s4
  $region1: #{tpu_custom_call.1} parent=0
    #allocation3 [shape = 'u8[98304]{0}', space=vmem, size = 0x18000, scoped, tag = 'input window, operand 0']
    #allocation4 [shape = 's32[2]{0}', space=sflag, size = 0x8, scoped, tag = 'scoped memory for tpu_custom_call.1']
    #allocation5 [shape = 's32[2]{0}', space=sflag, size = 0x8, scoped, tag = 'scoped memory for tpu_custom_call.1']
    #allocation6 [shape = 'u8[196608]{0}', space=vmem, size = 0x30000, scoped, tag = 'input window, operand 1']
    #allocation7 [shape = 's32[2]{0}', space=sflag, size = 0x8, scoped, tag = 'scoped memory for tpu_custom_call.1']
    #allocation8 [shape = 'u8[65536]{0}', space=vmem, size = 0x10000, scoped, tag = 'output window, operand 0']
    %8 = vsyncpa [#allocation4], 0
    %s9 = scalar_lea.sflag [#allocation4], 1
    %10 = vsyncpa %s9, 0
    %11 = vsyncpa [#allocation7], 0
    %s12 = scalar_lea.sflag [#allocation7], 1
    %13 = vsyncpa %s12, 0
    %14 = vsyncpa [#allocation5], 0
    %s15 = scalar_lea.sflag [#allocation5], 1
    %16 = vsyncpa %s15, 0
    loop: start=0, step=1, limit=6
    $region2: #{tpu_custom_call.1} parent=1 // loop_pre_header
      _
    $region3: #{tpu_custom_call.1} parent=1 // loop_header
      %s18 = sphi 0, %s22
      %p19 = scmp.ge.s32.totalorder %s18, 6
      %s25 = sphi 0, %s37
      %s26 = sphi 0, %s33
      %s27 = sphi 0, %s25
      %s28 = sphi 0, %s26
      %s29 = sphi 0, %s27
      %s30 = sphi 0, %s28
      %s42 = sphi 0, %s44
      %s45 = sphi 0, %s42
      %s46 = sphi 0, %s45
      %s62 = sphi 0, %s46
      %s68 = sphi 0, %s70
      %s71 = sphi 0, %s68
      %s72 = sphi 0, %s71
      %s88 = sphi 0, %s72
      %s94 = sphi 0, %s96
      %s97 = sphi 0, %s94
      %s98 = sphi 0, %s97
      %s114 = sphi 0, %s98
      %s122 = sphi 0, %s124
      %s125 = sphi 0, %s122
      %s126 = sphi 0, %s125
      %s142 = sphi 0, %s126
    $region4: #{tpu_custom_call.1} parent=1 // loop_header_branch
      %21 = sbr.rel (%p19) target = $region8
    $region5: #{tpu_custom_call.1} parent=1 // loop_body
      %s23 = ssub.s32 %s18, 1
      %s24 = ssub.s32 %s18, 2
      %s31 = sadd.s32 1, %s26
      %p32 = scmp.ge.s32.totalorder %s31, 2
      %s33 = scalar_select %p32, 0, %s31
      %s34 = sadd.s32 1, %s25
      %s35 = scalar_select %p32, %s34, %s25
      %p36 = scmp.ge.s32.totalorder %s35, 2
      %s37 = scalar_select %p36, 0, %s35
      %s38 = ssub.s32 %s25, %s37
      %s39 = ssub.s32 %s26, %s33
      %s40 = sor.u32 %s38, %s39
      %p41 = scmp.eq.s32.totalorder %s40, 0
      %s43 = sadd.s32 %s42, 1
      %s44 = scalar_select %p41, %s42, %s43
      %p47 = pneg %p41
      %p48 = scmp.eq.s32.totalorder %s18, 3
      %p49 = por %p47, %p48
      %p50 = scmp.ne.s32.totalorder %s42, %s45
      %p51 = scmp.eq.s32.totalorder %s18, 0
      %p52 = por %p50, %p51
      %p53 = scmp.ne.s32.totalorder %s42, %s45
      %p54 = scmp.eq.s32.totalorder %s23, 3
      %p55 = por %p53, %p54
      %p56 = scmp.ne.s32.totalorder %s45, %s46
      %p57 = scmp.eq.s32.totalorder %s23, 0
      %p58 = por %p56, %p57
      %p59 = scmp.ne.s32.totalorder %s45, %s46
      %p60 = scmp.eq.s32.totalorder %s24, 3
      %p61 = por %p59, %p60
      %p63 = scmp.ne.s32.totalorder %s46, %s62
      %p64 = scmp.eq.s32.totalorder %s24, 0
      %p65 = por %p63, %p64
      %s66 = ssub.s32 %s25, %s37
      %p67 = scmp.eq.s32.totalorder %s66, 0
      %s69 = sadd.s32 %s68, 1
      %s70 = scalar_select %p67, %s68, %s69
      %p73 = pneg %p67
      %p74 = scmp.eq.s32.totalorder %s18, 3
      %p75 = por %p73, %p74
      %p76 = scmp.ne.s32.totalorder %s68, %s71
      %p77 = scmp.eq.s32.totalorder %s18, 0
      %p78 = por %p76, %p77
      %p79 = scmp.ne.s32.totalorder %s68, %s71
      %p80 = scmp.eq.s32.totalorder %s23, 3
      %p81 = por %p79, %p80
      %p82 = scmp.ne.s32.totalorder %s71, %s72
      %p83 = scmp.eq.s32.totalorder %s23, 0
      %p84 = por %p82, %p83
      %p85 = scmp.ne.s32.totalorder %s71, %s72
      %p86 = scmp.eq.s32.totalorder %s24, 3
      %p87 = por %p85, %p86
      %p89 = scmp.ne.s32.totalorder %s72, %s88
      %p90 = scmp.eq.s32.totalorder %s24, 0
      %p91 = por %p89, %p90
      %s92 = ssub.s32 %s25, %s37
      %p93 = scmp.eq.s32.totalorder %s92, 0
      %s95 = sadd.s32 %s94, 1
      %s96 = scalar_select %p93, %s94, %s95
      %p99 = pneg %p93
      %p100 = scmp.eq.s32.totalorder %s18, 3
      %p101 = por %p99, %p100
      %p102 = scmp.ne.s32.totalorder %s94, %s97
      %p103 = scmp.eq.s32.totalorder %s18, 0
      %p104 = por %p102, %p103
      %p105 = scmp.ne.s32.totalorder %s94, %s97
      %p106 = scmp.eq.s32.totalorder %s23, 3
      %p107 = por %p105, %p106
      %p108 = scmp.ne.s32.totalorder %s97, %s98
      %p109 = scmp.eq.s32.totalorder %s23, 0
      %p110 = por %p108, %p109
      %p111 = scmp.ne.s32.totalorder %s97, %s98
      %p112 = scmp.eq.s32.totalorder %s24, 3
      %p113 = por %p111, %p112
      %p115 = scmp.ne.s32.totalorder %s98, %s114
      %p116 = scmp.eq.s32.totalorder %s24, 0
      %p117 = por %p115, %p116
      %s118 = ssub.s32 %s25, %s37
      %s119 = ssub.s32 %s26, %s33
      %s120 = sor.u32 %s118, %s119
      %p121 = scmp.eq.s32.totalorder %s120, 0
      %s123 = sadd.s32 %s122, 1
      %s124 = scalar_select %p121, %s122, %s123
      %p127 = pneg %p121
      %p128 = scmp.eq.s32.totalorder %s18, 3
      %p129 = por %p127, %p128
      %p130 = scmp.ne.s32.totalorder %s122, %s125
      %p131 = scmp.eq.s32.totalorder %s18, 0
      %p132 = por %p130, %p131
      %p133 = scmp.ne.s32.totalorder %s122, %s125
      %p134 = scmp.eq.s32.totalorder %s23, 3
      %p135 = por %p133, %p134
      %p136 = scmp.ne.s32.totalorder %s125, %s126
      %p137 = scmp.eq.s32.totalorder %s23, 0
      %p138 = por %p136, %p137
      %p139 = scmp.ne.s32.totalorder %s125, %s126
      %p140 = scmp.eq.s32.totalorder %s24, 3
      %p141 = por %p139, %p140
      %p143 = scmp.ne.s32.totalorder %s126, %s142
      %p144 = scmp.eq.s32.totalorder %s24, 0
      %p145 = por %p143, %p144
      %p146 = scmp.le.s32.totalorder 1, %s18
      %p147 = scmp.lt.s32.totalorder %s18, 5
      %p148 = pnand %p146, %p147
      %p149 = pneg %p148
      // Predicated region
      $region9: #{tpu_custom_call.1} parent=5 // pred_check
        _
      $region10: #{tpu_custom_call.1} parent=5 // pred_check_branch
        %151 = sbr.rel (%p148) target = $region12
      $region11: #{tpu_custom_call.1} parent=5 // pred_region
        %s152 = ssub.s32 %s18, 1
      $region12: #{tpu_custom_call.1} parent=5 // pred_fallthru
        _
      %p153 = scmp.lt.s32.totalorder %s18, 4
      // Predicated region
      $region13: #{tpu_custom_call.1} parent=5 // pred_check
        %p154 = pneg %p153
      $region14: #{tpu_custom_call.1} parent=5 // pred_check_branch
        %156 = sbr.rel (%p154) target = $region16
      $region15: #{tpu_custom_call.1} parent=5 // pred_region
        // Predicated region
        $region17: #{tpu_custom_call.1} parent=15 // pred_check
          %p157 = pneg %p52
        $region18: #{tpu_custom_call.1} parent=15 // pred_check_branch
          %159 = sbr.rel (%p157) target = $region20
        $region19: #{tpu_custom_call.1} parent=15 // pred_region
          #allocation10 [shape = 'u32[6]{0}', space=smem, size = 0x18, scoped, tag = 'DMA stride descriptor']
          %s160 = sand.u32 %s42, 1
          %s161 = scalar_lea.sflag [#allocation4], %s160
          %s162 = sand.u32 %s42, 1
          %s163 = smul.addr %s162, 96
          %s164 = scalar_lea.vmem [#allocation3], %s163
          %s165 = smul.u32 3, %s25
          %s166 = smul.u32 8, %s26
          %s168 = ssub.s32 1536, 1536
          %169 = vsyncadd %s161, %s168
          %s170 = smul.addr %s165, 16
          %s171 = sadd.s32 %s166, %s170
          %s172 = smul.addr %s171, 64
          %s173 = scalar_lea.hbm %s0, %s172
          %s175 = sshll.u32 1, 14
          %s176 = sxor.u32 4294967295, %s175
          %s178 = sld [smem:[#allocation0]]
          %s179 = sadd.s32 2, %s178
          %s181 = sshll.u32 7, 26
          %s182 = sxor.u32 4294967295, %s181
          %s183 = sand.u32 0, %s182
          %s184 = sshll.u32 %s179, 26
          %s185 = sor.u32 %s183, %s184
          %s186 = sshll.u32 %s164, 4
          %s187 = int_to_ptr.vmem [resolvable:$true] %s186
          %193 = sst [smem:[#allocation10]] 1024
          %s194 = scalar_lea.smem [#allocation10], 1
          %195 = sst [smem:[%s194]] 512
          %s196 = scalar_lea.smem [#allocation10], 2
          %197 = sst [smem:[%s196]] 8
          %s198 = scalar_lea.smem [#allocation10], 3
          %199 = sst [smem:[%s198]] 64
          %s200 = scalar_lea.smem [#allocation10], 4
          %201 = sst [smem:[%s200]] 64
          %s202 = scalar_lea.smem [#allocation10], 5
          %203 = sst [smem:[%s202]] 4
          %205 = dma.general %s173, 1536, %s187, %s161, 131072, [#allocation10], %s185, 0
        $region20: #{tpu_custom_call.1} parent=15 // pred_fallthru
          _
        // Predicated region
        $region21: #{tpu_custom_call.1} parent=15 // pred_check
          %p206 = pneg %p78
        $region22: #{tpu_custom_call.1} parent=15 // pred_check_branch
          %208 = sbr.rel (%p206) target = $region24
        $region23: #{tpu_custom_call.1} parent=15 // pred_region
          %s209 = sand.u32 %s68, 1
          %s210 = scalar_lea.sflag [#allocation7], %s209
          %s211 = sand.u32 %s68, 1
          %s212 = smul.addr %s211, 192
          %s213 = scalar_lea.vmem [#allocation6], %s212
          %s214 = smul.u32 3, %s25
          %s216 = ssub.s32 3072, 3072
          %217 = vsyncadd %s210, %s216
          %s218 = smul.addr %s214, 16
          %s219 = smul.addr %s218, 64
          %s220 = scalar_lea.hbm %s1, %s219
          %s221 = sshll.u32 %s213, 4
          %s222 = int_to_ptr.vmem [resolvable:$true] %s221
          %227 = dma.hbm_to_vmem [thread:$0]  %s220, 3072, %s222, %s210, 64, 64, 4
        $region24: #{tpu_custom_call.1} parent=15 // pred_fallthru
          _
        // Predicated region
        $region25: #{tpu_custom_call.1} parent=15 // pred_check
          %p228 = pneg %p104
        $region26: #{tpu_custom_call.1} parent=15 // pred_check_branch
          %230 = sbr.rel (%p228) target = $region28
        $region27: #{tpu_custom_call.1} parent=15 // pred_region
          %p231 = scmp.lt.s32.totalorder %s25, 1
          %s232 = scalar_select %p231, %s25, 1
          %s233 = scalar_lea.vmem %s2, %s232
        $region28: #{tpu_custom_call.1} parent=15 // pred_fallthru
          _
      $region16: #{tpu_custom_call.1} parent=5 // pred_fallthru
        _
      %p234 = scmp.le.s32.totalorder 1, %s18
      %p235 = scmp.lt.s32.totalorder %s18, 5
      %p236 = pnand %p234, %p235
      %p237 = pneg %p236
      // Predicated region
      $region29: #{tpu_custom_call.1} parent=5 // pred_check
        _
      $region30: #{tpu_custom_call.1} parent=5 // pred_check_branch
        %239 = sbr.rel (%p236) target = $region32
      $region31: #{tpu_custom_call.1} parent=5 // pred_region
        %s240 = ssub.s32 %s18, 1
        %s241 = sand.u32 %s45, 1
        %s242 = scalar_lea.sflag [#allocation4], %s241
        %s243 = sand.u32 %s45, 1
        %s244 = smul.addr %s243, 96
        %s245 = scalar_lea.vmem [#allocation3], %s244
        // Predicated region
        $region33: #{tpu_custom_call.1} parent=31 // pred_check
          %p246 = pneg %p58
        $region34: #{tpu_custom_call.1} parent=31 // pred_check_branch
          %248 = sbr.rel (%p246) target = $region36
        $region35: #{tpu_custom_call.1} parent=31 // pred_region
          %249 = dma.done %s242, 1536
        $region36: #{tpu_custom_call.1} parent=31 // pred_fallthru
          _
        %s250 = sand.u32 %s71, 1
        %s251 = scalar_lea.sflag [#allocation7], %s250
        %s252 = sand.u32 %s71, 1
        %s253 = smul.addr %s252, 192
        %s254 = scalar_lea.vmem [#allocation6], %s253
        // Predicated region
        $region37: #{tpu_custom_call.1} parent=31 // pred_check
          %p255 = pneg %p84
        $region38: #{tpu_custom_call.1} parent=31 // pred_check_branch
          %257 = sbr.rel (%p255) target = $region40
        $region39: #{tpu_custom_call.1} parent=31 // pred_region
          %258 = dma.done %s251, 3072
        $region40: #{tpu_custom_call.1} parent=31 // pred_fallthru
          _
        %s259 = sand.u32 %s45, 1
        %s260 = scalar_lea.sflag [#allocation4], %s259
        %s261 = sand.u32 %s45, 1
        %s262 = smul.addr %s261, 96
        %s263 = scalar_lea.vmem [#allocation3], %s262
        %p264 = pneg %p58
        %p265 = pneg %p55
        %s266 = sand.u32 %s71, 1
        %s267 = scalar_lea.sflag [#allocation7], %s266
        %s268 = sand.u32 %s71, 1
        %s269 = smul.addr %s268, 192
        %s270 = scalar_lea.vmem [#allocation6], %s269
        %p271 = pneg %p84
        %p272 = pneg %p81
        %p273 = scmp.lt.s32.totalorder %s27, 1
        %s274 = scalar_select %p273, %s27, 1
        %s275 = scalar_lea.vmem %s2, %s274
        %p276 = pneg %p110
        %p277 = pneg %p107
        %p278 = pneg %p138
        %p279 = pneg %p135
        %s280 = sand.u32 %s125, 1
        %s281 = scalar_lea.sflag [#allocation5], %s280
        %s282 = sand.u32 %s125, 1
        %s283 = smul.addr %s282, 64
        %s284 = scalar_lea.vmem [#allocation8], %s283
        %s285 = smul.u32 3, %s27
        %s286 = smul.u32 8, %s28
        %s287 = smul.u32 3, %s27
        %p288 = scmp.lt.s32.totalorder %s27, 1
        %s289 = scalar_select %p288, %s27, 1
        %s290 = scalar_lea.vmem %s2, %s289
        %s291 = smul.u32 8, %s28
        %p293 = scmp.eq.s32.totalorder %s28, 0
        // Predicated region
        $region41: #{tpu_custom_call.1} parent=31 // pred_check
          %p294 = pneg %p293
        $region42: #{tpu_custom_call.1} parent=31 // pred_check_branch
          %296 = sbr.rel (%p294) target = $region44
        $region43: #{tpu_custom_call.1} parent=31 // pred_region
          %297 = vst [vmem:[#allocation2] sm:$0xff] 0.0
        $region44: #{tpu_custom_call.1} parent=31 // pred_fallthru
          _
        %v298 = vld [vmem:[#allocation2] sm:$0xff]
        %v299 = vld [vmem:[%s290] sm:$0x1]
        %v300 = vpack.c.bf16 %v298, %v298
        %v301 = vld [vmem:[%s254] sm:$0xf]
        %v302 = vld [vmem:[%s254 + $0x4] sm:$0xf]
        %v303 = vld [vmem:[%s254 + $0x8] sm:$0xf]
        %v304 = vld [vmem:[%s254 + $0xc] sm:$0xf]
        %v305 = vld [vmem:[%s254 + $0x10] sm:$0xf]
        %v306 = vld [vmem:[%s254 + $0x14] sm:$0xf]
        %v307 = vld [vmem:[%s254 + $0x18] sm:$0xf]
        %v308 = vld [vmem:[%s254 + $0x1c] sm:$0xf]
        %v309 = vld [vmem:[%s254 + $0x20] sm:$0xf]
        %v310 = vld [vmem:[%s254 + $0x24] sm:$0xf]
        %v311 = vld [vmem:[%s254 + $0x28] sm:$0xf]
        %v312 = vld [vmem:[%s254 + $0x2c] sm:$0xf]
        %v313 = vld [vmem:[%s254 + $0x30] sm:$0xf]
        %v314 = vld [vmem:[%s254 + $0x34] sm:$0xf]
        %v315 = vld [vmem:[%s254 + $0x38] sm:$0xf]
        %v316 = vld [vmem:[%s254 + $0x3c] sm:$0xf]
        %v333 = vunpack.c.l.b16 %v301
        %v334 = vunpack.c.l.b16 %v302
        %v335 = vunpack.c.l.b16 %v303
        %v336 = vunpack.c.l.b16 %v304
        %v337 = vunpack.c.l.b16 %v305
        %v338 = vunpack.c.l.b16 %v306
        %v339 = vunpack.c.l.b16 %v307
        %v340 = vunpack.c.l.b16 %v308
        %v341 = vunpack.c.l.b16 %v309
        %v342 = vunpack.c.l.b16 %v310
        %v343 = vunpack.c.l.b16 %v311
        %v344 = vunpack.c.l.b16 %v312
        %v345 = vunpack.c.l.b16 %v313
        %v346 = vunpack.c.l.b16 %v314
        %v347 = vunpack.c.l.b16 %v315
        %v348 = vunpack.c.l.b16 %v316
        %v349 = vpack.c.b16 %v334, %v333
        %v350 = vpack.c.b16 %v336, %v335
        %v351 = vpack.c.b16 %v338, %v337
        %v352 = vpack.c.b16 %v340, %v339
        %v353 = vpack.c.b16 %v342, %v341
        %v354 = vpack.c.b16 %v344, %v343
        %v355 = vpack.c.b16 %v346, %v345
        %v356 = vpack.c.b16 %v348, %v347
        %365 = vmatprep.subr.bf16.mxu0 0
        %366 = vmatpush1.bf16.msra.mxu0 %v356
        %367 = vmatprep.subr.bf16.mxu0 0
        %368 = vmatpush1.bf16.msra.mxu0 %v355
        %369 = vmatprep.subr.bf16.mxu0 0
        %370 = vmatpush1.bf16.msra.mxu0 %v354
        %371 = vmatprep.subr.bf16.mxu0 0
        %372 = vmatpush1.bf16.msra.mxu0 %v353
        %373 = vmatprep.subr.bf16.mxu0 0
        %374 = vmatpush1.bf16.msra.mxu0 %v352
        %375 = vmatprep.subr.bf16.mxu0 0
        %376 = vmatpush1.bf16.msra.mxu0 %v351
        %377 = vmatprep.subr.bf16.mxu0 0
        %378 = vmatpush1.bf16.msra.mxu0 %v350
        %379 = vmatprep.subr.bf16.mxu0 0
        %380 = vmatpush1.bf16.msra.mxu0 %v349
        %381 = vmatprep.subr.bf16.mxu0 0
        %382 = vmatpush2.bf16.msra.mxu0 0
        %383 = vmatprep.subr.bf16.mxu0 0
        %384 = vmatpush2.bf16.msra.mxu0 0
        %385 = vmatprep.subr.bf16.mxu0 0
        %386 = vmatpush2.bf16.msra.mxu0 0
        %387 = vmatprep.subr.bf16.mxu0 0
        %388 = vmatpush2.bf16.msra.mxu0 0
        %389 = vmatprep.subr.bf16.mxu0 0
        %390 = vmatpush2.bf16.msra.mxu0 0
        %391 = vmatprep.subr.bf16.mxu0 0
        %392 = vmatpush2.bf16.msra.mxu0 0
        %393 = vmatprep.subr.bf16.mxu0 0
        %394 = vmatpush2.bf16.msra.mxu0 0
        %395 = vmatprep.subr.bf16.mxu0 0
        %396 = vmatpush2.bf16.msra.mxu0 0
        %397 = vmatprep.mubr.bf16.mxu0 0
        %398 = vmatmul.mubr.bf16.gmra.mxu0 %v300
        %v399 = vpop.f32.mrf.mxu0
        %v400 = vadd.f32 0.0, %v399
        %v401 = vpop.f32.mrf.mxu0
        %v402 = vpop.f32.mrf.mxu0
        %v403 = vpop.f32.mrf.mxu0
        %404 = vdwg.mxu0
        %s405 = scalar_lea.vmem %s254, 64 [#allocation6]
        %v406 = vld [vmem:[%s405] sm:$0xf]
        %v407 = vld [vmem:[%s405 + $0x4] sm:$0xf]
        %v408 = vld [vmem:[%s405 + $0x8] sm:$0xf]
        %v409 = vld [vmem:[%s405 + $0xc] sm:$0xf]
        %v410 = vld [vmem:[%s405 + $0x10] sm:$0xf]
        %v411 = vld [vmem:[%s405 + $0x14] sm:$0xf]
        %v412 = vld [vmem:[%s405 + $0x18] sm:$0xf]
        %v413 = vld [vmem:[%s405 + $0x1c] sm:$0xf]
        %v414 = vld [vmem:[%s405 + $0x20] sm:$0xf]
        %v415 = vld [vmem:[%s405 + $0x24] sm:$0xf]
        %v416 = vld [vmem:[%s405 + $0x28] sm:$0xf]
        %v417 = vld [vmem:[%s405 + $0x2c] sm:$0xf]
        %v418 = vld [vmem:[%s405 + $0x30] sm:$0xf]
        %v419 = vld [vmem:[%s405 + $0x34] sm:$0xf]
        %v420 = vld [vmem:[%s405 + $0x38] sm:$0xf]
        %v421 = vld [vmem:[%s405 + $0x3c] sm:$0xf]
        %v438 = vunpack.c.l.b16 %v406
        %v439 = vunpack.c.l.b16 %v407
        %v440 = vunpack.c.l.b16 %v408
        %v441 = vunpack.c.l.b16 %v409
        %v442 = vunpack.c.l.b16 %v410
        %v443 = vunpack.c.l.b16 %v411
        %v444 = vunpack.c.l.b16 %v412
        %v445 = vunpack.c.l.b16 %v413
        %v446 = vunpack.c.l.b16 %v414
        %v447 = vunpack.c.l.b16 %v415
        %v448 = vunpack.c.l.b16 %v416
        %v449 = vunpack.c.l.b16 %v417
        %v450 = vunpack.c.l.b16 %v418
        %v451 = vunpack.c.l.b16 %v419
        %v452 = vunpack.c.l.b16 %v420
        %v453 = vunpack.c.l.b16 %v421
        %v454 = vpack.c.b16 %v439, %v438
        %v455 = vpack.c.b16 %v441, %v440
        %v456 = vpack.c.b16 %v443, %v442
        %v457 = vpack.c.b16 %v445, %v444
        %v458 = vpack.c.b16 %v447, %v446
        %v459 = vpack.c.b16 %v449, %v448
        %v460 = vpack.c.b16 %v451, %v450
        %v461 = vpack.c.b16 %v453, %v452
        %470 = vmatprep.subr.bf16.mxu0 0
        %471 = vmatpush1.bf16.msra.mxu0 %v461
        %472 = vmatprep.subr.bf16.mxu0 0
        %473 = vmatpush1.bf16.msra.mxu0 %v460
        %474 = vmatprep.subr.bf16.mxu0 0
        %475 = vmatpush1.bf16.msra.mxu0 %v459
        %476 = vmatprep.subr.bf16.mxu0 0
        %477 = vmatpush1.bf16.msra.mxu0 %v458
        %478 = vmatprep.subr.bf16.mxu0 0
        %479 = vmatpush1.bf16.msra.mxu0 %v457
        %480 = vmatprep.subr.bf16.mxu0 0
        %481 = vmatpush1.bf16.msra.mxu0 %v456
        %482 = vmatprep.subr.bf16.mxu0 0
        %483 = vmatpush1.bf16.msra.mxu0 %v455
        %484 = vmatprep.subr.bf16.mxu0 0
        %485 = vmatpush1.bf16.msra.mxu0 %v454
        %486 = vmatprep.subr.bf16.mxu0 0
        %487 = vmatpush2.bf16.msra.mxu0 0
        %488 = vmatprep.subr.bf16.mxu0 0
        %489 = vmatpush2.bf16.msra.mxu0 0
        %490 = vmatprep.subr.bf16.mxu0 0
        %491 = vmatpush2.bf16.msra.mxu0 0
        %492 = vmatprep.subr.bf16.mxu0 0
        %493 = vmatpush2.bf16.msra.mxu0 0
        %494 = vmatprep.subr.bf16.mxu0 0
        %495 = vmatpush2.bf16.msra.mxu0 0
        %496 = vmatprep.subr.bf16.mxu0 0
        %497 = vmatpush2.bf16.msra.mxu0 0
        %498 = vmatprep.subr.bf16.mxu0 0
        %499 = vmatpush2.bf16.msra.mxu0 0
        %500 = vmatprep.subr.bf16.mxu0 0
        %501 = vmatpush2.bf16.msra.mxu0 0
        %502 = vmatprep.mubr.bf16.mxu0 0
        %503 = vmatmul.mubr.bf16.gmra.mxu0 %v300
        %v504 = vpop.f32.mrf.mxu0
        %v505 = vadd.f32 0.0, %v504
        %v506 = vpop.f32.mrf.mxu0
        %v507 = vpop.f32.mrf.mxu0
        %v508 = vpop.f32.mrf.mxu0
        %509 = vdwg.mxu0
        %s510 = scalar_lea.vmem %s254, 128 [#allocation6]
        %v511 = vld [vmem:[%s510] sm:$0xf]
        %v512 = vld [vmem:[%s510 + $0x4] sm:$0xf]
        %v513 = vld [vmem:[%s510 + $0x8] sm:$0xf]
        %v514 = vld [vmem:[%s510 + $0xc] sm:$0xf]
        %v515 = vld [vmem:[%s510 + $0x10] sm:$0xf]
        %v516 = vld [vmem:[%s510 + $0x14] sm:$0xf]
        %v517 = vld [vmem:[%s510 + $0x18] sm:$0xf]
        %v518 = vld [vmem:[%s510 + $0x1c] sm:$0xf]
        %v519 = vld [vmem:[%s510 + $0x20] sm:$0xf]
        %v520 = vld [vmem:[%s510 + $0x24] sm:$0xf]
        %v521 = vld [vmem:[%s510 + $0x28] sm:$0xf]
        %v522 = vld [vmem:[%s510 + $0x2c] sm:$0xf]
        %v523 = vld [vmem:[%s510 + $0x30] sm:$0xf]
        %v524 = vld [vmem:[%s510 + $0x34] sm:$0xf]
        %v525 = vld [vmem:[%s510 + $0x38] sm:$0xf]
        %v526 = vld [vmem:[%s510 + $0x3c] sm:$0xf]
        %v528 = vlaneseq
        %v529 = vshrl.u32 %v528, 7
        %v530 = vsub.s32 0, %v529
        %v531 = vrot.slane %v299, %v530
        %v549 = vunpack.c.l.b16 %v511
        %v550 = vunpack.c.l.b16 %v512
        %v551 = vunpack.c.l.b16 %v513
        %v552 = vunpack.c.l.b16 %v514
        %v553 = vunpack.c.l.b16 %v515
        %v554 = vunpack.c.l.b16 %v516
        %v555 = vunpack.c.l.b16 %v517
        %v556 = vunpack.c.l.b16 %v518
        %v557 = vunpack.c.l.b16 %v519
        %v558 = vunpack.c.l.b16 %v520
        %v559 = vunpack.c.l.b16 %v521
        %v560 = vunpack.c.l.b16 %v522
        %v561 = vunpack.c.l.b16 %v523
        %v562 = vunpack.c.l.b16 %v524
        %v563 = vunpack.c.l.b16 %v525
        %v564 = vunpack.c.l.b16 %v526
        %v565 = vpack.c.b16 %v550, %v549
        %v566 = vpack.c.b16 %v552, %v551
        %v567 = vpack.c.b16 %v554, %v553
        %v568 = vpack.c.b16 %v556, %v555
        %v569 = vpack.c.b16 %v558, %v557
        %v570 = vpack.c.b16 %v560, %v559
        %v571 = vpack.c.b16 %v562, %v561
        %v572 = vpack.c.b16 %v564, %v563
        %581 = vmatprep.subr.bf16.mxu0 0
        %582 = vmatpush1.bf16.msra.mxu0 %v572
        %583 = vmatprep.subr.bf16.mxu0 0
        %584 = vmatpush1.bf16.msra.mxu0 %v571
        %585 = vmatprep.subr.bf16.mxu0 0
        %586 = vmatpush1.bf16.msra.mxu0 %v570
        %587 = vmatprep.subr.bf16.mxu0 0
        %588 = vmatpush1.bf16.msra.mxu0 %v569
        %589 = vmatprep.subr.bf16.mxu0 0
        %590 = vmatpush1.bf16.msra.mxu0 %v568
        %591 = vmatprep.subr.bf16.mxu0 0
        %592 = vmatpush1.bf16.msra.mxu0 %v567
        %593 = vmatprep.subr.bf16.mxu0 0
        %594 = vmatpush1.bf16.msra.mxu0 %v566
        %595 = vmatprep.subr.bf16.mxu0 0
        %596 = vmatpush1.bf16.msra.mxu0 %v565
        %597 = vmatprep.subr.bf16.mxu0 0
        %598 = vmatpush2.bf16.msra.mxu0 0
        %599 = vmatprep.subr.bf16.mxu0 0
        %600 = vmatpush2.bf16.msra.mxu0 0
        %601 = vmatprep.subr.bf16.mxu0 0
        %602 = vmatpush2.bf16.msra.mxu0 0
        %603 = vmatprep.subr.bf16.mxu0 0
        %604 = vmatpush2.bf16.msra.mxu0 0
        %605 = vmatprep.subr.bf16.mxu0 0
        %606 = vmatpush2.bf16.msra.mxu0 0
        %607 = vmatprep.subr.bf16.mxu0 0
        %608 = vmatpush2.bf16.msra.mxu0 0
        %609 = vmatprep.subr.bf16.mxu0 0
        %610 = vmatpush2.bf16.msra.mxu0 0
        %611 = vmatprep.subr.bf16.mxu0 0
        %612 = vmatpush2.bf16.msra.mxu0 0
        %613 = vmatprep.mubr.bf16.mxu0 0
        %614 = vmatmul.mubr.bf16.gmra.mxu0 %v300
        %v615 = vpop.f32.mrf.mxu0
        %v616 = vadd.f32 %v531, %v615
        %v617 = vpop.f32.mrf.mxu0
        %v618 = vpop.f32.mrf.mxu0
        %v619 = vpop.f32.mrf.mxu0
        %620 = vdwg.mxu0
        %v621 = vld [vmem:[%s245] sm:$0xf]
        %v622 = vunpack.c.l.bf16 %v621
        %v623 = vadd.f32 %v622, %v400
        %v624 = vxor.u32 %v623, 2147483648
        %v625 = vmul.f32 %v624, 1.442695
        %v626 = vpow.pop %v625
        %v627 = vadd.f32 %v626, 1.0
        %v628 = vrcp.pop %v627
        %v629 = vmul.f32 1.0, %v628
        %s630 = scalar_lea.vmem %s245, 32 [#allocation3]
        %v631 = vld [vmem:[%s630] sm:$0xf]
        %v632 = vunpack.c.l.bf16 %v631
        %v633 = vadd.f32 %v632, %v505
        %v634 = vxor.u32 %v633, 2147483648
        %v635 = vmul.f32 %v634, 1.442695
        %v636 = vpow.pop %v635
        %v637 = vadd.f32 %v636, 1.0
        %v638 = vrcp.pop %v637
        %v639 = vmul.f32 1.0, %v638
        %s640 = scalar_lea.vmem %s245, 64 [#allocation3]
        %v641 = vld [vmem:[%s640] sm:$0xf]
        %v642 = vunpack.c.l.bf16 %v641
        %v643 = vmul.f32 %v629, %v616
        %v644 = vadd.f32 %v642, %v643
        %v645 = vtanh.pop %v644
        %v646 = vsub.f32 1.0, %v639
        %v647 = vmul.f32 %v646, %v645
        %v648 = vmul.f32 %v639, %v298
        %v649 = vadd.f32 %v647, %v648
        %650 = vst [vmem:[%s284] sm:$0xff] %v649
        %v651 = vpack.c.bf16 %v649, %v649
        %v652 = vld [vmem:[%s254] sm:$0xf]
        %v653 = vld [vmem:[%s254 + $0x4] sm:$0xf]
        %v654 = vld [vmem:[%s254 + $0x8] sm:$0xf]
        %v655 = vld [vmem:[%s254 + $0xc] sm:$0xf]
        %v656 = vld [vmem:[%s254 + $0x10] sm:$0xf]
        %v657 = vld [vmem:[%s254 + $0x14] sm:$0xf]
        %v658 = vld [vmem:[%s254 + $0x18] sm:$0xf]
        %v659 = vld [vmem:[%s254 + $0x1c] sm:$0xf]
        %v660 = vld [vmem:[%s254 + $0x20] sm:$0xf]
        %v661 = vld [vmem:[%s254 + $0x24] sm:$0xf]
        %v662 = vld [vmem:[%s254 + $0x28] sm:$0xf]
        %v663 = vld [vmem:[%s254 + $0x2c] sm:$0xf]
        %v664 = vld [vmem:[%s254 + $0x30] sm:$0xf]
        %v665 = vld [vmem:[%s254 + $0x34] sm:$0xf]
        %v666 = vld [vmem:[%s254 + $0x38] sm:$0xf]
        %v667 = vld [vmem:[%s254 + $0x3c] sm:$0xf]
        %v684 = vunpack.c.l.b16 %v652
        %v685 = vunpack.c.l.b16 %v653
        %v686 = vunpack.c.l.b16 %v654
        %v687 = vunpack.c.l.b16 %v655
        %v688 = vunpack.c.l.b16 %v656
        %v689 = vunpack.c.l.b16 %v657
        %v690 = vunpack.c.l.b16 %v658
        %v691 = vunpack.c.l.b16 %v659
        %v692 = vunpack.c.l.b16 %v660
        %v693 = vunpack.c.l.b16 %v661
        %v694 = vunpack.c.l.b16 %v662
        %v695 = vunpack.c.l.b16 %v663
        %v696 = vunpack.c.l.b16 %v664
        %v697 = vunpack.c.l.b16 %v665
        %v698 = vunpack.c.l.b16 %v666
        %v699 = vunpack.c.l.b16 %v667
        %v700 = vpack.c.b16 %v685, %v684
        %v701 = vpack.c.b16 %v687, %v686
        %v702 = vpack.c.b16 %v689, %v688
        %v703 = vpack.c.b16 %v691, %v690
        %v704 = vpack.c.b16 %v693, %v692
        %v705 = vpack.c.b16 %v695, %v694
        %v706 = vpack.c.b16 %v697, %v696
        %v707 = vpack.c.b16 %v699, %v698
        %716 = vmatprep.subr.bf16.mxu0 0
        %717 = vmatpush1.bf16.msra.mxu0 %v707
        %718 = vmatprep.subr.bf16.mxu0 0
        %719 = vmatpush1.bf16.msra.mxu0 %v706
        %720 = vmatprep.subr.bf16.mxu0 0
        %721 = vmatpush1.bf16.msra.mxu0 %v705
        %722 = vmatprep.subr.bf16.mxu0 0
        %723 = vmatpush1.bf16.msra.mxu0 %v704
        %724 = vmatprep.subr.bf16.mxu0 0
        %725 = vmatpush1.bf16.msra.mxu0 %v703
        %726 = vmatprep.subr.bf16.mxu0 0
        %727 = vmatpush1.bf16.msra.mxu0 %v702
        %728 = vmatprep.subr.bf16.mxu0 0
        %729 = vmatpush1.bf16.msra.mxu0 %v701
        %730 = vmatprep.subr.bf16.mxu0 0
        %731 = vmatpush1.bf16.msra.mxu0 %v700
        %732 = vmatprep.subr.bf16.mxu0 0
        %733 = vmatpush2.bf16.msra.mxu0 0
        %734 = vmatprep.subr.bf16.mxu0 0
        %735 = vmatpush2.bf16.msra.mxu0 0
        %736 = vmatprep.subr.bf16.mxu0 0
        %737 = vmatpush2.bf16.msra.mxu0 0
        %738 = vmatprep.subr.bf16.mxu0 0
        %739 = vmatpush2.bf16.msra.mxu0 0
        %740 = vmatprep.subr.bf16.mxu0 0
        %741 = vmatpush2.bf16.msra.mxu0 0
        %742 = vmatprep.subr.bf16.mxu0 0
        %743 = vmatpush2.bf16.msra.mxu0 0
        %744 = vmatprep.subr.bf16.mxu0 0
        %745 = vmatpush2.bf16.msra.mxu0 0
        %746 = vmatprep.subr.bf16.mxu0 0
        %747 = vmatpush2.bf16.msra.mxu0 0
        %748 = vmatprep.mubr.bf16.mxu0 0
        %749 = vmatmul.mubr.bf16.gmra.mxu0 %v651
        %v750 = vpop.f32.mrf.mxu0
        %v751 = vadd.f32 0.0, %v750
        %v752 = vpop.f32.mrf.mxu0
        %v753 = vpop.f32.mrf.mxu0
        %v754 = vpop.f32.mrf.mxu0
        %755 = vdwg.mxu0
        %v756 = vld [vmem:[%s405] sm:$0xf]
        %v757 = vld [vmem:[%s405 + $0x4] sm:$0xf]
        %v758 = vld [vmem:[%s405 + $0x8] sm:$0xf]
        %v759 = vld [vmem:[%s405 + $0xc] sm:$0xf]
        %v760 = vld [vmem:[%s405 + $0x10] sm:$0xf]
        %v761 = vld [vmem:[%s405 + $0x14] sm:$0xf]
        %v762 = vld [vmem:[%s405 + $0x18] sm:$0xf]
        %v763 = vld [vmem:[%s405 + $0x1c] sm:$0xf]
        %v764 = vld [vmem:[%s405 + $0x20] sm:$0xf]
        %v765 = vld [vmem:[%s405 + $0x24] sm:$0xf]
        %v766 = vld [vmem:[%s405 + $0x28] sm:$0xf]
        %v767 = vld [vmem:[%s405 + $0x2c] sm:$0xf]
        %v768 = vld [vmem:[%s405 + $0x30] sm:$0xf]
        %v769 = vld [vmem:[%s405 + $0x34] sm:$0xf]
        %v770 = vld [vmem:[%s405 + $0x38] sm:$0xf]
        %v771 = vld [vmem:[%s405 + $0x3c] sm:$0xf]
        %v788 = vunpack.c.l.b16 %v756
        %v789 = vunpack.c.l.b16 %v757
        %v790 = vunpack.c.l.b16 %v758
        %v791 = vunpack.c.l.b16 %v759
        %v792 = vunpack.c.l.b16 %v760
        %v793 = vunpack.c.l.b16 %v761
        %v794 = vunpack.c.l.b16 %v762
        %v795 = vunpack.c.l.b16 %v763
        %v796 = vunpack.c.l.b16 %v764
        %v797 = vunpack.c.l.b16 %v765
        %v798 = vunpack.c.l.b16 %v766
        %v799 = vunpack.c.l.b16 %v767
        %v800 = vunpack.c.l.b16 %v768
        %v801 = vunpack.c.l.b16 %v769
        %v802 = vunpack.c.l.b16 %v770
        %v803 = vunpack.c.l.b16 %v771
        %v804 = vpack.c.b16 %v789, %v788
        %v805 = vpack.c.b16 %v791, %v790
        %v806 = vpack.c.b16 %v793, %v792
        %v807 = vpack.c.b16 %v795, %v794
        %v808 = vpack.c.b16 %v797, %v796
        %v809 = vpack.c.b16 %v799, %v798
        %v810 = vpack.c.b16 %v801, %v800
        %v811 = vpack.c.b16 %v803, %v802
        %820 = vmatprep.subr.bf16.mxu0 0
        %821 = vmatpush1.bf16.msra.mxu0 %v811
        %822 = vmatprep.subr.bf16.mxu0 0
        %823 = vmatpush1.bf16.msra.mxu0 %v810
        %824 = vmatprep.subr.bf16.mxu0 0
        %825 = vmatpush1.bf16.msra.mxu0 %v809
        %826 = vmatprep.subr.bf16.mxu0 0
        %827 = vmatpush1.bf16.msra.mxu0 %v808
        %828 = vmatprep.subr.bf16.mxu0 0
        %829 = vmatpush1.bf16.msra.mxu0 %v807
        %830 = vmatprep.subr.bf16.mxu0 0
        %831 = vmatpush1.bf16.msra.mxu0 %v806
        %832 = vmatprep.subr.bf16.mxu0 0
        %833 = vmatpush1.bf16.msra.mxu0 %v805
        %834 = vmatprep.subr.bf16.mxu0 0
        %835 = vmatpush1.bf16.msra.mxu0 %v804
        %836 = vmatprep.subr.bf16.mxu0 0
        %837 = vmatpush2.bf16.msra.mxu0 0
        %838 = vmatprep.subr.bf16.mxu0 0
        %839 = vmatpush2.bf16.msra.mxu0 0
        %840 = vmatprep.subr.bf16.mxu0 0
        %841 = vmatpush2.bf16.msra.mxu0 0
        %842 = vmatprep.subr.bf16.mxu0 0
        %843 = vmatpush2.bf16.msra.mxu0 0
        %844 = vmatprep.subr.bf16.mxu0 0
        %845 = vmatpush2.bf16.msra.mxu0 0
        %846 = vmatprep.subr.bf16.mxu0 0
        %847 = vmatpush2.bf16.msra.mxu0 0
        %848 = vmatprep.subr.bf16.mxu0 0
        %849 = vmatpush2.bf16.msra.mxu0 0
        %850 = vmatprep.subr.bf16.mxu0 0
        %851 = vmatpush2.bf16.msra.mxu0 0
        %852 = vmatprep.mubr.bf16.mxu0 0
        %853 = vmatmul.mubr.bf16.gmra.mxu0 %v651
        %v854 = vpop.f32.mrf.mxu0
        %v855 = vadd.f32 0.0, %v854
        %v856 = vpop.f32.mrf.mxu0
        %v857 = vpop.f32.mrf.mxu0
        %v858 = vpop.f32.mrf.mxu0
        %859 = vdwg.mxu0
        %v860 = vld [vmem:[%s510] sm:$0xf]
        %v861 = vld [vmem:[%s510 + $0x4] sm:$0xf]
        %v862 = vld [vmem:[%s510 + $0x8] sm:$0xf]
        %v863 = vld [vmem:[%s510 + $0xc] sm:$0xf]
        %v864 = vld [vmem:[%s510 + $0x10] sm:$0xf]
        %v865 = vld [vmem:[%s510 + $0x14] sm:$0xf]
        %v866 = vld [vmem:[%s510 + $0x18] sm:$0xf]
        %v867 = vld [vmem:[%s510 + $0x1c] sm:$0xf]
        %v868 = vld [vmem:[%s510 + $0x20] sm:$0xf]
        %v869 = vld [vmem:[%s510 + $0x24] sm:$0xf]
        %v870 = vld [vmem:[%s510 + $0x28] sm:$0xf]
        %v871 = vld [vmem:[%s510 + $0x2c] sm:$0xf]
        %v872 = vld [vmem:[%s510 + $0x30] sm:$0xf]
        %v873 = vld [vmem:[%s510 + $0x34] sm:$0xf]
        %v874 = vld [vmem:[%s510 + $0x38] sm:$0xf]
        %v875 = vld [vmem:[%s510 + $0x3c] sm:$0xf]
        %v892 = vunpack.c.l.b16 %v860
        %v893 = vunpack.c.l.b16 %v861
        %v894 = vunpack.c.l.b16 %v862
        %v895 = vunpack.c.l.b16 %v863
        %v896 = vunpack.c.l.b16 %v864
        %v897 = vunpack.c.l.b16 %v865
        %v898 = vunpack.c.l.b16 %v866
        %v899 = vunpack.c.l.b16 %v867
        %v900 = vunpack.c.l.b16 %v868
        %v901 = vunpack.c.l.b16 %v869
        %v902 = vunpack.c.l.b16 %v870
        %v903 = vunpack.c.l.b16 %v871
        %v904 = vunpack.c.l.b16 %v872
        %v905 = vunpack.c.l.b16 %v873
        %v906 = vunpack.c.l.b16 %v874
        %v907 = vunpack.c.l.b16 %v875
        %v908 = vpack.c.b16 %v893, %v892
        %v909 = vpack.c.b16 %v895, %v894
        %v910 = vpack.c.b16 %v897, %v896
        %v911 = vpack.c.b16 %v899, %v898
        %v912 = vpack.c.b16 %v901, %v900
        %v913 = vpack.c.b16 %v903, %v902
        %v914 = vpack.c.b16 %v905, %v904
        %v915 = vpack.c.b16 %v907, %v906
        %924 = vmatprep.subr.bf16.mxu0 0
        %925 = vmatpush1.bf16.msra.mxu0 %v915
        %926 = vmatprep.subr.bf16.mxu0 0
        %927 = vmatpush1.bf16.msra.mxu0 %v914
        %928 = vmatprep.subr.bf16.mxu0 0
        %929 = vmatpush1.bf16.msra.mxu0 %v913
        %930 = vmatprep.subr.bf16.mxu0 0
        %931 = vmatpush1.bf16.msra.mxu0 %v912
        %932 = vmatprep.subr.bf16.mxu0 0
        %933 = vmatpush1.bf16.msra.mxu0 %v911
        %934 = vmatprep.subr.bf16.mxu0 0
        %935 = vmatpush1.bf16.msra.mxu0 %v910
        %936 = vmatprep.subr.bf16.mxu0 0
        %937 = vmatpush1.bf16.msra.mxu0 %v909
        %938 = vmatprep.subr.bf16.mxu0 0
        %939 = vmatpush1.bf16.msra.mxu0 %v908
        %940 = vmatprep.subr.bf16.mxu0 0
        %941 = vmatpush2.bf16.msra.mxu0 0
        %942 = vmatprep.subr.bf16.mxu0 0
        %943 = vmatpush2.bf16.msra.mxu0 0
        %944 = vmatprep.subr.bf16.mxu0 0
        %945 = vmatpush2.bf16.msra.mxu0 0
        %946 = vmatprep.subr.bf16.mxu0 0
        %947 = vmatpush2.bf16.msra.mxu0 0
        %948 = vmatprep.subr.bf16.mxu0 0
        %949 = vmatpush2.bf16.msra.mxu0 0
        %950 = vmatprep.subr.bf16.mxu0 0
        %951 = vmatpush2.bf16.msra.mxu0 0
        %952 = vmatprep.subr.bf16.mxu0 0
        %953 = vmatpush2.bf16.msra.mxu0 0
        %954 = vmatprep.subr.bf16.mxu0 0
        %955 = vmatpush2.bf16.msra.mxu0 0
        %956 = vmatprep.mubr.bf16.mxu0 0
        %957 = vmatmul.mubr.bf16.gmra.mxu0 %v651
        %v958 = vpop.f32.mrf.mxu0
        %v959 = vadd.f32 %v531, %v958
        %v960 = vpop.f32.mrf.mxu0
        %v961 = vpop.f32.mrf.mxu0
        %v962 = vpop.f32.mrf.mxu0
        %963 = vdwg.mxu0
        %s964 = scalar_lea.vmem %s245, 4 [#allocation3]
        %v965 = vld [vmem:[%s964] sm:$0xf]
        %v966 = vunpack.c.l.bf16 %v965
        %v967 = vadd.f32 %v966, %v751
        %v968 = vxor.u32 %v967, 2147483648
        %v969 = vmul.f32 %v968, 1.442695
        %v970 = vpow.pop %v969
        %v971 = vadd.f32 %v970, 1.0
        %v972 = vrcp.pop %v971
        %v973 = vmul.f32 1.0, %v972
        %s974 = scalar_lea.vmem %s245, 36 [#allocation3]
        %v975 = vld [vmem:[%s974] sm:$0xf]
        %v976 = vunpack.c.l.bf16 %v975
        %v977 = vadd.f32 %v976, %v855
        %v978 = vxor.u32 %v977, 2147483648
        %v979 = vmul.f32 %v978, 1.442695
        %v980 = vpow.pop %v979
        %v981 = vadd.f32 %v980, 1.0
        %v982 = vrcp.pop %v981
        %v983 = vmul.f32 1.0, %v982
        %s984 = scalar_lea.vmem %s245, 68 [#allocation3]
        %v985 = vld [vmem:[%s984] sm:$0xf]
        %v986 = vunpack.c.l.bf16 %v985
        %v987 = vmul.f32 %v973, %v959
        %v988 = vadd.f32 %v986, %v987
        %v989 = vtanh.pop %v988
        %v990 = vsub.f32 1.0, %v983
        %v991 = vmul.f32 %v990, %v989
        %v992 = vmul.f32 %v983, %v649
        %v993 = vadd.f32 %v991, %v992
        %s994 = scalar_lea.vmem %s284, 8 [#allocation8]
        %995 = vst [vmem:[%s994] sm:$0xff] %v993
        %v996 = vpack.c.bf16 %v993, %v993
        %v997 = vld [vmem:[%s254] sm:$0xf]
        %v998 = vld [vmem:[%s254 + $0x4] sm:$0xf]
        %v999 = vld [vmem:[%s254 + $0x8] sm:$0xf]
        %v1000 = vld [vmem:[%s254 + $0xc] sm:$0xf]
        %v1001 = vld [vmem:[%s254 + $0x10] sm:$0xf]
        %v1002 = vld [vmem:[%s254 + $0x14] sm:$0xf]
        %v1003 = vld [vmem:[%s254 + $0x18] sm:$0xf]
        %v1004 = vld [vmem:[%s254 + $0x1c] sm:$0xf]
        %v1005 = vld [vmem:[%s254 + $0x20] sm:$0xf]
        %v1006 = vld [vmem:[%s254 + $0x24] sm:$0xf]
        %v1007 = vld [vmem:[%s254 + $0x28] sm:$0xf]
        %v1008 = vld [vmem:[%s254 + $0x2c] sm:$0xf]
        %v1009 = vld [vmem:[%s254 + $0x30] sm:$0xf]
        %v1010 = vld [vmem:[%s254 + $0x34] sm:$0xf]
        %v1011 = vld [vmem:[%s254 + $0x38] sm:$0xf]
        %v1012 = vld [vmem:[%s254 + $0x3c] sm:$0xf]
        %v1029 = vunpack.c.l.b16 %v997
        %v1030 = vunpack.c.l.b16 %v998
        %v1031 = vunpack.c.l.b16 %v999
        %v1032 = vunpack.c.l.b16 %v1000
        %v1033 = vunpack.c.l.b16 %v1001
        %v1034 = vunpack.c.l.b16 %v1002
        %v1035 = vunpack.c.l.b16 %v1003
        %v1036 = vunpack.c.l.b16 %v1004
        %v1037 = vunpack.c.l.b16 %v1005
        %v1038 = vunpack.c.l.b16 %v1006
        %v1039 = vunpack.c.l.b16 %v1007
        %v1040 = vunpack.c.l.b16 %v1008
        %v1041 = vunpack.c.l.b16 %v1009
        %v1042 = vunpack.c.l.b16 %v1010
        %v1043 = vunpack.c.l.b16 %v1011
        %v1044 = vunpack.c.l.b16 %v1012
        %v1045 = vpack.c.b16 %v1030, %v1029
        %v1046 = vpack.c.b16 %v1032, %v1031
        %v1047 = vpack.c.b16 %v1034, %v1033
        %v1048 = vpack.c.b16 %v1036, %v1035
        %v1049 = vpack.c.b16 %v1038, %v1037
        %v1050 = vpack.c.b16 %v1040, %v1039
        %v1051 = vpack.c.b16 %v1042, %v1041
        %v1052 = vpack.c.b16 %v1044, %v1043
        %1061 = vmatprep.subr.bf16.mxu0 0
        %1062 = vmatpush1.bf16.msra.mxu0 %v1052
        %1063 = vmatprep.subr.bf16.mxu0 0
        %1064 = vmatpush1.bf16.msra.mxu0 %v1051
        %1065 = vmatprep.subr.bf16.mxu0 0
        %1066 = vmatpush1.bf16.msra.mxu0 %v1050
        %1067 = vmatprep.subr.bf16.mxu0 0
        %1068 = vmatpush1.bf16.msra.mxu0 %v1049
        %1069 = vmatprep.subr.bf16.mxu0 0
        %1070 = vmatpush1.bf16.msra.mxu0 %v1048
        %1071 = vmatprep.subr.bf16.mxu0 0
        %1072 = vmatpush1.bf16.msra.mxu0 %v1047
        %1073 = vmatprep.subr.bf16.mxu0 0
        %1074 = vmatpush1.bf16.msra.mxu0 %v1046
        %1075 = vmatprep.subr.bf16.mxu0 0
        %1076 = vmatpush1.bf16.msra.mxu0 %v1045
        %1077 = vmatprep.subr.bf16.mxu0 0
        %1078 = vmatpush2.bf16.msra.mxu0 0
        %1079 = vmatprep.subr.bf16.mxu0 0
        %1080 = vmatpush2.bf16.msra.mxu0 0
        %1081 = vmatprep.subr.bf16.mxu0 0
        %1082 = vmatpush2.bf16.msra.mxu0 0
        %1083 = vmatprep.subr.bf16.mxu0 0
        %1084 = vmatpush2.bf16.msra.mxu0 0
        %1085 = vmatprep.subr.bf16.mxu0 0
        %1086 = vmatpush2.bf16.msra.mxu0 0
        %1087 = vmatprep.subr.bf16.mxu0 0
        %1088 = vmatpush2.bf16.msra.mxu0 0
        %1089 = vmatprep.subr.bf16.mxu0 0
        %1090 = vmatpush2.bf16.msra.mxu0 0
        %1091 = vmatprep.subr.bf16.mxu0 0
        %1092 = vmatpush2.bf16.msra.mxu0 0
        %1093 = vmatprep.mubr.bf16.mxu0 0
        %1094 = vmatmul.mubr.bf16.gmra.mxu0 %v996
        %v1095 = vpop.f32.mrf.mxu0
        %v1096 = vadd.f32 0.0, %v1095
        %v1097 = vpop.f32.mrf.mxu0
        %v1098 = vpop.f32.mrf.mxu0
        %v1099 = vpop.f32.mrf.mxu0
        %1100 = vdwg.mxu0
        %v1101 = vld [vmem:[%s405] sm:$0xf]
        %v1102 = vld [vmem:[%s405 + $0x4] sm:$0xf]
        %v1103 = vld [vmem:[%s405 + $0x8] sm:$0xf]
        %v1104 = vld [vmem:[%s405 + $0xc] sm:$0xf]
        %v1105 = vld [vmem:[%s405 + $0x10] sm:$0xf]
        %v1106 = vld [vmem:[%s405 + $0x14] sm:$0xf]
        %v1107 = vld [vmem:[%s405 + $0x18] sm:$0xf]
        %v1108 = vld [vmem:[%s405 + $0x1c] sm:$0xf]
        %v1109 = vld [vmem:[%s405 + $0x20] sm:$0xf]
        %v1110 = vld [vmem:[%s405 + $0x24] sm:$0xf]
        %v1111 = vld [vmem:[%s405 + $0x28] sm:$0xf]
        %v1112 = vld [vmem:[%s405 + $0x2c] sm:$0xf]
        %v1113 = vld [vmem:[%s405 + $0x30] sm:$0xf]
        %v1114 = vld [vmem:[%s405 + $0x34] sm:$0xf]
        %v1115 = vld [vmem:[%s405 + $0x38] sm:$0xf]
        %v1116 = vld [vmem:[%s405 + $0x3c] sm:$0xf]
        %v1133 = vunpack.c.l.b16 %v1101
        %v1134 = vunpack.c.l.b16 %v1102
        %v1135 = vunpack.c.l.b16 %v1103
        %v1136 = vunpack.c.l.b16 %v1104
        %v1137 = vunpack.c.l.b16 %v1105
        %v1138 = vunpack.c.l.b16 %v1106
        %v1139 = vunpack.c.l.b16 %v1107
        %v1140 = vunpack.c.l.b16 %v1108
        %v1141 = vunpack.c.l.b16 %v1109
        %v1142 = vunpack.c.l.b16 %v1110
        %v1143 = vunpack.c.l.b16 %v1111
        %v1144 = vunpack.c.l.b16 %v1112
        %v1145 = vunpack.c.l.b16 %v1113
        %v1146 = vunpack.c.l.b16 %v1114
        %v1147 = vunpack.c.l.b16 %v1115
        %v1148 = vunpack.c.l.b16 %v1116
        %v1149 = vpack.c.b16 %v1134, %v1133
        %v1150 = vpack.c.b16 %v1136, %v1135
        %v1151 = vpack.c.b16 %v1138, %v1137
        %v1152 = vpack.c.b16 %v1140, %v1139
        %v1153 = vpack.c.b16 %v1142, %v1141
        %v1154 = vpack.c.b16 %v1144, %v1143
        %v1155 = vpack.c.b16 %v1146, %v1145
        %v1156 = vpack.c.b16 %v1148, %v1147
        %1165 = vmatprep.subr.bf16.mxu0 0
        %1166 = vmatpush1.bf16.msra.mxu0 %v1156
        %1167 = vmatprep.subr.bf16.mxu0 0
        %1168 = vmatpush1.bf16.msra.mxu0 %v1155
        %1169 = vmatprep.subr.bf16.mxu0 0
        %1170 = vmatpush1.bf16.msra.mxu0 %v1154
        %1171 = vmatprep.subr.bf16.mxu0 0
        %1172 = vmatpush1.bf16.msra.mxu0 %v1153
        %1173 = vmatprep.subr.bf16.mxu0 0
        %1174 = vmatpush1.bf16.msra.mxu0 %v1152
        %1175 = vmatprep.subr.bf16.mxu0 0
        %1176 = vmatpush1.bf16.msra.mxu0 %v1151
        %1177 = vmatprep.subr.bf16.mxu0 0
        %1178 = vmatpush1.bf16.msra.mxu0 %v1150
        %1179 = vmatprep.subr.bf16.mxu0 0
        %1180 = vmatpush1.bf16.msra.mxu0 %v1149
        %1181 = vmatprep.subr.bf16.mxu0 0
        %1182 = vmatpush2.bf16.msra.mxu0 0
        %1183 = vmatprep.subr.bf16.mxu0 0
        %1184 = vmatpush2.bf16.msra.mxu0 0
        %1185 = vmatprep.subr.bf16.mxu0 0
        %1186 = vmatpush2.bf16.msra.mxu0 0
        %1187 = vmatprep.subr.bf16.mxu0 0
        %1188 = vmatpush2.bf16.msra.mxu0 0
        %1189 = vmatprep.subr.bf16.mxu0 0
        %1190 = vmatpush2.bf16.msra.mxu0 0
        %1191 = vmatprep.subr.bf16.mxu0 0
        %1192 = vmatpush2.bf16.msra.mxu0 0
        %1193 = vmatprep.subr.bf16.mxu0 0
        %1194 = vmatpush2.bf16.msra.mxu0 0
        %1195 = vmatprep.subr.bf16.mxu0 0
        %1196 = vmatpush2.bf16.msra.mxu0 0
        %1197 = vmatprep.mubr.bf16.mxu0 0
        %1198 = vmatmul.mubr.bf16.gmra.mxu0 %v996
        %v1199 = vpop.f32.mrf.mxu0
        %v1200 = vadd.f32 0.0, %v1199
        %v1201 = vpop.f32.mrf.mxu0
        %v1202 = vpop.f32.mrf.mxu0
        %v1203 = vpop.f32.mrf.mxu0
        %1204 = vdwg.mxu0
        %v1205 = vld [vmem:[%s510] sm:$0xf]
        %v1206 = vld [vmem:[%s510 + $0x4] sm:$0xf]
        %v1207 = vld [vmem:[%s510 + $0x8] sm:$0xf]
        %v1208 = vld [vmem:[%s510 + $0xc] sm:$0xf]
        %v1209 = vld [vmem:[%s510 + $0x10] sm:$0xf]
        %v1210 = vld [vmem:[%s510 + $0x14] sm:$0xf]
        %v1211 = vld [vmem:[%s510 + $0x18] sm:$0xf]
        %v1212 = vld [vmem:[%s510 + $0x1c] sm:$0xf]
        %v1213 = vld [vmem:[%s510 + $0x20] sm:$0xf]
        %v1214 = vld [vmem:[%s510 + $0x24] sm:$0xf]
        %v1215 = vld [vmem:[%s510 + $0x28] sm:$0xf]
        %v1216 = vld [vmem:[%s510 + $0x2c] sm:$0xf]
        %v1217 = vld [vmem:[%s510 + $0x30] sm:$0xf]
        %v1218 = vld [vmem:[%s510 + $0x34] sm:$0xf]
        %v1219 = vld [vmem:[%s510 + $0x38] sm:$0xf]
        %v1220 = vld [vmem:[%s510 + $0x3c] sm:$0xf]
        %v1237 = vunpack.c.l.b16 %v1205
        %v1238 = vunpack.c.l.b16 %v1206
        %v1239 = vunpack.c.l.b16 %v1207
        %v1240 = vunpack.c.l.b16 %v1208
        %v1241 = vunpack.c.l.b16 %v1209
        %v1242 = vunpack.c.l.b16 %v1210
        %v1243 = vunpack.c.l.b16 %v1211
        %v1244 = vunpack.c.l.b16 %v1212
        %v1245 = vunpack.c.l.b16 %v1213
        %v1246 = vunpack.c.l.b16 %v1214
        %v1247 = vunpack.c.l.b16 %v1215
        %v1248 = vunpack.c.l.b16 %v1216
        %v1249 = vunpack.c.l.b16 %v1217
        %v1250 = vunpack.c.l.b16 %v1218
        %v1251 = vunpack.c.l.b16 %v1219
        %v1252 = vunpack.c.l.b16 %v1220
        %v1253 = vpack.c.b16 %v1238, %v1237
        %v1254 = vpack.c.b16 %v1240, %v1239
        %v1255 = vpack.c.b16 %v1242, %v1241
        %v1256 = vpack.c.b16 %v1244, %v1243
        %v1257 = vpack.c.b16 %v1246, %v1245
        %v1258 = vpack.c.b16 %v1248, %v1247
        %v1259 = vpack.c.b16 %v1250, %v1249
        %v1260 = vpack.c.b16 %v1252, %v1251
        %1269 = vmatprep.subr.bf16.mxu0 0
        %1270 = vmatpush1.bf16.msra.mxu0 %v1260
        %1271 = vmatprep.subr.bf16.mxu0 0
        %1272 = vmatpush1.bf16.msra.mxu0 %v1259
        %1273 = vmatprep.subr.bf16.mxu0 0
        %1274 = vmatpush1.bf16.msra.mxu0 %v1258
        %1275 = vmatprep.subr.bf16.mxu0 0
        %1276 = vmatpush1.bf16.msra.mxu0 %v1257
        %1277 = vmatprep.subr.bf16.mxu0 0
        %1278 = vmatpush1.bf16.msra.mxu0 %v1256
        %1279 = vmatprep.subr.bf16.mxu0 0
        %1280 = vmatpush1.bf16.msra.mxu0 %v1255
        %1281 = vmatprep.subr.bf16.mxu0 0
        %1282 = vmatpush1.bf16.msra.mxu0 %v1254
        %1283 = vmatprep.subr.bf16.mxu0 0
        %1284 = vmatpush1.bf16.msra.mxu0 %v1253
        %1285 = vmatprep.subr.bf16.mxu0 0
        %1286 = vmatpush2.bf16.msra.mxu0 0
        %1287 = vmatprep.subr.bf16.mxu0 0
        %1288 = vmatpush2.bf16.msra.mxu0 0
        %1289 = vmatprep.subr.bf16.mxu0 0
        %1290 = vmatpush2.bf16.msra.mxu0 0
        %1291 = vmatprep.subr.bf16.mxu0 0
        %1292 = vmatpush2.bf16.msra.mxu0 0
        %1293 = vmatprep.subr.bf16.mxu0 0
        %1294 = vmatpush2.bf16.msra.mxu0 0
        %1295 = vmatprep.subr.bf16.mxu0 0
        %1296 = vmatpush2.bf16.msra.mxu0 0
        %1297 = vmatprep.subr.bf16.mxu0 0
        %1298 = vmatpush2.bf16.msra.mxu0 0
        %1299 = vmatprep.subr.bf16.mxu0 0
        %1300 = vmatpush2.bf16.msra.mxu0 0
        %1301 = vmatprep.mubr.bf16.mxu0 0
        %1302 = vmatmul.mubr.bf16.gmra.mxu0 %v996
        %v1303 = vpop.f32.mrf.mxu0
        %v1304 = vadd.f32 %v531, %v1303
        %v1305 = vpop.f32.mrf.mxu0
        %v1306 = vpop.f32.mrf.mxu0
        %v1307 = vpop.f32.mrf.mxu0
        %1308 = vdwg.mxu0
        %s1309 = scalar_lea.vmem %s245, 8 [#allocation3]
        %v1310 = vld [vmem:[%s1309] sm:$0xf]
        %v1311 = vunpack.c.l.bf16 %v1310
        %v1312 = vadd.f32 %v1311, %v1096
        %v1313 = vxor.u32 %v1312, 2147483648
        %v1314 = vmul.f32 %v1313, 1.442695
        %v1315 = vpow.pop %v1314
        %v1316 = vadd.f32 %v1315, 1.0
        %v1317 = vrcp.pop %v1316
        %v1318 = vmul.f32 1.0, %v1317
        %s1319 = scalar_lea.vmem %s245, 40 [#allocation3]
        %v1320 = vld [vmem:[%s1319] sm:$0xf]
        %v1321 = vunpack.c.l.bf16 %v1320
        %v1322 = vadd.f32 %v1321, %v1200
        %v1323 = vxor.u32 %v1322, 2147483648
        %v1324 = vmul.f32 %v1323, 1.442695
        %v1325 = vpow.pop %v1324
        %v1326 = vadd.f32 %v1325, 1.0
        %v1327 = vrcp.pop %v1326
        %v1328 = vmul.f32 1.0, %v1327
        %s1329 = scalar_lea.vmem %s245, 72 [#allocation3]
        %v1330 = vld [vmem:[%s1329] sm:$0xf]
        %v1331 = vunpack.c.l.bf16 %v1330
        %v1332 = vmul.f32 %v1318, %v1304
        %v1333 = vadd.f32 %v1331, %v1332
        %v1334 = vtanh.pop %v1333
        %v1335 = vsub.f32 1.0, %v1328
        %v1336 = vmul.f32 %v1335, %v1334
        %v1337 = vmul.f32 %v1328, %v993
        %v1338 = vadd.f32 %v1336, %v1337
        %s1339 = scalar_lea.vmem %s284, 16 [#allocation8]
        %1340 = vst [vmem:[%s1339] sm:$0xff] %v1338
        %v1341 = vpack.c.bf16 %v1338, %v1338
        %v1342 = vld [vmem:[%s254] sm:$0xf]
        %v1343 = vld [vmem:[%s254 + $0x4] sm:$0xf]
        %v1344 = vld [vmem:[%s254 + $0x8] sm:$0xf]
        %v1345 = vld [vmem:[%s254 + $0xc] sm:$0xf]
        %v1346 = vld [vmem:[%s254 + $0x10] sm:$0xf]
        %v1347 = vld [vmem:[%s254 + $0x14] sm:$0xf]
        %v1348 = vld [vmem:[%s254 + $0x18] sm:$0xf]
        %v1349 = vld [vmem:[%s254 + $0x1c] sm:$0xf]
        %v1350 = vld [vmem:[%s254 + $0x20] sm:$0xf]
        %v1351 = vld [vmem:[%s254 + $0x24] sm:$0xf]
        %v1352 = vld [vmem:[%s254 + $0x28] sm:$0xf]
        %v1353 = vld [vmem:[%s254 + $0x2c] sm:$0xf]
        %v1354 = vld [vmem:[%s254 + $0x30] sm:$0xf]
        %v1355 = vld [vmem:[%s254 + $0x34] sm:$0xf]
        %v1356 = vld [vmem:[%s254 + $0x38] sm:$0xf]
        %v1357 = vld [vmem:[%s254 + $0x3c] sm:$0xf]
        %v1374 = vunpack.c.l.b16 %v1342
        %v1375 = vunpack.c.l.b16 %v1343
        %v1376 = vunpack.c.l.b16 %v1344
        %v1377 = vunpack.c.l.b16 %v1345
        %v1378 = vunpack.c.l.b16 %v1346
        %v1379 = vunpack.c.l.b16 %v1347
        %v1380 = vunpack.c.l.b16 %v1348
        %v1381 = vunpack.c.l.b16 %v1349
        %v1382 = vunpack.c.l.b16 %v1350
        %v1383 = vunpack.c.l.b16 %v1351
        %v1384 = vunpack.c.l.b16 %v1352
        %v1385 = vunpack.c.l.b16 %v1353
        %v1386 = vunpack.c.l.b16 %v1354
        %v1387 = vunpack.c.l.b16 %v1355
        %v1388 = vunpack.c.l.b16 %v1356
        %v1389 = vunpack.c.l.b16 %v1357
        %v1390 = vpack.c.b16 %v1375, %v1374
        %v1391 = vpack.c.b16 %v1377, %v1376
        %v1392 = vpack.c.b16 %v1379, %v1378
        %v1393 = vpack.c.b16 %v1381, %v1380
        %v1394 = vpack.c.b16 %v1383, %v1382
        %v1395 = vpack.c.b16 %v1385, %v1384
        %v1396 = vpack.c.b16 %v1387, %v1386
        %v1397 = vpack.c.b16 %v1389, %v1388
        %1406 = vmatprep.subr.bf16.mxu0 0
        %1407 = vmatpush1.bf16.msra.mxu0 %v1397
        %1408 = vmatprep.subr.bf16.mxu0 0
        %1409 = vmatpush1.bf16.msra.mxu0 %v1396
        %1410 = vmatprep.subr.bf16.mxu0 0
        %1411 = vmatpush1.bf16.msra.mxu0 %v1395
        %1412 = vmatprep.subr.bf16.mxu0 0
        %1413 = vmatpush1.bf16.msra.mxu0 %v1394
        %1414 = vmatprep.subr.bf16.mxu0 0
        %1415 = vmatpush1.bf16.msra.mxu0 %v1393
        %1416 = vmatprep.subr.bf16.mxu0 0
        %1417 = vmatpush1.bf16.msra.mxu0 %v1392
        %1418 = vmatprep.subr.bf16.mxu0 0
        %1419 = vmatpush1.bf16.msra.mxu0 %v1391
        %1420 = vmatprep.subr.bf16.mxu0 0
        %1421 = vmatpush1.bf16.msra.mxu0 %v1390
        %1422 = vmatprep.subr.bf16.mxu0 0
        %1423 = vmatpush2.bf16.msra.mxu0 0
        %1424 = vmatprep.subr.bf16.mxu0 0
        %1425 = vmatpush2.bf16.msra.mxu0 0
        %1426 = vmatprep.subr.bf16.mxu0 0
        %1427 = vmatpush2.bf16.msra.mxu0 0
        %1428 = vmatprep.subr.bf16.mxu0 0
        %1429 = vmatpush2.bf16.msra.mxu0 0
        %1430 = vmatprep.subr.bf16.mxu0 0
        %1431 = vmatpush2.bf16.msra.mxu0 0
        %1432 = vmatprep.subr.bf16.mxu0 0
        %1433 = vmatpush2.bf16.msra.mxu0 0
        %1434 = vmatprep.subr.bf16.mxu0 0
        %1435 = vmatpush2.bf16.msra.mxu0 0
        %1436 = vmatprep.subr.bf16.mxu0 0
        %1437 = vmatpush2.bf16.msra.mxu0 0
        %1438 = vmatprep.mubr.bf16.mxu0 0
        %1439 = vmatmul.mubr.bf16.gmra.mxu0 %v1341
        %v1440 = vpop.f32.mrf.mxu0
        %v1441 = vadd.f32 0.0, %v1440
        %v1442 = vpop.f32.mrf.mxu0
        %v1443 = vpop.f32.mrf.mxu0
        %v1444 = vpop.f32.mrf.mxu0
        %1445 = vdwg.mxu0
        %v1446 = vld [vmem:[%s405] sm:$0xf]
        %v1447 = vld [vmem:[%s405 + $0x4] sm:$0xf]
        %v1448 = vld [vmem:[%s405 + $0x8] sm:$0xf]
        %v1449 = vld [vmem:[%s405 + $0xc] sm:$0xf]
        %v1450 = vld [vmem:[%s405 + $0x10] sm:$0xf]
        %v1451 = vld [vmem:[%s405 + $0x14] sm:$0xf]
        %v1452 = vld [vmem:[%s405 + $0x18] sm:$0xf]
        %v1453 = vld [vmem:[%s405 + $0x1c] sm:$0xf]
        %v1454 = vld [vmem:[%s405 + $0x20] sm:$0xf]
        %v1455 = vld [vmem:[%s405 + $0x24] sm:$0xf]
        %v1456 = vld [vmem:[%s405 + $0x28] sm:$0xf]
        %v1457 = vld [vmem:[%s405 + $0x2c] sm:$0xf]
        %v1458 = vld [vmem:[%s405 + $0x30] sm:$0xf]
        %v1459 = vld [vmem:[%s405 + $0x34] sm:$0xf]
        %v1460 = vld [vmem:[%s405 + $0x38] sm:$0xf]
        %v1461 = vld [vmem:[%s405 + $0x3c] sm:$0xf]
        %v1478 = vunpack.c.l.b16 %v1446
        %v1479 = vunpack.c.l.b16 %v1447
        %v1480 = vunpack.c.l.b16 %v1448
        %v1481 = vunpack.c.l.b16 %v1449
        %v1482 = vunpack.c.l.b16 %v1450
        %v1483 = vunpack.c.l.b16 %v1451
        %v1484 = vunpack.c.l.b16 %v1452
        %v1485 = vunpack.c.l.b16 %v1453
        %v1486 = vunpack.c.l.b16 %v1454
        %v1487 = vunpack.c.l.b16 %v1455
        %v1488 = vunpack.c.l.b16 %v1456
        %v1489 = vunpack.c.l.b16 %v1457
        %v1490 = vunpack.c.l.b16 %v1458
        %v1491 = vunpack.c.l.b16 %v1459
        %v1492 = vunpack.c.l.b16 %v1460
        %v1493 = vunpack.c.l.b16 %v1461
        %v1494 = vpack.c.b16 %v1479, %v1478
        %v1495 = vpack.c.b16 %v1481, %v1480
        %v1496 = vpack.c.b16 %v1483, %v1482
        %v1497 = vpack.c.b16 %v1485, %v1484
        %v1498 = vpack.c.b16 %v1487, %v1486
        %v1499 = vpack.c.b16 %v1489, %v1488
        %v1500 = vpack.c.b16 %v1491, %v1490
        %v1501 = vpack.c.b16 %v1493, %v1492
        %1510 = vmatprep.subr.bf16.mxu0 0
        %1511 = vmatpush1.bf16.msra.mxu0 %v1501
        %1512 = vmatprep.subr.bf16.mxu0 0
        %1513 = vmatpush1.bf16.msra.mxu0 %v1500
        %1514 = vmatprep.subr.bf16.mxu0 0
        %1515 = vmatpush1.bf16.msra.mxu0 %v1499
        %1516 = vmatprep.subr.bf16.mxu0 0
        %1517 = vmatpush1.bf16.msra.mxu0 %v1498
        %1518 = vmatprep.subr.bf16.mxu0 0
        %1519 = vmatpush1.bf16.msra.mxu0 %v1497
        %1520 = vmatprep.subr.bf16.mxu0 0
        %1521 = vmatpush1.bf16.msra.mxu0 %v1496
        %1522 = vmatprep.subr.bf16.mxu0 0
        %1523 = vmatpush1.bf16.msra.mxu0 %v1495
        %1524 = vmatprep.subr.bf16.mxu0 0
        %1525 = vmatpush1.bf16.msra.mxu0 %v1494
        %1526 = vmatprep.subr.bf16.mxu0 0
        %1527 = vmatpush2.bf16.msra.mxu0 0
        %1528 = vmatprep.subr.bf16.mxu0 0
        %1529 = vmatpush2.bf16.msra.mxu0 0
        %1530 = vmatprep.subr.bf16.mxu0 0
        %1531 = vmatpush2.bf16.msra.mxu0 0
        %1532 = vmatprep.subr.bf16.mxu0 0
        %1533 = vmatpush2.bf16.msra.mxu0 0
        %1534 = vmatprep.subr.bf16.mxu0 0
        %1535 = vmatpush2.bf16.msra.mxu0 0
        %1536 = vmatprep.subr.bf16.mxu0 0
        %1537 = vmatpush2.bf16.msra.mxu0 0
        %1538 = vmatprep.subr.bf16.mxu0 0
        %1539 = vmatpush2.bf16.msra.mxu0 0
        %1540 = vmatprep.subr.bf16.mxu0 0
        %1541 = vmatpush2.bf16.msra.mxu0 0
        %1542 = vmatprep.mubr.bf16.mxu0 0
        %1543 = vmatmul.mubr.bf16.gmra.mxu0 %v1341
        %v1544 = vpop.f32.mrf.mxu0
        %v1545 = vadd.f32 0.0, %v1544
        %v1546 = vpop.f32.mrf.mxu0
        %v1547 = vpop.f32.mrf.mxu0
        %v1548 = vpop.f32.mrf.mxu0
        %1549 = vdwg.mxu0
        %v1550 = vld [vmem:[%s510] sm:$0xf]
        %v1551 = vld [vmem:[%s510 + $0x4] sm:$0xf]
        %v1552 = vld [vmem:[%s510 + $0x8] sm:$0xf]
        %v1553 = vld [vmem:[%s510 + $0xc] sm:$0xf]
        %v1554 = vld [vmem:[%s510 + $0x10] sm:$0xf]
        %v1555 = vld [vmem:[%s510 + $0x14] sm:$0xf]
        %v1556 = vld [vmem:[%s510 + $0x18] sm:$0xf]
        %v1557 = vld [vmem:[%s510 + $0x1c] sm:$0xf]
        %v1558 = vld [vmem:[%s510 + $0x20] sm:$0xf]
        %v1559 = vld [vmem:[%s510 + $0x24] sm:$0xf]
        %v1560 = vld [vmem:[%s510 + $0x28] sm:$0xf]
        %v1561 = vld [vmem:[%s510 + $0x2c] sm:$0xf]
        %v1562 = vld [vmem:[%s510 + $0x30] sm:$0xf]
        %v1563 = vld [vmem:[%s510 + $0x34] sm:$0xf]
        %v1564 = vld [vmem:[%s510 + $0x38] sm:$0xf]
        %v1565 = vld [vmem:[%s510 + $0x3c] sm:$0xf]
        %v1582 = vunpack.c.l.b16 %v1550
        %v1583 = vunpack.c.l.b16 %v1551
        %v1584 = vunpack.c.l.b16 %v1552
        %v1585 = vunpack.c.l.b16 %v1553
        %v1586 = vunpack.c.l.b16 %v1554
        %v1587 = vunpack.c.l.b16 %v1555
        %v1588 = vunpack.c.l.b16 %v1556
        %v1589 = vunpack.c.l.b16 %v1557
        %v1590 = vunpack.c.l.b16 %v1558
        %v1591 = vunpack.c.l.b16 %v1559
        %v1592 = vunpack.c.l.b16 %v1560
        %v1593 = vunpack.c.l.b16 %v1561
        %v1594 = vunpack.c.l.b16 %v1562
        %v1595 = vunpack.c.l.b16 %v1563
        %v1596 = vunpack.c.l.b16 %v1564
        %v1597 = vunpack.c.l.b16 %v1565
        %v1598 = vpack.c.b16 %v1583, %v1582
        %v1599 = vpack.c.b16 %v1585, %v1584
        %v1600 = vpack.c.b16 %v1587, %v1586
        %v1601 = vpack.c.b16 %v1589, %v1588
        %v1602 = vpack.c.b16 %v1591, %v1590
        %v1603 = vpack.c.b16 %v1593, %v1592
        %v1604 = vpack.c.b16 %v1595, %v1594
        %v1605 = vpack.c.b16 %v1597, %v1596
        %1614 = vmatprep.subr.bf16.mxu0 0
        %1615 = vmatpush1.bf16.msra.mxu0 %v1605
        %1616 = vmatprep.subr.bf16.mxu0 0
        %1617 = vmatpush1.bf16.msra.mxu0 %v1604
        %1618 = vmatprep.subr.bf16.mxu0 0
        %1619 = vmatpush1.bf16.msra.mxu0 %v1603
        %1620 = vmatprep.subr.bf16.mxu0 0
        %1621 = vmatpush1.bf16.msra.mxu0 %v1602
        %1622 = vmatprep.subr.bf16.mxu0 0
        %1623 = vmatpush1.bf16.msra.mxu0 %v1601
        %1624 = vmatprep.subr.bf16.mxu0 0
        %1625 = vmatpush1.bf16.msra.mxu0 %v1600
        %1626 = vmatprep.subr.bf16.mxu0 0
        %1627 = vmatpush1.bf16.msra.mxu0 %v1599
        %1628 = vmatprep.subr.bf16.mxu0 0
        %1629 = vmatpush1.bf16.msra.mxu0 %v1598
        %1630 = vmatprep.subr.bf16.mxu0 0
        %1631 = vmatpush2.bf16.msra.mxu0 0
        %1632 = vmatprep.subr.bf16.mxu0 0
        %1633 = vmatpush2.bf16.msra.mxu0 0
        %1634 = vmatprep.subr.bf16.mxu0 0
        %1635 = vmatpush2.bf16.msra.mxu0 0
        %1636 = vmatprep.subr.bf16.mxu0 0
        %1637 = vmatpush2.bf16.msra.mxu0 0
        %1638 = vmatprep.subr.bf16.mxu0 0
        %1639 = vmatpush2.bf16.msra.mxu0 0
        %1640 = vmatprep.subr.bf16.mxu0 0
        %1641 = vmatpush2.bf16.msra.mxu0 0
        %1642 = vmatprep.subr.bf16.mxu0 0
        %1643 = vmatpush2.bf16.msra.mxu0 0
        %1644 = vmatprep.subr.bf16.mxu0 0
        %1645 = vmatpush2.bf16.msra.mxu0 0
        %1646 = vmatprep.mubr.bf16.mxu0 0
        %1647 = vmatmul.mubr.bf16.gmra.mxu0 %v1341
        %v1648 = vpop.f32.mrf.mxu0
        %v1649 = vadd.f32 %v531, %v1648
        %v1650 = vpop.f32.mrf.mxu0
        %v1651 = vpop.f32.mrf.mxu0
        %v1652 = vpop.f32.mrf.mxu0
        %1653 = vdwg.mxu0
        %s1654 = scalar_lea.vmem %s245, 12 [#allocation3]
        %v1655 = vld [vmem:[%s1654] sm:$0xf]
        %v1656 = vunpack.c.l.bf16 %v1655
        %v1657 = vadd.f32 %v1656, %v1441
        %v1658 = vxor.u32 %v1657, 2147483648
        %v1659 = vmul.f32 %v1658, 1.442695
        %v1660 = vpow.pop %v1659
        %v1661 = vadd.f32 %v1660, 1.0
        %v1662 = vrcp.pop %v1661
        %v1663 = vmul.f32 1.0, %v1662
        %s1664 = scalar_lea.vmem %s245, 44 [#allocation3]
        %v1665 = vld [vmem:[%s1664] sm:$0xf]
        %v1666 = vunpack.c.l.bf16 %v1665
        %v1667 = vadd.f32 %v1666, %v1545
        %v1668 = vxor.u32 %v1667, 2147483648
        %v1669 = vmul.f32 %v1668, 1.442695
        %v1670 = vpow.pop %v1669
        %v1671 = vadd.f32 %v1670, 1.0
        %v1672 = vrcp.pop %v1671
        %v1673 = vmul.f32 1.0, %v1672
        %s1674 = scalar_lea.vmem %s245, 76 [#allocation3]
        %v1675 = vld [vmem:[%s1674] sm:$0xf]
        %v1676 = vunpack.c.l.bf16 %v1675
        %v1677 = vmul.f32 %v1663, %v1649
        %v1678 = vadd.f32 %v1676, %v1677
        %v1679 = vtanh.pop %v1678
        %v1680 = vsub.f32 1.0, %v1673
        %v1681 = vmul.f32 %v1680, %v1679
        %v1682 = vmul.f32 %v1673, %v1338
        %v1683 = vadd.f32 %v1681, %v1682
        %s1684 = scalar_lea.vmem %s284, 24 [#allocation8]
        %1685 = vst [vmem:[%s1684] sm:$0xff] %v1683
        %v1686 = vpack.c.bf16 %v1683, %v1683
        %v1687 = vld [vmem:[%s254] sm:$0xf]
        %v1688 = vld [vmem:[%s254 + $0x4] sm:$0xf]
        %v1689 = vld [vmem:[%s254 + $0x8] sm:$0xf]
        %v1690 = vld [vmem:[%s254 + $0xc] sm:$0xf]
        %v1691 = vld [vmem:[%s254 + $0x10] sm:$0xf]
        %v1692 = vld [vmem:[%s254 + $0x14] sm:$0xf]
        %v1693 = vld [vmem:[%s254 + $0x18] sm:$0xf]
        %v1694 = vld [vmem:[%s254 + $0x1c] sm:$0xf]
        %v1695 = vld [vmem:[%s254 + $0x20] sm:$0xf]
        %v1696 = vld [vmem:[%s254 + $0x24] sm:$0xf]
        %v1697 = vld [vmem:[%s254 + $0x28] sm:$0xf]
        %v1698 = vld [vmem:[%s254 + $0x2c] sm:$0xf]
        %v1699 = vld [vmem:[%s254 + $0x30] sm:$0xf]
        %v1700 = vld [vmem:[%s254 + $0x34] sm:$0xf]
        %v1701 = vld [vmem:[%s254 + $0x38] sm:$0xf]
        %v1702 = vld [vmem:[%s254 + $0x3c] sm:$0xf]
        %v1719 = vunpack.c.l.b16 %v1687
        %v1720 = vunpack.c.l.b16 %v1688
        %v1721 = vunpack.c.l.b16 %v1689
        %v1722 = vunpack.c.l.b16 %v1690
        %v1723 = vunpack.c.l.b16 %v1691
        %v1724 = vunpack.c.l.b16 %v1692
        %v1725 = vunpack.c.l.b16 %v1693
        %v1726 = vunpack.c.l.b16 %v1694
        %v1727 = vunpack.c.l.b16 %v1695
        %v1728 = vunpack.c.l.b16 %v1696
        %v1729 = vunpack.c.l.b16 %v1697
        %v1730 = vunpack.c.l.b16 %v1698
        %v1731 = vunpack.c.l.b16 %v1699
        %v1732 = vunpack.c.l.b16 %v1700
        %v1733 = vunpack.c.l.b16 %v1701
        %v1734 = vunpack.c.l.b16 %v1702
        %v1735 = vpack.c.b16 %v1720, %v1719
        %v1736 = vpack.c.b16 %v1722, %v1721
        %v1737 = vpack.c.b16 %v1724, %v1723
        %v1738 = vpack.c.b16 %v1726, %v1725
        %v1739 = vpack.c.b16 %v1728, %v1727
        %v1740 = vpack.c.b16 %v1730, %v1729
        %v1741 = vpack.c.b16 %v1732, %v1731
        %v1742 = vpack.c.b16 %v1734, %v1733
        %1751 = vmatprep.subr.bf16.mxu0 0
        %1752 = vmatpush1.bf16.msra.mxu0 %v1742
        %1753 = vmatprep.subr.bf16.mxu0 0
        %1754 = vmatpush1.bf16.msra.mxu0 %v1741
        %1755 = vmatprep.subr.bf16.mxu0 0
        %1756 = vmatpush1.bf16.msra.mxu0 %v1740
        %1757 = vmatprep.subr.bf16.mxu0 0
        %1758 = vmatpush1.bf16.msra.mxu0 %v1739
        %1759 = vmatprep.subr.bf16.mxu0 0
        %1760 = vmatpush1.bf16.msra.mxu0 %v1738
        %1761 = vmatprep.subr.bf16.mxu0 0
        %1762 = vmatpush1.bf16.msra.mxu0 %v1737
        %1763 = vmatprep.subr.bf16.mxu0 0
        %1764 = vmatpush1.bf16.msra.mxu0 %v1736
        %1765 = vmatprep.subr.bf16.mxu0 0
        %1766 = vmatpush1.bf16.msra.mxu0 %v1735
        %1767 = vmatprep.subr.bf16.mxu0 0
        %1768 = vmatpush2.bf16.msra.mxu0 0
        %1769 = vmatprep.subr.bf16.mxu0 0
        %1770 = vmatpush2.bf16.msra.mxu0 0
        %1771 = vmatprep.subr.bf16.mxu0 0
        %1772 = vmatpush2.bf16.msra.mxu0 0
        %1773 = vmatprep.subr.bf16.mxu0 0
        %1774 = vmatpush2.bf16.msra.mxu0 0
        %1775 = vmatprep.subr.bf16.mxu0 0
        %1776 = vmatpush2.bf16.msra.mxu0 0
        %1777 = vmatprep.subr.bf16.mxu0 0
        %1778 = vmatpush2.bf16.msra.mxu0 0
        %1779 = vmatprep.subr.bf16.mxu0 0
        %1780 = vmatpush2.bf16.msra.mxu0 0
        %1781 = vmatprep.subr.bf16.mxu0 0
        %1782 = vmatpush2.bf16.msra.mxu0 0
        %1783 = vmatprep.mubr.bf16.mxu0 0
        %1784 = vmatmul.mubr.bf16.gmra.mxu0 %v1686
        %v1785 = vpop.f32.mrf.mxu0
        %v1786 = vadd.f32 0.0, %v1785
        %v1787 = vpop.f32.mrf.mxu0
        %v1788 = vpop.f32.mrf.mxu0
        %v1789 = vpop.f32.mrf.mxu0
        %1790 = vdwg.mxu0
        %v1791 = vld [vmem:[%s405] sm:$0xf]
        %v1792 = vld [vmem:[%s405 + $0x4] sm:$0xf]
        %v1793 = vld [vmem:[%s405 + $0x8] sm:$0xf]
        %v1794 = vld [vmem:[%s405 + $0xc] sm:$0xf]
        %v1795 = vld [vmem:[%s405 + $0x10] sm:$0xf]
        %v1796 = vld [vmem:[%s405 + $0x14] sm:$0xf]
        %v1797 = vld [vmem:[%s405 + $0x18] sm:$0xf]
        %v1798 = vld [vmem:[%s405 + $0x1c] sm:$0xf]
        %v1799 = vld [vmem:[%s405 + $0x20] sm:$0xf]
        %v1800 = vld [vmem:[%s405 + $0x24] sm:$0xf]
        %v1801 = vld [vmem:[%s405 + $0x28] sm:$0xf]
        %v1802 = vld [vmem:[%s405 + $0x2c] sm:$0xf]
        %v1803 = vld [vmem:[%s405 + $0x30] sm:$0xf]
        %v1804 = vld [vmem:[%s405 + $0x34] sm:$0xf]
        %v1805 = vld [vmem:[%s405 + $0x38] sm:$0xf]
        %v1806 = vld [vmem:[%s405 + $0x3c] sm:$0xf]
        %v1823 = vunpack.c.l.b16 %v1791
        %v1824 = vunpack.c.l.b16 %v1792
        %v1825 = vunpack.c.l.b16 %v1793
        %v1826 = vunpack.c.l.b16 %v1794
        %v1827 = vunpack.c.l.b16 %v1795
        %v1828 = vunpack.c.l.b16 %v1796
        %v1829 = vunpack.c.l.b16 %v1797
        %v1830 = vunpack.c.l.b16 %v1798
        %v1831 = vunpack.c.l.b16 %v1799
        %v1832 = vunpack.c.l.b16 %v1800
        %v1833 = vunpack.c.l.b16 %v1801
        %v1834 = vunpack.c.l.b16 %v1802
        %v1835 = vunpack.c.l.b16 %v1803
        %v1836 = vunpack.c.l.b16 %v1804
        %v1837 = vunpack.c.l.b16 %v1805
        %v1838 = vunpack.c.l.b16 %v1806
        %v1839 = vpack.c.b16 %v1824, %v1823
        %v1840 = vpack.c.b16 %v1826, %v1825
        %v1841 = vpack.c.b16 %v1828, %v1827
        %v1842 = vpack.c.b16 %v1830, %v1829
        %v1843 = vpack.c.b16 %v1832, %v1831
        %v1844 = vpack.c.b16 %v1834, %v1833
        %v1845 = vpack.c.b16 %v1836, %v1835
        %v1846 = vpack.c.b16 %v1838, %v1837
        %1855 = vmatprep.subr.bf16.mxu0 0
        %1856 = vmatpush1.bf16.msra.mxu0 %v1846
        %1857 = vmatprep.subr.bf16.mxu0 0
        %1858 = vmatpush1.bf16.msra.mxu0 %v1845
        %1859 = vmatprep.subr.bf16.mxu0 0
        %1860 = vmatpush1.bf16.msra.mxu0 %v1844
        %1861 = vmatprep.subr.bf16.mxu0 0
        %1862 = vmatpush1.bf16.msra.mxu0 %v1843
        %1863 = vmatprep.subr.bf16.mxu0 0
        %1864 = vmatpush1.bf16.msra.mxu0 %v1842
        %1865 = vmatprep.subr.bf16.mxu0 0
        %1866 = vmatpush1.bf16.msra.mxu0 %v1841
        %1867 = vmatprep.subr.bf16.mxu0 0
        %1868 = vmatpush1.bf16.msra.mxu0 %v1840
        %1869 = vmatprep.subr.bf16.mxu0 0
        %1870 = vmatpush1.bf16.msra.mxu0 %v1839
        %1871 = vmatprep.subr.bf16.mxu0 0
        %1872 = vmatpush2.bf16.msra.mxu0 0
        %1873 = vmatprep.subr.bf16.mxu0 0
        %1874 = vmatpush2.bf16.msra.mxu0 0
        %1875 = vmatprep.subr.bf16.mxu0 0
        %1876 = vmatpush2.bf16.msra.mxu0 0
        %1877 = vmatprep.subr.bf16.mxu0 0
        %1878 = vmatpush2.bf16.msra.mxu0 0
        %1879 = vmatprep.subr.bf16.mxu0 0
        %1880 = vmatpush2.bf16.msra.mxu0 0
        %1881 = vmatprep.subr.bf16.mxu0 0
        %1882 = vmatpush2.bf16.msra.mxu0 0
        %1883 = vmatprep.subr.bf16.mxu0 0
        %1884 = vmatpush2.bf16.msra.mxu0 0
        %1885 = vmatprep.subr.bf16.mxu0 0
        %1886 = vmatpush2.bf16.msra.mxu0 0
        %1887 = vmatprep.mubr.bf16.mxu0 0
        %1888 = vmatmul.mubr.bf16.gmra.mxu0 %v1686
        %v1889 = vpop.f32.mrf.mxu0
        %v1890 = vadd.f32 0.0, %v1889
        %v1891 = vpop.f32.mrf.mxu0
        %v1892 = vpop.f32.mrf.mxu0
        %v1893 = vpop.f32.mrf.mxu0
        %1894 = vdwg.mxu0
        %v1895 = vld [vmem:[%s510] sm:$0xf]
        %v1896 = vld [vmem:[%s510 + $0x4] sm:$0xf]
        %v1897 = vld [vmem:[%s510 + $0x8] sm:$0xf]
        %v1898 = vld [vmem:[%s510 + $0xc] sm:$0xf]
        %v1899 = vld [vmem:[%s510 + $0x10] sm:$0xf]
        %v1900 = vld [vmem:[%s510 + $0x14] sm:$0xf]
        %v1901 = vld [vmem:[%s510 + $0x18] sm:$0xf]
        %v1902 = vld [vmem:[%s510 + $0x1c] sm:$0xf]
        %v1903 = vld [vmem:[%s510 + $0x20] sm:$0xf]
        %v1904 = vld [vmem:[%s510 + $0x24] sm:$0xf]
        %v1905 = vld [vmem:[%s510 + $0x28] sm:$0xf]
        %v1906 = vld [vmem:[%s510 + $0x2c] sm:$0xf]
        %v1907 = vld [vmem:[%s510 + $0x30] sm:$0xf]
        %v1908 = vld [vmem:[%s510 + $0x34] sm:$0xf]
        %v1909 = vld [vmem:[%s510 + $0x38] sm:$0xf]
        %v1910 = vld [vmem:[%s510 + $0x3c] sm:$0xf]
        %v1927 = vunpack.c.l.b16 %v1895
        %v1928 = vunpack.c.l.b16 %v1896
        %v1929 = vunpack.c.l.b16 %v1897
        %v1930 = vunpack.c.l.b16 %v1898
        %v1931 = vunpack.c.l.b16 %v1899
        %v1932 = vunpack.c.l.b16 %v1900
        %v1933 = vunpack.c.l.b16 %v1901
        %v1934 = vunpack.c.l.b16 %v1902
        %v1935 = vunpack.c.l.b16 %v1903
        %v1936 = vunpack.c.l.b16 %v1904
        %v1937 = vunpack.c.l.b16 %v1905
        %v1938 = vunpack.c.l.b16 %v1906
        %v1939 = vunpack.c.l.b16 %v1907
        %v1940 = vunpack.c.l.b16 %v1908
        %v1941 = vunpack.c.l.b16 %v1909
        %v1942 = vunpack.c.l.b16 %v1910
        %v1943 = vpack.c.b16 %v1928, %v1927
        %v1944 = vpack.c.b16 %v1930, %v1929
        %v1945 = vpack.c.b16 %v1932, %v1931
        %v1946 = vpack.c.b16 %v1934, %v1933
        %v1947 = vpack.c.b16 %v1936, %v1935
        %v1948 = vpack.c.b16 %v1938, %v1937
        %v1949 = vpack.c.b16 %v1940, %v1939
        %v1950 = vpack.c.b16 %v1942, %v1941
        %1959 = vmatprep.subr.bf16.mxu0 0
        %1960 = vmatpush1.bf16.msra.mxu0 %v1950
        %1961 = vmatprep.subr.bf16.mxu0 0
        %1962 = vmatpush1.bf16.msra.mxu0 %v1949
        %1963 = vmatprep.subr.bf16.mxu0 0
        %1964 = vmatpush1.bf16.msra.mxu0 %v1948
        %1965 = vmatprep.subr.bf16.mxu0 0
        %1966 = vmatpush1.bf16.msra.mxu0 %v1947
        %1967 = vmatprep.subr.bf16.mxu0 0
        %1968 = vmatpush1.bf16.msra.mxu0 %v1946
        %1969 = vmatprep.subr.bf16.mxu0 0
        %1970 = vmatpush1.bf16.msra.mxu0 %v1945
        %1971 = vmatprep.subr.bf16.mxu0 0
        %1972 = vmatpush1.bf16.msra.mxu0 %v1944
        %1973 = vmatprep.subr.bf16.mxu0 0
        %1974 = vmatpush1.bf16.msra.mxu0 %v1943
        %1975 = vmatprep.subr.bf16.mxu0 0
        %1976 = vmatpush2.bf16.msra.mxu0 0
        %1977 = vmatprep.subr.bf16.mxu0 0
        %1978 = vmatpush2.bf16.msra.mxu0 0
        %1979 = vmatprep.subr.bf16.mxu0 0
        %1980 = vmatpush2.bf16.msra.mxu0 0
        %1981 = vmatprep.subr.bf16.mxu0 0
        %1982 = vmatpush2.bf16.msra.mxu0 0
        %1983 = vmatprep.subr.bf16.mxu0 0
        %1984 = vmatpush2.bf16.msra.mxu0 0
        %1985 = vmatprep.subr.bf16.mxu0 0
        %1986 = vmatpush2.bf16.msra.mxu0 0
        %1987 = vmatprep.subr.bf16.mxu0 0
        %1988 = vmatpush2.bf16.msra.mxu0 0
        %1989 = vmatprep.subr.bf16.mxu0 0
        %1990 = vmatpush2.bf16.msra.mxu0 0
        %1991 = vmatprep.mubr.bf16.mxu0 0
        %1992 = vmatmul.mubr.bf16.gmra.mxu0 %v1686
        %v1993 = vpop.f32.mrf.mxu0
        %v1994 = vadd.f32 %v531, %v1993
        %v1995 = vpop.f32.mrf.mxu0
        %v1996 = vpop.f32.mrf.mxu0
        %v1997 = vpop.f32.mrf.mxu0
        %1998 = vdwg.mxu0
        %s1999 = scalar_lea.vmem %s245, 16 [#allocation3]
        %v2000 = vld [vmem:[%s1999] sm:$0xf]
        %v2001 = vunpack.c.l.bf16 %v2000
        %v2002 = vadd.f32 %v2001, %v1786
        %v2003 = vxor.u32 %v2002, 2147483648
        %v2004 = vmul.f32 %v2003, 1.442695
        %v2005 = vpow.pop %v2004
        %v2006 = vadd.f32 %v2005, 1.0
        %v2007 = vrcp.pop %v2006
        %v2008 = vmul.f32 1.0, %v2007
        %s2009 = scalar_lea.vmem %s245, 48 [#allocation3]
        %v2010 = vld [vmem:[%s2009] sm:$0xf]
        %v2011 = vunpack.c.l.bf16 %v2010
        %v2012 = vadd.f32 %v2011, %v1890
        %v2013 = vxor.u32 %v2012, 2147483648
        %v2014 = vmul.f32 %v2013, 1.442695
        %v2015 = vpow.pop %v2014
        %v2016 = vadd.f32 %v2015, 1.0
        %v2017 = vrcp.pop %v2016
        %v2018 = vmul.f32 1.0, %v2017
        %s2019 = scalar_lea.vmem %s245, 80 [#allocation3]
        %v2020 = vld [vmem:[%s2019] sm:$0xf]
        %v2021 = vunpack.c.l.bf16 %v2020
        %v2022 = vmul.f32 %v2008, %v1994
        %v2023 = vadd.f32 %v2021, %v2022
        %v2024 = vtanh.pop %v2023
        %v2025 = vsub.f32 1.0, %v2018
        %v2026 = vmul.f32 %v2025, %v2024
        %v2027 = vmul.f32 %v2018, %v1683
        %v2028 = vadd.f32 %v2026, %v2027
        %s2029 = scalar_lea.vmem %s284, 32 [#allocation8]
        %2030 = vst [vmem:[%s2029] sm:$0xff] %v2028
        %v2031 = vpack.c.bf16 %v2028, %v2028
        %v2032 = vld [vmem:[%s254] sm:$0xf]
        %v2033 = vld [vmem:[%s254 + $0x4] sm:$0xf]
        %v2034 = vld [vmem:[%s254 + $0x8] sm:$0xf]
        %v2035 = vld [vmem:[%s254 + $0xc] sm:$0xf]
        %v2036 = vld [vmem:[%s254 + $0x10] sm:$0xf]
        %v2037 = vld [vmem:[%s254 + $0x14] sm:$0xf]
        %v2038 = vld [vmem:[%s254 + $0x18] sm:$0xf]
        %v2039 = vld [vmem:[%s254 + $0x1c] sm:$0xf]
        %v2040 = vld [vmem:[%s254 + $0x20] sm:$0xf]
        %v2041 = vld [vmem:[%s254 + $0x24] sm:$0xf]
        %v2042 = vld [vmem:[%s254 + $0x28] sm:$0xf]
        %v2043 = vld [vmem:[%s254 + $0x2c] sm:$0xf]
        %v2044 = vld [vmem:[%s254 + $0x30] sm:$0xf]
        %v2045 = vld [vmem:[%s254 + $0x34] sm:$0xf]
        %v2046 = vld [vmem:[%s254 + $0x38] sm:$0xf]
        %v2047 = vld [vmem:[%s254 + $0x3c] sm:$0xf]
        %v2064 = vunpack.c.l.b16 %v2032
        %v2065 = vunpack.c.l.b16 %v2033
        %v2066 = vunpack.c.l.b16 %v2034
        %v2067 = vunpack.c.l.b16 %v2035
        %v2068 = vunpack.c.l.b16 %v2036
        %v2069 = vunpack.c.l.b16 %v2037
        %v2070 = vunpack.c.l.b16 %v2038
        %v2071 = vunpack.c.l.b16 %v2039
        %v2072 = vunpack.c.l.b16 %v2040
        %v2073 = vunpack.c.l.b16 %v2041
        %v2074 = vunpack.c.l.b16 %v2042
        %v2075 = vunpack.c.l.b16 %v2043
        %v2076 = vunpack.c.l.b16 %v2044
        %v2077 = vunpack.c.l.b16 %v2045
        %v2078 = vunpack.c.l.b16 %v2046
        %v2079 = vunpack.c.l.b16 %v2047
        %v2080 = vpack.c.b16 %v2065, %v2064
        %v2081 = vpack.c.b16 %v2067, %v2066
        %v2082 = vpack.c.b16 %v2069, %v2068
        %v2083 = vpack.c.b16 %v2071, %v2070
        %v2084 = vpack.c.b16 %v2073, %v2072
        %v2085 = vpack.c.b16 %v2075, %v2074
        %v2086 = vpack.c.b16 %v2077, %v2076
        %v2087 = vpack.c.b16 %v2079, %v2078
        %2096 = vmatprep.subr.bf16.mxu0 0
        %2097 = vmatpush1.bf16.msra.mxu0 %v2087
        %2098 = vmatprep.subr.bf16.mxu0 0
        %2099 = vmatpush1.bf16.msra.mxu0 %v2086
        %2100 = vmatprep.subr.bf16.mxu0 0
        %2101 = vmatpush1.bf16.msra.mxu0 %v2085
        %2102 = vmatprep.subr.bf16.mxu0 0
        %2103 = vmatpush1.bf16.msra.mxu0 %v2084
        %2104 = vmatprep.subr.bf16.mxu0 0
        %2105 = vmatpush1.bf16.msra.mxu0 %v2083
        %2106 = vmatprep.subr.bf16.mxu0 0
        %2107 = vmatpush1.bf16.msra.mxu0 %v2082
        %2108 = vmatprep.subr.bf16.mxu0 0
        %2109 = vmatpush1.bf16.msra.mxu0 %v2081
        %2110 = vmatprep.subr.bf16.mxu0 0
        %2111 = vmatpush1.bf16.msra.mxu0 %v2080
        %2112 = vmatprep.subr.bf16.mxu0 0
        %2113 = vmatpush2.bf16.msra.mxu0 0
        %2114 = vmatprep.subr.bf16.mxu0 0
        %2115 = vmatpush2.bf16.msra.mxu0 0
        %2116 = vmatprep.subr.bf16.mxu0 0
        %2117 = vmatpush2.bf16.msra.mxu0 0
        %2118 = vmatprep.subr.bf16.mxu0 0
        %2119 = vmatpush2.bf16.msra.mxu0 0
        %2120 = vmatprep.subr.bf16.mxu0 0
        %2121 = vmatpush2.bf16.msra.mxu0 0
        %2122 = vmatprep.subr.bf16.mxu0 0
        %2123 = vmatpush2.bf16.msra.mxu0 0
        %2124 = vmatprep.subr.bf16.mxu0 0
        %2125 = vmatpush2.bf16.msra.mxu0 0
        %2126 = vmatprep.subr.bf16.mxu0 0
        %2127 = vmatpush2.bf16.msra.mxu0 0
        %2128 = vmatprep.mubr.bf16.mxu0 0
        %2129 = vmatmul.mubr.bf16.gmra.mxu0 %v2031
        %v2130 = vpop.f32.mrf.mxu0
        %v2131 = vadd.f32 0.0, %v2130
        %v2132 = vpop.f32.mrf.mxu0
        %v2133 = vpop.f32.mrf.mxu0
        %v2134 = vpop.f32.mrf.mxu0
        %2135 = vdwg.mxu0
        %v2136 = vld [vmem:[%s405] sm:$0xf]
        %v2137 = vld [vmem:[%s405 + $0x4] sm:$0xf]
        %v2138 = vld [vmem:[%s405 + $0x8] sm:$0xf]
        %v2139 = vld [vmem:[%s405 + $0xc] sm:$0xf]
        %v2140 = vld [vmem:[%s405 + $0x10] sm:$0xf]
        %v2141 = vld [vmem:[%s405 + $0x14] sm:$0xf]
        %v2142 = vld [vmem:[%s405 + $0x18] sm:$0xf]
        %v2143 = vld [vmem:[%s405 + $0x1c] sm:$0xf]
        %v2144 = vld [vmem:[%s405 + $0x20] sm:$0xf]
        %v2145 = vld [vmem:[%s405 + $0x24] sm:$0xf]
        %v2146 = vld [vmem:[%s405 + $0x28] sm:$0xf]
        %v2147 = vld [vmem:[%s405 + $0x2c] sm:$0xf]
        %v2148 = vld [vmem:[%s405 + $0x30] sm:$0xf]
        %v2149 = vld [vmem:[%s405 + $0x34] sm:$0xf]
        %v2150 = vld [vmem:[%s405 + $0x38] sm:$0xf]
        %v2151 = vld [vmem:[%s405 + $0x3c] sm:$0xf]
        %v2168 = vunpack.c.l.b16 %v2136
        %v2169 = vunpack.c.l.b16 %v2137
        %v2170 = vunpack.c.l.b16 %v2138
        %v2171 = vunpack.c.l.b16 %v2139
        %v2172 = vunpack.c.l.b16 %v2140
        %v2173 = vunpack.c.l.b16 %v2141
        %v2174 = vunpack.c.l.b16 %v2142
        %v2175 = vunpack.c.l.b16 %v2143
        %v2176 = vunpack.c.l.b16 %v2144
        %v2177 = vunpack.c.l.b16 %v2145
        %v2178 = vunpack.c.l.b16 %v2146
        %v2179 = vunpack.c.l.b16 %v2147
        %v2180 = vunpack.c.l.b16 %v2148
        %v2181 = vunpack.c.l.b16 %v2149
        %v2182 = vunpack.c.l.b16 %v2150
        %v2183 = vunpack.c.l.b16 %v2151
        %v2184 = vpack.c.b16 %v2169, %v2168
        %v2185 = vpack.c.b16 %v2171, %v2170
        %v2186 = vpack.c.b16 %v2173, %v2172
        %v2187 = vpack.c.b16 %v2175, %v2174
        %v2188 = vpack.c.b16 %v2177, %v2176
        %v2189 = vpack.c.b16 %v2179, %v2178
        %v2190 = vpack.c.b16 %v2181, %v2180
        %v2191 = vpack.c.b16 %v2183, %v2182
        %2200 = vmatprep.subr.bf16.mxu0 0
        %2201 = vmatpush1.bf16.msra.mxu0 %v2191
        %2202 = vmatprep.subr.bf16.mxu0 0
        %2203 = vmatpush1.bf16.msra.mxu0 %v2190
        %2204 = vmatprep.subr.bf16.mxu0 0
        %2205 = vmatpush1.bf16.msra.mxu0 %v2189
        %2206 = vmatprep.subr.bf16.mxu0 0
        %2207 = vmatpush1.bf16.msra.mxu0 %v2188
        %2208 = vmatprep.subr.bf16.mxu0 0
        %2209 = vmatpush1.bf16.msra.mxu0 %v2187
        %2210 = vmatprep.subr.bf16.mxu0 0
        %2211 = vmatpush1.bf16.msra.mxu0 %v2186
        %2212 = vmatprep.subr.bf16.mxu0 0
        %2213 = vmatpush1.bf16.msra.mxu0 %v2185
        %2214 = vmatprep.subr.bf16.mxu0 0
        %2215 = vmatpush1.bf16.msra.mxu0 %v2184
        %2216 = vmatprep.subr.bf16.mxu0 0
        %2217 = vmatpush2.bf16.msra.mxu0 0
        %2218 = vmatprep.subr.bf16.mxu0 0
        %2219 = vmatpush2.bf16.msra.mxu0 0
        %2220 = vmatprep.subr.bf16.mxu0 0
        %2221 = vmatpush2.bf16.msra.mxu0 0
        %2222 = vmatprep.subr.bf16.mxu0 0
        %2223 = vmatpush2.bf16.msra.mxu0 0
        %2224 = vmatprep.subr.bf16.mxu0 0
        %2225 = vmatpush2.bf16.msra.mxu0 0
        %2226 = vmatprep.subr.bf16.mxu0 0
        %2227 = vmatpush2.bf16.msra.mxu0 0
        %2228 = vmatprep.subr.bf16.mxu0 0
        %2229 = vmatpush2.bf16.msra.mxu0 0
        %2230 = vmatprep.subr.bf16.mxu0 0
        %2231 = vmatpush2.bf16.msra.mxu0 0
        %2232 = vmatprep.mubr.bf16.mxu0 0
        %2233 = vmatmul.mubr.bf16.gmra.mxu0 %v2031
        %v2234 = vpop.f32.mrf.mxu0
        %v2235 = vadd.f32 0.0, %v2234
        %v2236 = vpop.f32.mrf.mxu0
        %v2237 = vpop.f32.mrf.mxu0
        %v2238 = vpop.f32.mrf.mxu0
        %2239 = vdwg.mxu0
        %v2240 = vld [vmem:[%s510] sm:$0xf]
        %v2241 = vld [vmem:[%s510 + $0x4] sm:$0xf]
        %v2242 = vld [vmem:[%s510 + $0x8] sm:$0xf]
        %v2243 = vld [vmem:[%s510 + $0xc] sm:$0xf]
        %v2244 = vld [vmem:[%s510 + $0x10] sm:$0xf]
        %v2245 = vld [vmem:[%s510 + $0x14] sm:$0xf]
        %v2246 = vld [vmem:[%s510 + $0x18] sm:$0xf]
        %v2247 = vld [vmem:[%s510 + $0x1c] sm:$0xf]
        %v2248 = vld [vmem:[%s510 + $0x20] sm:$0xf]
        %v2249 = vld [vmem:[%s510 + $0x24] sm:$0xf]
        %v2250 = vld [vmem:[%s510 + $0x28] sm:$0xf]
        %v2251 = vld [vmem:[%s510 + $0x2c] sm:$0xf]
        %v2252 = vld [vmem:[%s510 + $0x30] sm:$0xf]
        %v2253 = vld [vmem:[%s510 + $0x34] sm:$0xf]
        %v2254 = vld [vmem:[%s510 + $0x38] sm:$0xf]
        %v2255 = vld [vmem:[%s510 + $0x3c] sm:$0xf]
        %v2272 = vunpack.c.l.b16 %v2240
        %v2273 = vunpack.c.l.b16 %v2241
        %v2274 = vunpack.c.l.b16 %v2242
        %v2275 = vunpack.c.l.b16 %v2243
        %v2276 = vunpack.c.l.b16 %v2244
        %v2277 = vunpack.c.l.b16 %v2245
        %v2278 = vunpack.c.l.b16 %v2246
        %v2279 = vunpack.c.l.b16 %v2247
        %v2280 = vunpack.c.l.b16 %v2248
        %v2281 = vunpack.c.l.b16 %v2249
        %v2282 = vunpack.c.l.b16 %v2250
        %v2283 = vunpack.c.l.b16 %v2251
        %v2284 = vunpack.c.l.b16 %v2252
        %v2285 = vunpack.c.l.b16 %v2253
        %v2286 = vunpack.c.l.b16 %v2254
        %v2287 = vunpack.c.l.b16 %v2255
        %v2288 = vpack.c.b16 %v2273, %v2272
        %v2289 = vpack.c.b16 %v2275, %v2274
        %v2290 = vpack.c.b16 %v2277, %v2276
        %v2291 = vpack.c.b16 %v2279, %v2278
        %v2292 = vpack.c.b16 %v2281, %v2280
        %v2293 = vpack.c.b16 %v2283, %v2282
        %v2294 = vpack.c.b16 %v2285, %v2284
        %v2295 = vpack.c.b16 %v2287, %v2286
        %2304 = vmatprep.subr.bf16.mxu0 0
        %2305 = vmatpush1.bf16.msra.mxu0 %v2295
        %2306 = vmatprep.subr.bf16.mxu0 0
        %2307 = vmatpush1.bf16.msra.mxu0 %v2294
        %2308 = vmatprep.subr.bf16.mxu0 0
        %2309 = vmatpush1.bf16.msra.mxu0 %v2293
        %2310 = vmatprep.subr.bf16.mxu0 0
        %2311 = vmatpush1.bf16.msra.mxu0 %v2292
        %2312 = vmatprep.subr.bf16.mxu0 0
        %2313 = vmatpush1.bf16.msra.mxu0 %v2291
        %2314 = vmatprep.subr.bf16.mxu0 0
        %2315 = vmatpush1.bf16.msra.mxu0 %v2290
        %2316 = vmatprep.subr.bf16.mxu0 0
        %2317 = vmatpush1.bf16.msra.mxu0 %v2289
        %2318 = vmatprep.subr.bf16.mxu0 0
        %2319 = vmatpush1.bf16.msra.mxu0 %v2288
        %2320 = vmatprep.subr.bf16.mxu0 0
        %2321 = vmatpush2.bf16.msra.mxu0 0
        %2322 = vmatprep.subr.bf16.mxu0 0
        %2323 = vmatpush2.bf16.msra.mxu0 0
        %2324 = vmatprep.subr.bf16.mxu0 0
        %2325 = vmatpush2.bf16.msra.mxu0 0
        %2326 = vmatprep.subr.bf16.mxu0 0
        %2327 = vmatpush2.bf16.msra.mxu0 0
        %2328 = vmatprep.subr.bf16.mxu0 0
        %2329 = vmatpush2.bf16.msra.mxu0 0
        %2330 = vmatprep.subr.bf16.mxu0 0
        %2331 = vmatpush2.bf16.msra.mxu0 0
        %2332 = vmatprep.subr.bf16.mxu0 0
        %2333 = vmatpush2.bf16.msra.mxu0 0
        %2334 = vmatprep.subr.bf16.mxu0 0
        %2335 = vmatpush2.bf16.msra.mxu0 0
        %2336 = vmatprep.mubr.bf16.mxu0 0
        %2337 = vmatmul.mubr.bf16.gmra.mxu0 %v2031
        %v2338 = vpop.f32.mrf.mxu0
        %v2339 = vadd.f32 %v531, %v2338
        %v2340 = vpop.f32.mrf.mxu0
        %v2341 = vpop.f32.mrf.mxu0
        %v2342 = vpop.f32.mrf.mxu0
        %2343 = vdwg.mxu0
        %s2344 = scalar_lea.vmem %s245, 20 [#allocation3]
        %v2345 = vld [vmem:[%s2344] sm:$0xf]
        %v2346 = vunpack.c.l.bf16 %v2345
        %v2347 = vadd.f32 %v2346, %v2131
        %v2348 = vxor.u32 %v2347, 2147483648
        %v2349 = vmul.f32 %v2348, 1.442695
        %v2350 = vpow.pop %v2349
        %v2351 = vadd.f32 %v2350, 1.0
        %v2352 = vrcp.pop %v2351
        %v2353 = vmul.f32 1.0, %v2352
        %s2354 = scalar_lea.vmem %s245, 52 [#allocation3]
        %v2355 = vld [vmem:[%s2354] sm:$0xf]
        %v2356 = vunpack.c.l.bf16 %v2355
        %v2357 = vadd.f32 %v2356, %v2235
        %v2358 = vxor.u32 %v2357, 2147483648
        %v2359 = vmul.f32 %v2358, 1.442695
        %v2360 = vpow.pop %v2359
        %v2361 = vadd.f32 %v2360, 1.0
        %v2362 = vrcp.pop %v2361
        %v2363 = vmul.f32 1.0, %v2362
        %s2364 = scalar_lea.vmem %s245, 84 [#allocation3]
        %v2365 = vld [vmem:[%s2364] sm:$0xf]
        %v2366 = vunpack.c.l.bf16 %v2365
        %v2367 = vmul.f32 %v2353, %v2339
        %v2368 = vadd.f32 %v2366, %v2367
        %v2369 = vtanh.pop %v2368
        %v2370 = vsub.f32 1.0, %v2363
        %v2371 = vmul.f32 %v2370, %v2369
        %v2372 = vmul.f32 %v2363, %v2028
        %v2373 = vadd.f32 %v2371, %v2372
        %s2374 = scalar_lea.vmem %s284, 40 [#allocation8]
        %2375 = vst [vmem:[%s2374] sm:$0xff] %v2373
        %v2376 = vpack.c.bf16 %v2373, %v2373
        %v2377 = vld [vmem:[%s254] sm:$0xf]
        %v2378 = vld [vmem:[%s254 + $0x4] sm:$0xf]
        %v2379 = vld [vmem:[%s254 + $0x8] sm:$0xf]
        %v2380 = vld [vmem:[%s254 + $0xc] sm:$0xf]
        %v2381 = vld [vmem:[%s254 + $0x10] sm:$0xf]
        %v2382 = vld [vmem:[%s254 + $0x14] sm:$0xf]
        %v2383 = vld [vmem:[%s254 + $0x18] sm:$0xf]
        %v2384 = vld [vmem:[%s254 + $0x1c] sm:$0xf]
        %v2385 = vld [vmem:[%s254 + $0x20] sm:$0xf]
        %v2386 = vld [vmem:[%s254 + $0x24] sm:$0xf]
        %v2387 = vld [vmem:[%s254 + $0x28] sm:$0xf]
        %v2388 = vld [vmem:[%s254 + $0x2c] sm:$0xf]
        %v2389 = vld [vmem:[%s254 + $0x30] sm:$0xf]
        %v2390 = vld [vmem:[%s254 + $0x34] sm:$0xf]
        %v2391 = vld [vmem:[%s254 + $0x38] sm:$0xf]
        %v2392 = vld [vmem:[%s254 + $0x3c] sm:$0xf]
        %v2409 = vunpack.c.l.b16 %v2377
        %v2410 = vunpack.c.l.b16 %v2378
        %v2411 = vunpack.c.l.b16 %v2379
        %v2412 = vunpack.c.l.b16 %v2380
        %v2413 = vunpack.c.l.b16 %v2381
        %v2414 = vunpack.c.l.b16 %v2382
        %v2415 = vunpack.c.l.b16 %v2383
        %v2416 = vunpack.c.l.b16 %v2384
        %v2417 = vunpack.c.l.b16 %v2385
        %v2418 = vunpack.c.l.b16 %v2386
        %v2419 = vunpack.c.l.b16 %v2387
        %v2420 = vunpack.c.l.b16 %v2388
        %v2421 = vunpack.c.l.b16 %v2389
        %v2422 = vunpack.c.l.b16 %v2390
        %v2423 = vunpack.c.l.b16 %v2391
        %v2424 = vunpack.c.l.b16 %v2392
        %v2425 = vpack.c.b16 %v2410, %v2409
        %v2426 = vpack.c.b16 %v2412, %v2411
        %v2427 = vpack.c.b16 %v2414, %v2413
        %v2428 = vpack.c.b16 %v2416, %v2415
        %v2429 = vpack.c.b16 %v2418, %v2417
        %v2430 = vpack.c.b16 %v2420, %v2419
        %v2431 = vpack.c.b16 %v2422, %v2421
        %v2432 = vpack.c.b16 %v2424, %v2423
        %2441 = vmatprep.subr.bf16.mxu0 0
        %2442 = vmatpush1.bf16.msra.mxu0 %v2432
        %2443 = vmatprep.subr.bf16.mxu0 0
        %2444 = vmatpush1.bf16.msra.mxu0 %v2431
        %2445 = vmatprep.subr.bf16.mxu0 0
        %2446 = vmatpush1.bf16.msra.mxu0 %v2430
        %2447 = vmatprep.subr.bf16.mxu0 0
        %2448 = vmatpush1.bf16.msra.mxu0 %v2429
        %2449 = vmatprep.subr.bf16.mxu0 0
        %2450 = vmatpush1.bf16.msra.mxu0 %v2428
        %2451 = vmatprep.subr.bf16.mxu0 0
        %2452 = vmatpush1.bf16.msra.mxu0 %v2427
        %2453 = vmatprep.subr.bf16.mxu0 0
        %2454 = vmatpush1.bf16.msra.mxu0 %v2426
        %2455 = vmatprep.subr.bf16.mxu0 0
        %2456 = vmatpush1.bf16.msra.mxu0 %v2425
        %2457 = vmatprep.subr.bf16.mxu0 0
        %2458 = vmatpush2.bf16.msra.mxu0 0
        %2459 = vmatprep.subr.bf16.mxu0 0
        %2460 = vmatpush2.bf16.msra.mxu0 0
        %2461 = vmatprep.subr.bf16.mxu0 0
        %2462 = vmatpush2.bf16.msra.mxu0 0
        %2463 = vmatprep.subr.bf16.mxu0 0
        %2464 = vmatpush2.bf16.msra.mxu0 0
        %2465 = vmatprep.subr.bf16.mxu0 0
        %2466 = vmatpush2.bf16.msra.mxu0 0
        %2467 = vmatprep.subr.bf16.mxu0 0
        %2468 = vmatpush2.bf16.msra.mxu0 0
        %2469 = vmatprep.subr.bf16.mxu0 0
        %2470 = vmatpush2.bf16.msra.mxu0 0
        %2471 = vmatprep.subr.bf16.mxu0 0
        %2472 = vmatpush2.bf16.msra.mxu0 0
        %2473 = vmatprep.mubr.bf16.mxu0 0
        %2474 = vmatmul.mubr.bf16.gmra.mxu0 %v2376
        %v2475 = vpop.f32.mrf.mxu0
        %v2476 = vadd.f32 0.0, %v2475
        %v2477 = vpop.f32.mrf.mxu0
        %v2478 = vpop.f32.mrf.mxu0
        %v2479 = vpop.f32.mrf.mxu0
        %2480 = vdwg.mxu0
        %v2481 = vld [vmem:[%s405] sm:$0xf]
        %v2482 = vld [vmem:[%s405 + $0x4] sm:$0xf]
        %v2483 = vld [vmem:[%s405 + $0x8] sm:$0xf]
        %v2484 = vld [vmem:[%s405 + $0xc] sm:$0xf]
        %v2485 = vld [vmem:[%s405 + $0x10] sm:$0xf]
        %v2486 = vld [vmem:[%s405 + $0x14] sm:$0xf]
        %v2487 = vld [vmem:[%s405 + $0x18] sm:$0xf]
        %v2488 = vld [vmem:[%s405 + $0x1c] sm:$0xf]
        %v2489 = vld [vmem:[%s405 + $0x20] sm:$0xf]
        %v2490 = vld [vmem:[%s405 + $0x24] sm:$0xf]
        %v2491 = vld [vmem:[%s405 + $0x28] sm:$0xf]
        %v2492 = vld [vmem:[%s405 + $0x2c] sm:$0xf]
        %v2493 = vld [vmem:[%s405 + $0x30] sm:$0xf]
        %v2494 = vld [vmem:[%s405 + $0x34] sm:$0xf]
        %v2495 = vld [vmem:[%s405 + $0x38] sm:$0xf]
        %v2496 = vld [vmem:[%s405 + $0x3c] sm:$0xf]
        %v2513 = vunpack.c.l.b16 %v2481
        %v2514 = vunpack.c.l.b16 %v2482
        %v2515 = vunpack.c.l.b16 %v2483
        %v2516 = vunpack.c.l.b16 %v2484
        %v2517 = vunpack.c.l.b16 %v2485
        %v2518 = vunpack.c.l.b16 %v2486
        %v2519 = vunpack.c.l.b16 %v2487
        %v2520 = vunpack.c.l.b16 %v2488
        %v2521 = vunpack.c.l.b16 %v2489
        %v2522 = vunpack.c.l.b16 %v2490
        %v2523 = vunpack.c.l.b16 %v2491
        %v2524 = vunpack.c.l.b16 %v2492
        %v2525 = vunpack.c.l.b16 %v2493
        %v2526 = vunpack.c.l.b16 %v2494
        %v2527 = vunpack.c.l.b16 %v2495
        %v2528 = vunpack.c.l.b16 %v2496
        %v2529 = vpack.c.b16 %v2514, %v2513
        %v2530 = vpack.c.b16 %v2516, %v2515
        %v2531 = vpack.c.b16 %v2518, %v2517
        %v2532 = vpack.c.b16 %v2520, %v2519
        %v2533 = vpack.c.b16 %v2522, %v2521
        %v2534 = vpack.c.b16 %v2524, %v2523
        %v2535 = vpack.c.b16 %v2526, %v2525
        %v2536 = vpack.c.b16 %v2528, %v2527
        %2545 = vmatprep.subr.bf16.mxu0 0
        %2546 = vmatpush1.bf16.msra.mxu0 %v2536
        %2547 = vmatprep.subr.bf16.mxu0 0
        %2548 = vmatpush1.bf16.msra.mxu0 %v2535
        %2549 = vmatprep.subr.bf16.mxu0 0
        %2550 = vmatpush1.bf16.msra.mxu0 %v2534
        %2551 = vmatprep.subr.bf16.mxu0 0
        %2552 = vmatpush1.bf16.msra.mxu0 %v2533
        %2553 = vmatprep.subr.bf16.mxu0 0
        %2554 = vmatpush1.bf16.msra.mxu0 %v2532
        %2555 = vmatprep.subr.bf16.mxu0 0
        %2556 = vmatpush1.bf16.msra.mxu0 %v2531
        %2557 = vmatprep.subr.bf16.mxu0 0
        %2558 = vmatpush1.bf16.msra.mxu0 %v2530
        %2559 = vmatprep.subr.bf16.mxu0 0
        %2560 = vmatpush1.bf16.msra.mxu0 %v2529
        %2561 = vmatprep.subr.bf16.mxu0 0
        %2562 = vmatpush2.bf16.msra.mxu0 0
        %2563 = vmatprep.subr.bf16.mxu0 0
        %2564 = vmatpush2.bf16.msra.mxu0 0
        %2565 = vmatprep.subr.bf16.mxu0 0
        %2566 = vmatpush2.bf16.msra.mxu0 0
        %2567 = vmatprep.subr.bf16.mxu0 0
        %2568 = vmatpush2.bf16.msra.mxu0 0
        %2569 = vmatprep.subr.bf16.mxu0 0
        %2570 = vmatpush2.bf16.msra.mxu0 0
        %2571 = vmatprep.subr.bf16.mxu0 0
        %2572 = vmatpush2.bf16.msra.mxu0 0
        %2573 = vmatprep.subr.bf16.mxu0 0
        %2574 = vmatpush2.bf16.msra.mxu0 0
        %2575 = vmatprep.subr.bf16.mxu0 0
        %2576 = vmatpush2.bf16.msra.mxu0 0
        %2577 = vmatprep.mubr.bf16.mxu0 0
        %2578 = vmatmul.mubr.bf16.gmra.mxu0 %v2376
        %v2579 = vpop.f32.mrf.mxu0
        %v2580 = vadd.f32 0.0, %v2579
        %v2581 = vpop.f32.mrf.mxu0
        %v2582 = vpop.f32.mrf.mxu0
        %v2583 = vpop.f32.mrf.mxu0
        %2584 = vdwg.mxu0
        %v2585 = vld [vmem:[%s510] sm:$0xf]
        %v2586 = vld [vmem:[%s510 + $0x4] sm:$0xf]
        %v2587 = vld [vmem:[%s510 + $0x8] sm:$0xf]
        %v2588 = vld [vmem:[%s510 + $0xc] sm:$0xf]
        %v2589 = vld [vmem:[%s510 + $0x10] sm:$0xf]
        %v2590 = vld [vmem:[%s510 + $0x14] sm:$0xf]
        %v2591 = vld [vmem:[%s510 + $0x18] sm:$0xf]
        %v2592 = vld [vmem:[%s510 + $0x1c] sm:$0xf]
        %v2593 = vld [vmem:[%s510 + $0x20] sm:$0xf]
        %v2594 = vld [vmem:[%s510 + $0x24] sm:$0xf]
        %v2595 = vld [vmem:[%s510 + $0x28] sm:$0xf]
        %v2596 = vld [vmem:[%s510 + $0x2c] sm:$0xf]
        %v2597 = vld [vmem:[%s510 + $0x30] sm:$0xf]
        %v2598 = vld [vmem:[%s510 + $0x34] sm:$0xf]
        %v2599 = vld [vmem:[%s510 + $0x38] sm:$0xf]
        %v2600 = vld [vmem:[%s510 + $0x3c] sm:$0xf]
        %v2617 = vunpack.c.l.b16 %v2585
        %v2618 = vunpack.c.l.b16 %v2586
        %v2619 = vunpack.c.l.b16 %v2587
        %v2620 = vunpack.c.l.b16 %v2588
        %v2621 = vunpack.c.l.b16 %v2589
        %v2622 = vunpack.c.l.b16 %v2590
        %v2623 = vunpack.c.l.b16 %v2591
        %v2624 = vunpack.c.l.b16 %v2592
        %v2625 = vunpack.c.l.b16 %v2593
        %v2626 = vunpack.c.l.b16 %v2594
        %v2627 = vunpack.c.l.b16 %v2595
        %v2628 = vunpack.c.l.b16 %v2596
        %v2629 = vunpack.c.l.b16 %v2597
        %v2630 = vunpack.c.l.b16 %v2598
        %v2631 = vunpack.c.l.b16 %v2599
        %v2632 = vunpack.c.l.b16 %v2600
        %v2633 = vpack.c.b16 %v2618, %v2617
        %v2634 = vpack.c.b16 %v2620, %v2619
        %v2635 = vpack.c.b16 %v2622, %v2621
        %v2636 = vpack.c.b16 %v2624, %v2623
        %v2637 = vpack.c.b16 %v2626, %v2625
        %v2638 = vpack.c.b16 %v2628, %v2627
        %v2639 = vpack.c.b16 %v2630, %v2629
        %v2640 = vpack.c.b16 %v2632, %v2631
        %2649 = vmatprep.subr.bf16.mxu0 0
        %2650 = vmatpush1.bf16.msra.mxu0 %v2640
        %2651 = vmatprep.subr.bf16.mxu0 0
        %2652 = vmatpush1.bf16.msra.mxu0 %v2639
        %2653 = vmatprep.subr.bf16.mxu0 0
        %2654 = vmatpush1.bf16.msra.mxu0 %v2638
        %2655 = vmatprep.subr.bf16.mxu0 0
        %2656 = vmatpush1.bf16.msra.mxu0 %v2637
        %2657 = vmatprep.subr.bf16.mxu0 0
        %2658 = vmatpush1.bf16.msra.mxu0 %v2636
        %2659 = vmatprep.subr.bf16.mxu0 0
        %2660 = vmatpush1.bf16.msra.mxu0 %v2635
        %2661 = vmatprep.subr.bf16.mxu0 0
        %2662 = vmatpush1.bf16.msra.mxu0 %v2634
        %2663 = vmatprep.subr.bf16.mxu0 0
        %2664 = vmatpush1.bf16.msra.mxu0 %v2633
        %2665 = vmatprep.subr.bf16.mxu0 0
        %2666 = vmatpush2.bf16.msra.mxu0 0
        %2667 = vmatprep.subr.bf16.mxu0 0
        %2668 = vmatpush2.bf16.msra.mxu0 0
        %2669 = vmatprep.subr.bf16.mxu0 0
        %2670 = vmatpush2.bf16.msra.mxu0 0
        %2671 = vmatprep.subr.bf16.mxu0 0
        %2672 = vmatpush2.bf16.msra.mxu0 0
        %2673 = vmatprep.subr.bf16.mxu0 0
        %2674 = vmatpush2.bf16.msra.mxu0 0
        %2675 = vmatprep.subr.bf16.mxu0 0
        %2676 = vmatpush2.bf16.msra.mxu0 0
        %2677 = vmatprep.subr.bf16.mxu0 0
        %2678 = vmatpush2.bf16.msra.mxu0 0
        %2679 = vmatprep.subr.bf16.mxu0 0
        %2680 = vmatpush2.bf16.msra.mxu0 0
        %2681 = vmatprep.mubr.bf16.mxu0 0
        %2682 = vmatmul.mubr.bf16.gmra.mxu0 %v2376
        %v2683 = vpop.f32.mrf.mxu0
        %v2684 = vadd.f32 %v531, %v2683
        %v2685 = vpop.f32.mrf.mxu0
        %v2686 = vpop.f32.mrf.mxu0
        %v2687 = vpop.f32.mrf.mxu0
        %2688 = vdwg.mxu0
        %s2689 = scalar_lea.vmem %s245, 24 [#allocation3]
        %v2690 = vld [vmem:[%s2689] sm:$0xf]
        %v2691 = vunpack.c.l.bf16 %v2690
        %v2692 = vadd.f32 %v2691, %v2476
        %v2693 = vxor.u32 %v2692, 2147483648
        %v2694 = vmul.f32 %v2693, 1.442695
        %v2695 = vpow.pop %v2694
        %v2696 = vadd.f32 %v2695, 1.0
        %v2697 = vrcp.pop %v2696
        %v2698 = vmul.f32 1.0, %v2697
        %s2699 = scalar_lea.vmem %s245, 56 [#allocation3]
        %v2700 = vld [vmem:[%s2699] sm:$0xf]
        %v2701 = vunpack.c.l.bf16 %v2700
        %v2702 = vadd.f32 %v2701, %v2580
        %v2703 = vxor.u32 %v2702, 2147483648
        %v2704 = vmul.f32 %v2703, 1.442695
        %v2705 = vpow.pop %v2704
        %v2706 = vadd.f32 %v2705, 1.0
        %v2707 = vrcp.pop %v2706
        %v2708 = vmul.f32 1.0, %v2707
        %s2709 = scalar_lea.vmem %s245, 88 [#allocation3]
        %v2710 = vld [vmem:[%s2709] sm:$0xf]
        %v2711 = vunpack.c.l.bf16 %v2710
        %v2712 = vmul.f32 %v2698, %v2684
        %v2713 = vadd.f32 %v2711, %v2712
        %v2714 = vtanh.pop %v2713
        %v2715 = vsub.f32 1.0, %v2708
        %v2716 = vmul.f32 %v2715, %v2714
        %v2717 = vmul.f32 %v2708, %v2373
        %v2718 = vadd.f32 %v2716, %v2717
        %s2719 = scalar_lea.vmem %s284, 48 [#allocation8]
        %2720 = vst [vmem:[%s2719] sm:$0xff] %v2718
        %v2721 = vpack.c.bf16 %v2718, %v2718
        %v2722 = vld [vmem:[%s254] sm:$0xf]
        %v2723 = vld [vmem:[%s254 + $0x4] sm:$0xf]
        %v2724 = vld [vmem:[%s254 + $0x8] sm:$0xf]
        %v2725 = vld [vmem:[%s254 + $0xc] sm:$0xf]
        %v2726 = vld [vmem:[%s254 + $0x10] sm:$0xf]
        %v2727 = vld [vmem:[%s254 + $0x14] sm:$0xf]
        %v2728 = vld [vmem:[%s254 + $0x18] sm:$0xf]
        %v2729 = vld [vmem:[%s254 + $0x1c] sm:$0xf]
        %v2730 = vld [vmem:[%s254 + $0x20] sm:$0xf]
        %v2731 = vld [vmem:[%s254 + $0x24] sm:$0xf]
        %v2732 = vld [vmem:[%s254 + $0x28] sm:$0xf]
        %v2733 = vld [vmem:[%s254 + $0x2c] sm:$0xf]
        %v2734 = vld [vmem:[%s254 + $0x30] sm:$0xf]
        %v2735 = vld [vmem:[%s254 + $0x34] sm:$0xf]
        %v2736 = vld [vmem:[%s254 + $0x38] sm:$0xf]
        %v2737 = vld [vmem:[%s254 + $0x3c] sm:$0xf]
        %v2754 = vunpack.c.l.b16 %v2722
        %v2755 = vunpack.c.l.b16 %v2723
        %v2756 = vunpack.c.l.b16 %v2724
        %v2757 = vunpack.c.l.b16 %v2725
        %v2758 = vunpack.c.l.b16 %v2726
        %v2759 = vunpack.c.l.b16 %v2727
        %v2760 = vunpack.c.l.b16 %v2728
        %v2761 = vunpack.c.l.b16 %v2729
        %v2762 = vunpack.c.l.b16 %v2730
        %v2763 = vunpack.c.l.b16 %v2731
        %v2764 = vunpack.c.l.b16 %v2732
        %v2765 = vunpack.c.l.b16 %v2733
        %v2766 = vunpack.c.l.b16 %v2734
        %v2767 = vunpack.c.l.b16 %v2735
        %v2768 = vunpack.c.l.b16 %v2736
        %v2769 = vunpack.c.l.b16 %v2737
        %v2770 = vpack.c.b16 %v2755, %v2754
        %v2771 = vpack.c.b16 %v2757, %v2756
        %v2772 = vpack.c.b16 %v2759, %v2758
        %v2773 = vpack.c.b16 %v2761, %v2760
        %v2774 = vpack.c.b16 %v2763, %v2762
        %v2775 = vpack.c.b16 %v2765, %v2764
        %v2776 = vpack.c.b16 %v2767, %v2766
        %v2777 = vpack.c.b16 %v2769, %v2768
        %2786 = vmatprep.subr.bf16.mxu0 0
        %2787 = vmatpush1.bf16.msra.mxu0 %v2777
        %2788 = vmatprep.subr.bf16.mxu0 0
        %2789 = vmatpush1.bf16.msra.mxu0 %v2776
        %2790 = vmatprep.subr.bf16.mxu0 0
        %2791 = vmatpush1.bf16.msra.mxu0 %v2775
        %2792 = vmatprep.subr.bf16.mxu0 0
        %2793 = vmatpush1.bf16.msra.mxu0 %v2774
        %2794 = vmatprep.subr.bf16.mxu0 0
        %2795 = vmatpush1.bf16.msra.mxu0 %v2773
        %2796 = vmatprep.subr.bf16.mxu0 0
        %2797 = vmatpush1.bf16.msra.mxu0 %v2772
        %2798 = vmatprep.subr.bf16.mxu0 0
        %2799 = vmatpush1.bf16.msra.mxu0 %v2771
        %2800 = vmatprep.subr.bf16.mxu0 0
        %2801 = vmatpush1.bf16.msra.mxu0 %v2770
        %2802 = vmatprep.subr.bf16.mxu0 0
        %2803 = vmatpush2.bf16.msra.mxu0 0
        %2804 = vmatprep.subr.bf16.mxu0 0
        %2805 = vmatpush2.bf16.msra.mxu0 0
        %2806 = vmatprep.subr.bf16.mxu0 0
        %2807 = vmatpush2.bf16.msra.mxu0 0
        %2808 = vmatprep.subr.bf16.mxu0 0
        %2809 = vmatpush2.bf16.msra.mxu0 0
        %2810 = vmatprep.subr.bf16.mxu0 0
        %2811 = vmatpush2.bf16.msra.mxu0 0
        %2812 = vmatprep.subr.bf16.mxu0 0
        %2813 = vmatpush2.bf16.msra.mxu0 0
        %2814 = vmatprep.subr.bf16.mxu0 0
        %2815 = vmatpush2.bf16.msra.mxu0 0
        %2816 = vmatprep.subr.bf16.mxu0 0
        %2817 = vmatpush2.bf16.msra.mxu0 0
        %2818 = vmatprep.mubr.bf16.mxu0 0
        %2819 = vmatmul.mubr.bf16.gmra.mxu0 %v2721
        %v2820 = vpop.f32.mrf.mxu0
        %v2821 = vadd.f32 0.0, %v2820
        %v2822 = vpop.f32.mrf.mxu0
        %v2823 = vpop.f32.mrf.mxu0
        %v2824 = vpop.f32.mrf.mxu0
        %2825 = vdwg.mxu0
        %v2826 = vld [vmem:[%s405] sm:$0xf]
        %v2827 = vld [vmem:[%s405 + $0x4] sm:$0xf]
        %v2828 = vld [vmem:[%s405 + $0x8] sm:$0xf]
        %v2829 = vld [vmem:[%s405 + $0xc] sm:$0xf]
        %v2830 = vld [vmem:[%s405 + $0x10] sm:$0xf]
        %v2831 = vld [vmem:[%s405 + $0x14] sm:$0xf]
        %v2832 = vld [vmem:[%s405 + $0x18] sm:$0xf]
        %v2833 = vld [vmem:[%s405 + $0x1c] sm:$0xf]
        %v2834 = vld [vmem:[%s405 + $0x20] sm:$0xf]
        %v2835 = vld [vmem:[%s405 + $0x24] sm:$0xf]
        %v2836 = vld [vmem:[%s405 + $0x28] sm:$0xf]
        %v2837 = vld [vmem:[%s405 + $0x2c] sm:$0xf]
        %v2838 = vld [vmem:[%s405 + $0x30] sm:$0xf]
        %v2839 = vld [vmem:[%s405 + $0x34] sm:$0xf]
        %v2840 = vld [vmem:[%s405 + $0x38] sm:$0xf]
        %v2841 = vld [vmem:[%s405 + $0x3c] sm:$0xf]
        %v2858 = vunpack.c.l.b16 %v2826
        %v2859 = vunpack.c.l.b16 %v2827
        %v2860 = vunpack.c.l.b16 %v2828
        %v2861 = vunpack.c.l.b16 %v2829
        %v2862 = vunpack.c.l.b16 %v2830
        %v2863 = vunpack.c.l.b16 %v2831
        %v2864 = vunpack.c.l.b16 %v2832
        %v2865 = vunpack.c.l.b16 %v2833
        %v2866 = vunpack.c.l.b16 %v2834
        %v2867 = vunpack.c.l.b16 %v2835
        %v2868 = vunpack.c.l.b16 %v2836
        %v2869 = vunpack.c.l.b16 %v2837
        %v2870 = vunpack.c.l.b16 %v2838
        %v2871 = vunpack.c.l.b16 %v2839
        %v2872 = vunpack.c.l.b16 %v2840
        %v2873 = vunpack.c.l.b16 %v2841
        %v2874 = vpack.c.b16 %v2859, %v2858
        %v2875 = vpack.c.b16 %v2861, %v2860
        %v2876 = vpack.c.b16 %v2863, %v2862
        %v2877 = vpack.c.b16 %v2865, %v2864
        %v2878 = vpack.c.b16 %v2867, %v2866
        %v2879 = vpack.c.b16 %v2869, %v2868
        %v2880 = vpack.c.b16 %v2871, %v2870
        %v2881 = vpack.c.b16 %v2873, %v2872
        %2890 = vmatprep.subr.bf16.mxu0 0
        %2891 = vmatpush1.bf16.msra.mxu0 %v2881
        %2892 = vmatprep.subr.bf16.mxu0 0
        %2893 = vmatpush1.bf16.msra.mxu0 %v2880
        %2894 = vmatprep.subr.bf16.mxu0 0
        %2895 = vmatpush1.bf16.msra.mxu0 %v2879
        %2896 = vmatprep.subr.bf16.mxu0 0
        %2897 = vmatpush1.bf16.msra.mxu0 %v2878
        %2898 = vmatprep.subr.bf16.mxu0 0
        %2899 = vmatpush1.bf16.msra.mxu0 %v2877
        %2900 = vmatprep.subr.bf16.mxu0 0
        %2901 = vmatpush1.bf16.msra.mxu0 %v2876
        %2902 = vmatprep.subr.bf16.mxu0 0
        %2903 = vmatpush1.bf16.msra.mxu0 %v2875
        %2904 = vmatprep.subr.bf16.mxu0 0
        %2905 = vmatpush1.bf16.msra.mxu0 %v2874
        %2906 = vmatprep.subr.bf16.mxu0 0
        %2907 = vmatpush2.bf16.msra.mxu0 0
        %2908 = vmatprep.subr.bf16.mxu0 0
        %2909 = vmatpush2.bf16.msra.mxu0 0
        %2910 = vmatprep.subr.bf16.mxu0 0
        %2911 = vmatpush2.bf16.msra.mxu0 0
        %2912 = vmatprep.subr.bf16.mxu0 0
        %2913 = vmatpush2.bf16.msra.mxu0 0
        %2914 = vmatprep.subr.bf16.mxu0 0
        %2915 = vmatpush2.bf16.msra.mxu0 0
        %2916 = vmatprep.subr.bf16.mxu0 0
        %2917 = vmatpush2.bf16.msra.mxu0 0
        %2918 = vmatprep.subr.bf16.mxu0 0
        %2919 = vmatpush2.bf16.msra.mxu0 0
        %2920 = vmatprep.subr.bf16.mxu0 0
        %2921 = vmatpush2.bf16.msra.mxu0 0
        %2922 = vmatprep.mubr.bf16.mxu0 0
        %2923 = vmatmul.mubr.bf16.gmra.mxu0 %v2721
        %v2924 = vpop.f32.mrf.mxu0
        %v2925 = vadd.f32 0.0, %v2924
        %v2926 = vpop.f32.mrf.mxu0
        %v2927 = vpop.f32.mrf.mxu0
        %v2928 = vpop.f32.mrf.mxu0
        %2929 = vdwg.mxu0
        %v2930 = vld [vmem:[%s510] sm:$0xf]
        %v2931 = vld [vmem:[%s510 + $0x4] sm:$0xf]
        %v2932 = vld [vmem:[%s510 + $0x8] sm:$0xf]
        %v2933 = vld [vmem:[%s510 + $0xc] sm:$0xf]
        %v2934 = vld [vmem:[%s510 + $0x10] sm:$0xf]
        %v2935 = vld [vmem:[%s510 + $0x14] sm:$0xf]
        %v2936 = vld [vmem:[%s510 + $0x18] sm:$0xf]
        %v2937 = vld [vmem:[%s510 + $0x1c] sm:$0xf]
        %v2938 = vld [vmem:[%s510 + $0x20] sm:$0xf]
        %v2939 = vld [vmem:[%s510 + $0x24] sm:$0xf]
        %v2940 = vld [vmem:[%s510 + $0x28] sm:$0xf]
        %v2941 = vld [vmem:[%s510 + $0x2c] sm:$0xf]
        %v2942 = vld [vmem:[%s510 + $0x30] sm:$0xf]
        %v2943 = vld [vmem:[%s510 + $0x34] sm:$0xf]
        %v2944 = vld [vmem:[%s510 + $0x38] sm:$0xf]
        %v2945 = vld [vmem:[%s510 + $0x3c] sm:$0xf]
        %v2962 = vunpack.c.l.b16 %v2930
        %v2963 = vunpack.c.l.b16 %v2931
        %v2964 = vunpack.c.l.b16 %v2932
        %v2965 = vunpack.c.l.b16 %v2933
        %v2966 = vunpack.c.l.b16 %v2934
        %v2967 = vunpack.c.l.b16 %v2935
        %v2968 = vunpack.c.l.b16 %v2936
        %v2969 = vunpack.c.l.b16 %v2937
        %v2970 = vunpack.c.l.b16 %v2938
        %v2971 = vunpack.c.l.b16 %v2939
        %v2972 = vunpack.c.l.b16 %v2940
        %v2973 = vunpack.c.l.b16 %v2941
        %v2974 = vunpack.c.l.b16 %v2942
        %v2975 = vunpack.c.l.b16 %v2943
        %v2976 = vunpack.c.l.b16 %v2944
        %v2977 = vunpack.c.l.b16 %v2945
        %v2978 = vpack.c.b16 %v2963, %v2962
        %v2979 = vpack.c.b16 %v2965, %v2964
        %v2980 = vpack.c.b16 %v2967, %v2966
        %v2981 = vpack.c.b16 %v2969, %v2968
        %v2982 = vpack.c.b16 %v2971, %v2970
        %v2983 = vpack.c.b16 %v2973, %v2972
        %v2984 = vpack.c.b16 %v2975, %v2974
        %v2985 = vpack.c.b16 %v2977, %v2976
        %2994 = vmatprep.subr.bf16.mxu0 0
        %2995 = vmatpush1.bf16.msra.mxu0 %v2985
        %2996 = vmatprep.subr.bf16.mxu0 0
        %2997 = vmatpush1.bf16.msra.mxu0 %v2984
        %2998 = vmatprep.subr.bf16.mxu0 0
        %2999 = vmatpush1.bf16.msra.mxu0 %v2983
        %3000 = vmatprep.subr.bf16.mxu0 0
        %3001 = vmatpush1.bf16.msra.mxu0 %v2982
        %3002 = vmatprep.subr.bf16.mxu0 0
        %3003 = vmatpush1.bf16.msra.mxu0 %v2981
        %3004 = vmatprep.subr.bf16.mxu0 0
        %3005 = vmatpush1.bf16.msra.mxu0 %v2980
        %3006 = vmatprep.subr.bf16.mxu0 0
        %3007 = vmatpush1.bf16.msra.mxu0 %v2979
        %3008 = vmatprep.subr.bf16.mxu0 0
        %3009 = vmatpush1.bf16.msra.mxu0 %v2978
        %3010 = vmatprep.subr.bf16.mxu0 0
        %3011 = vmatpush2.bf16.msra.mxu0 0
        %3012 = vmatprep.subr.bf16.mxu0 0
        %3013 = vmatpush2.bf16.msra.mxu0 0
        %3014 = vmatprep.subr.bf16.mxu0 0
        %3015 = vmatpush2.bf16.msra.mxu0 0
        %3016 = vmatprep.subr.bf16.mxu0 0
        %3017 = vmatpush2.bf16.msra.mxu0 0
        %3018 = vmatprep.subr.bf16.mxu0 0
        %3019 = vmatpush2.bf16.msra.mxu0 0
        %3020 = vmatprep.subr.bf16.mxu0 0
        %3021 = vmatpush2.bf16.msra.mxu0 0
        %3022 = vmatprep.subr.bf16.mxu0 0
        %3023 = vmatpush2.bf16.msra.mxu0 0
        %3024 = vmatprep.subr.bf16.mxu0 0
        %3025 = vmatpush2.bf16.msra.mxu0 0
        %3026 = vmatprep.mubr.bf16.mxu0 0
        %3027 = vmatmul.mubr.bf16.gmra.mxu0 %v2721
        %v3028 = vpop.f32.mrf.mxu0
        %v3029 = vadd.f32 %v531, %v3028
        %v3030 = vpop.f32.mrf.mxu0
        %v3031 = vpop.f32.mrf.mxu0
        %v3032 = vpop.f32.mrf.mxu0
        %3033 = vdwg.mxu0
        %s3034 = scalar_lea.vmem %s245, 28 [#allocation3]
        %v3035 = vld [vmem:[%s3034] sm:$0xf]
        %v3036 = vunpack.c.l.bf16 %v3035
        %v3037 = vadd.f32 %v3036, %v2821
        %v3038 = vxor.u32 %v3037, 2147483648
        %v3039 = vmul.f32 %v3038, 1.442695
        %v3040 = vpow.pop %v3039
        %v3041 = vadd.f32 %v3040, 1.0
        %v3042 = vrcp.pop %v3041
        %v3043 = vmul.f32 1.0, %v3042
        %s3044 = scalar_lea.vmem %s245, 60 [#allocation3]
        %v3045 = vld [vmem:[%s3044] sm:$0xf]
        %v3046 = vunpack.c.l.bf16 %v3045
        %v3047 = vadd.f32 %v3046, %v2925
        %v3048 = vxor.u32 %v3047, 2147483648
        %v3049 = vmul.f32 %v3048, 1.442695
        %v3050 = vpow.pop %v3049
        %v3051 = vadd.f32 %v3050, 1.0
        %v3052 = vrcp.pop %v3051
        %v3053 = vmul.f32 1.0, %v3052
        %s3054 = scalar_lea.vmem %s245, 92 [#allocation3]
        %v3055 = vld [vmem:[%s3054] sm:$0xf]
        %v3056 = vunpack.c.l.bf16 %v3055
        %v3057 = vmul.f32 %v3043, %v3029
        %v3058 = vadd.f32 %v3056, %v3057
        %v3059 = vtanh.pop %v3058
        %v3060 = vsub.f32 1.0, %v3053
        %v3061 = vmul.f32 %v3060, %v3059
        %v3062 = vmul.f32 %v3053, %v2718
        %v3063 = vadd.f32 %v3061, %v3062
        %s3064 = scalar_lea.vmem %s284, 56 [#allocation8]
        %3065 = vst [vmem:[%s3064] sm:$0xff] %v3063
        %3066 = vst [vmem:[#allocation2] sm:$0xff] %v3063
        %s3067 = sand.u32 %s125, 1
        %s3068 = scalar_lea.sflag [#allocation5], %s3067
        %s3069 = sand.u32 %s125, 1
        %s3070 = smul.addr %s3069, 64
        %s3071 = scalar_lea.vmem [#allocation8], %s3070
        // Predicated region
        $region45: #{tpu_custom_call.1} parent=31 // pred_check
          %p3072 = pneg %p135
        $region46: #{tpu_custom_call.1} parent=31 // pred_check_branch
          %3074 = sbr.rel (%p3072) target = $region48
        $region47: #{tpu_custom_call.1} parent=31 // pred_region
          %s3075 = smul.u32 8, %s28
          %s3077 = ssub.s32 1024, 1024
          %3078 = vsyncadd %s3068, %s3077
          %s3079 = smul.addr %s27, 16
          %s3080 = sadd.s32 %s3075, %s3079
          %s3081 = smul.addr %s3080, 128
          %s3082 = scalar_lea.hbm %s3, %s3081
          %s3083 = sshll.u32 %s3071, 4
          %s3084 = int_to_ptr.vmem [resolvable:$true] %s3083
          %3089 = dma.vmem_to_hbm [thread:$0]  %s3084, 1024, %s3082, %s3068, 128, 128, 8
        $region48: #{tpu_custom_call.1} parent=31 // pred_fallthru
          _
      $region32: #{tpu_custom_call.1} parent=5 // pred_fallthru
        _
      %p3090 = scmp.le.s32.totalorder 2, %s18
      // Predicated region
      $region49: #{tpu_custom_call.1} parent=5 // pred_check
        %p3091 = pneg %p3090
      $region50: #{tpu_custom_call.1} parent=5 // pred_check_branch
        %3093 = sbr.rel (%p3091) target = $region52
      $region51: #{tpu_custom_call.1} parent=5 // pred_region
        %s3094 = ssub.s32 %s18, 2
        // Predicated region
        $region53: #{tpu_custom_call.1} parent=51 // pred_check
          %p3095 = pneg %p141
        $region54: #{tpu_custom_call.1} parent=51 // pred_check_branch
          %3097 = sbr.rel (%p3095) target = $region56
        $region55: #{tpu_custom_call.1} parent=51 // pred_region
          %s3098 = sand.u32 %s126, 1
          %s3099 = scalar_lea.sflag [#allocation5], %s3098
          %s3100 = sand.u32 %s126, 1
          %s3101 = smul.addr %s3100, 64
          %s3102 = scalar_lea.vmem [#allocation8], %s3101
          %3103 = dma.done %s3099, 1024
        $region56: #{tpu_custom_call.1} parent=51 // pred_fallthru
          _
      $region52: #{tpu_custom_call.1} parent=5 // pred_fallthru
        _
    $region6: #{tpu_custom_call.1} parent=1 // loop_footer
      %s22 = sadd.s32 1, %s18
    $region7: #{tpu_custom_call.1} parent=1 // loop_footer_branch
      %17 = sbr.rel target = $region3
    $region8: #{tpu_custom_call.1} parent=1 // loop_exit
      _
    %3104 = vsyncpa [#allocation4], 1
    %s3105 = scalar_lea.sflag [#allocation4], 1
    %3106 = vsyncpa %s3105, 1
    %3107 = vsyncpa [#allocation7], 1
    %s3108 = scalar_lea.sflag [#allocation7], 1
    %3109 = vsyncpa %s3108, 1
    %3110 = vsyncpa [#allocation5], 1
    %s3111 = scalar_lea.sflag [#allocation5], 1
    %3112 = vsyncpa %s3111, 1

</llo_original>
